<compile_context>
chip_gen: v7x
topology: tpu7x:2x2x1
jax: 0.10.0
libtpu: 0.0.40
codegen_flags: <defaults>
</compile_context>

<pallas_src>
import jax
import jax.numpy as jnp
from jax.experimental import pallas as pl
from jax.experimental.pallas import tpu as pltpu


# ---------------------------------------------------------------------------
# Shared LSTM-cell math (used by both the Pallas kernel and the JAX reference)
# ---------------------------------------------------------------------------
def _lstm_cell_math(x, h, c, w, b):
    """x: (B, in) f32, h/c: (B, H) f32, w: (in+H, 4H) bf16, b: (1, 4H) f32."""
    H = h.shape[-1]
    xh = jnp.concatenate([x.astype(jnp.bfloat16), h.astype(jnp.bfloat16)], axis=-1)
    gates = jnp.dot(xh, w, preferred_element_type=jnp.float32) + b      # (B, 4H) f32
    # PyTorch LSTM gate order: input, forget, cell (g), output
    i = jax.nn.sigmoid(gates[:, 0 * H:1 * H])
    f = jax.nn.sigmoid(gates[:, 1 * H:2 * H])
    g = jnp.tanh(gates[:, 2 * H:3 * H])
    o = jax.nn.sigmoid(gates[:, 3 * H:4 * H])
    c_new = f * c + i * g
    h_new = o * jnp.tanh(c_new)
    return h_new, c_new


# ---------------------------------------------------------------------------
# Fused kernel: embedding gather + 2-layer BiLSTM (1 step) + LayerNorm + FC
# ---------------------------------------------------------------------------
def _fused_kernel(ids_ref,                         # scalar prefetch, SMEM (B,) i32
                  h_ref, c_ref,                    # (4, B, H) f32 (resident)
                  emb_hbm,                         # (V, E) f32, HBM (pl.ANY)
                  w0f_ref, w0b_ref, w1f_ref, w1b_ref,   # bf16 LSTM weights (resident)
                  b0f_ref, b0b_ref, b1f_ref, b1b_ref,   # (1, 4H) f32 biases
                  ln_g_ref, ln_b_ref,              # (1, 2H) f32
                  wfc_ref, bfc_ref,                # (2H, TV) bf16 / (1, TV) f32 streamed
                  out_ref, h_out_ref, c_out_ref,   # outputs
                  emb_buf, ln_buf, gather_sem):    # scratch
    j = pl.program_id(0)

    @pl.when(j == 0)
    def _():
        B = emb_buf.shape[0]
        # --- Embedding row gather: token ids in SMEM, B small HBM->VMEM DMAs ---
        for b in range(B):
            pltpu.make_async_copy(
                emb_hbm.at[pl.ds(ids_ref[b], 1), :],
                emb_buf.at[pl.ds(b, 1), :],
                gather_sem.at[b]).start()
        for b in range(B):
            pltpu.make_async_copy(
                emb_hbm.at[pl.ds(ids_ref[b], 1), :],
                emb_buf.at[pl.ds(b, 1), :],
                gather_sem.at[b]).wait()

        emb = emb_buf[...]                                   # (B, E) f32

        # --- 2-layer bidirectional LSTM, seq_len == 1 ---
        # PyTorch state ordering: index = layer * num_directions + direction.
        h0f, c0f = _lstm_cell_math(emb, h_ref[0], c_ref[0], w0f_ref[...], b0f_ref[...])
        h0b, c0b = _lstm_cell_math(emb, h_ref[1], c_ref[1], w0b_ref[...], b0b_ref[...])
        l0 = jnp.concatenate([h0f, h0b], axis=-1)            # (B, 2H)
        h1f, c1f = _lstm_cell_math(l0, h_ref[2], c_ref[2], w1f_ref[...], b1f_ref[...])
        h1b, c1b = _lstm_cell_math(l0, h_ref[3], c_ref[3], w1b_ref[...], b1b_ref[...])
        l1 = jnp.concatenate([h1f, h1b], axis=-1)            # (B, 2H)

        h_out_ref[0] = h0f
        h_out_ref[1] = h0b
        h_out_ref[2] = h1f
        h_out_ref[3] = h1b
        c_out_ref[0] = c0f
        c_out_ref[1] = c0b
        c_out_ref[2] = c1f
        c_out_ref[3] = c1b

        # --- LayerNorm (eps=1e-5, biased variance) -> bf16 scratch for the FC ---
        mu = jnp.mean(l1, axis=-1, keepdims=True)
        xc = l1 - mu
        var = jnp.mean(xc * xc, axis=-1, keepdims=True)
        inv = jax.lax.rsqrt(var + 1e-5)
        ln_buf[...] = (xc * inv * ln_g_ref[...] + ln_b_ref[...]).astype(jnp.bfloat16)

    # --- FC on this vocab tile (every grid step; ln_buf persists across steps) ---
    out_ref[...] = (jnp.dot(ln_buf[...], wfc_ref[...],
                            preferred_element_type=jnp.float32)
                    + bfc_ref[...])


# ---------------------------------------------------------------------------
# Wrapper mirroring RNN_v3.forward
# ---------------------------------------------------------------------------
def rnn_v3_forward(x, hidden, cell, params, *, fc_tile=None):
    """x: (B,) int32; hidden/cell: (4, B, H) f32.
    Returns (logits (B, V), hidden (4, B, H), cell (4, B, H))."""
    emb_table = params["embedding"]                          # (V, E) f32
    B = x.shape[0]
    H = hidden.shape[-1]
    E = emb_table.shape[-1]
    V = params["w_fc_t"].shape[-1]

    # Large lane-aligned vocab tiles (>=1024) keep the streamed FC weight near the
    # HBM roofline; pl.cdiv pads a ragged tail instead of falling back to TV = V.
    if fc_tile is None:
        fc_tile = 1024
    TV = min(fc_tile, V)
    if V >= 128:
        TV = max(128, (TV // 128) * 128)
    n_tiles = pl.cdiv(V, TV)

    grid_spec = pltpu.PrefetchScalarGridSpec(
        num_scalar_prefetch=1,                               # token ids -> SMEM
        grid=(n_tiles,),
        in_specs=[
            pl.BlockSpec((4, B, H), lambda j, ids: (0, 0, 0)),        # hidden
            pl.BlockSpec((4, B, H), lambda j, ids: (0, 0, 0)),        # cell
            pl.BlockSpec(memory_space=pl.ANY),                        # embedding (HBM)
            pl.BlockSpec((E + H, 4 * H), lambda j, ids: (0, 0)),      # w_l0_fwd
            pl.BlockSpec((E + H, 4 * H), lambda j, ids: (0, 0)),      # w_l0_bwd
            pl.BlockSpec((3 * H, 4 * H), lambda j, ids: (0, 0)),      # w_l1_fwd
            pl.BlockSpec((3 * H, 4 * H), lambda j, ids: (0, 0)),      # w_l1_bwd
            pl.BlockSpec((1, 4 * H), lambda j, ids: (0, 0)),          # b_l0_fwd
            pl.BlockSpec((1, 4 * H), lambda j, ids: (0, 0)),          # b_l0_bwd
            pl.BlockSpec((1, 4 * H), lambda j, ids: (0, 0)),          # b_l1_fwd
            pl.BlockSpec((1, 4 * H), lambda j, ids: (0, 0)),          # b_l1_bwd
            pl.BlockSpec((1, 2 * H), lambda j, ids: (0, 0)),          # ln_gamma
            pl.BlockSpec((1, 2 * H), lambda j, ids: (0, 0)),          # ln_beta
            pl.BlockSpec((2 * H, TV), lambda j, ids: (0, j)),         # w_fc_t tile
            pl.BlockSpec((1, TV), lambda j, ids: (0, j)),             # b_fc tile
        ],
        out_specs=[
            pl.BlockSpec((B, TV), lambda j, ids: (0, j)),             # logits tile
            pl.BlockSpec((4, B, H), lambda j, ids: (0, 0, 0)),        # h_out
            pl.BlockSpec((4, B, H), lambda j, ids: (0, 0, 0)),        # c_out
        ],
        scratch_shapes=[
            pltpu.VMEM((B, E), jnp.float32),                 # gathered embeddings
            pltpu.VMEM((B, 2 * H), jnp.bfloat16),            # LayerNorm output
            pltpu.SemaphoreType.DMA((B,)),                   # gather semaphores
        ],
    )

    logits, h_new, c_new = pl.pallas_call(
        _fused_kernel,
        grid_spec=grid_spec,
        out_shape=(
            jax.ShapeDtypeStruct((B, V), jnp.float32),
            jax.ShapeDtypeStruct((4, B, H), jnp.float32),
            jax.ShapeDtypeStruct((4, B, H), jnp.float32),
        ),
        # Indices count the scalar-prefetch arg: hidden(1)->h_out(1), cell(2)->c_out(2).
        input_output_aliases={1: 1, 2: 2},
        compiler_params=pltpu.CompilerParams(
            # "arbitrary": ln_buf/emb_buf are per-core scratch, so the vocab grid
            # must run on one core (megacore split would read uninitialized scratch).
            dimension_semantics=("arbitrary",),
            vmem_limit_bytes=48 * 1024 * 1024,
        ),
    )(x, hidden, cell, emb_table,
      params["w_l0_fwd"], params["w_l0_bwd"], params["w_l1_fwd"], params["w_l1_bwd"],
      params["b_l0_fwd"], params["b_l0_bwd"], params["b_l1_fwd"], params["b_l1_bwd"],
      params["ln_gamma"], params["ln_beta"],
      params["w_fc_t"], params["b_fc"])

    return logits, h_new, c_new


# ---------------------------------------------------------------------------
# Pure-JAX reference (same math / same bf16 weight handling) for validation
# ---------------------------------------------------------------------------
def rnn_v3_reference(x, hidden, cell, params):
    emb = jnp.take(params["embedding"], x, axis=0)
    h0f, c0f = _lstm_cell_math(emb, hidden[0], cell[0], params["w_l0_fwd"], params["b_l0_fwd"])
    h0b, c0b = _lstm_cell_math(emb, hidden[1], cell[1], params["w_l0_bwd"], params["b_l0_bwd"])
    l0 = jnp.concatenate([h0f, h0b], axis=-1)
    h1f, c1f = _lstm_cell_math(l0, hidden[2], cell[2], params["w_l1_fwd"], params["b_l1_fwd"])
    h1b, c1b = _lstm_cell_math(l0, hidden[3], cell[3], params["w_l1_bwd"], params["b_l1_bwd"])
    l1 = jnp.concatenate([h1f, h1b], axis=-1)
    mu = jnp.mean(l1, axis=-1, keepdims=True)
    xc = l1 - mu
    var = jnp.mean(xc * xc, axis=-1, keepdims=True)
    ln = xc * jax.lax.rsqrt(var + 1e-5) * params["ln_gamma"] + params["ln_beta"]
    logits = (jnp.dot(ln.astype(jnp.bfloat16), params["w_fc_t"],
                      preferred_element_type=jnp.float32) + params["b_fc"])
    h_new = jnp.stack([h0f, h0b, h1f, h1b])
    c_new = jnp.stack([c0f, c0b, c1f, c1b])
    return logits, h_new, c_new


# ---------------------------------------------------------------------------
# Parameter construction (PyTorch layouts, packed for the kernel)
# ---------------------------------------------------------------------------
def init_params(key, vocab_size, embed_dim, hidden):
    ks = jax.random.split(key, 19)
    scale = 0.02

    def rnd(k, shape):
        return scale * jax.random.normal(k, shape, jnp.float32)

    emb = rnd(ks[0], (vocab_size, embed_dim))

    def pack_cell(kbase, in_dim):
        # PyTorch layouts: weight_ih (4H, in), weight_hh (4H, H), biases (4H,)
        w_ih = rnd(ks[kbase + 0], (4 * hidden, in_dim))
        w_hh = rnd(ks[kbase + 1], (4 * hidden, hidden))
        b_ih = rnd(ks[kbase + 2], (4 * hidden,))
        b_hh = rnd(ks[kbase + 3], (4 * hidden,))
        # Combined, pre-transposed (in + H, 4H) bf16 so the kernel does [x,h] @ W.
        w_cat = jnp.concatenate([w_ih.T, w_hh.T], axis=0).astype(jnp.bfloat16)
        b = (b_ih + b_hh)[None, :]                           # (1, 4H) f32
        return w_cat, b

    w_l0_fwd, b_l0_fwd = pack_cell(1, embed_dim)
    w_l0_bwd, b_l0_bwd = pack_cell(5, embed_dim)
    w_l1_fwd, b_l1_fwd = pack_cell(9, 2 * hidden)
    w_l1_bwd, b_l1_bwd = pack_cell(13, 2 * hidden)

    w_fc = rnd(ks[17], (vocab_size, 2 * hidden))             # PyTorch fc.weight (V, 2H)
    b_fc = rnd(ks[18], (vocab_size,))

    return {
        "embedding": emb,
        "w_l0_fwd": w_l0_fwd, "b_l0_fwd": b_l0_fwd,
        "w_l0_bwd": w_l0_bwd, "b_l0_bwd": b_l0_bwd,
        "w_l1_fwd": w_l1_fwd, "b_l1_fwd": b_l1_fwd,
        "w_l1_bwd": w_l1_bwd, "b_l1_bwd": b_l1_bwd,
        "ln_gamma": jnp.ones((1, 2 * hidden), jnp.float32),  # PyTorch LN defaults
        "ln_beta": jnp.zeros((1, 2 * hidden), jnp.float32),
        "w_fc_t": w_fc.T.astype(jnp.bfloat16),               # (2H, V) bf16
        "b_fc": b_fc[None, :],                               # (1, V) f32
    }


if __name__ == "__main__":
    # Lane dims multiples of 128, batch multiple of 8; VOCAB=2048 with the default
    # 1024-wide FC tile exercises both the j==0 (LSTM) and j>0 (FC-only) grid paths.
    VOCAB, EMBED, HIDDEN, BATCH = 2048, 128, 128, 8
    NUM_LAYERS, NUM_DIRS = 2, 2

    key = jax.random.PRNGKey(0)
    k_params, k_x = jax.random.split(key)

    params = init_params(k_params, VOCAB, EMBED, HIDDEN)

    x = jax.random.randint(k_x, (BATCH,), 0, VOCAB, dtype=jnp.int32)
    hidden = jnp.zeros((NUM_LAYERS * NUM_DIRS, BATCH, HIDDEN), jnp.float32)
    cell = jnp.zeros((NUM_LAYERS * NUM_DIRS, BATCH, HIDDEN), jnp.float32)

    ref_logits, ref_h, ref_c = rnn_v3_reference(x, hidden, cell, params)

    fwd = jax.jit(rnn_v3_forward)
    logits, h_new, c_new = fwd(x, hidden, cell, params)
    jax.block_until_ready((logits, h_new, c_new))

    assert logits.shape == (BATCH, VOCAB)
    assert h_new.shape == (NUM_LAYERS * NUM_DIRS, BATCH, HIDDEN)
    assert c_new.shape == (NUM_LAYERS * NUM_DIRS, BATCH, HIDDEN)
    assert bool(jnp.all(jnp.isfinite(logits)))
    # Tolerance check against the pure-JAX reference (same bf16 weights / f32 accum).
    assert bool(jnp.allclose(logits, ref_logits, atol=1e-2, rtol=1e-2))
    assert bool(jnp.allclose(h_new, ref_h, atol=1e-3, rtol=1e-3))
    assert bool(jnp.allclose(c_new, ref_c, atol=1e-3, rtol=1e-3))
    print("KERNEL_OK")
</pallas_src>

<mosaic_0001>
module attributes {stable_mosaic.version = 11 : i64} {
  func.func @_fused_kernel(%arg0: i32, %arg1: memref<8xi32, #tpu.memory_space<smem>>, %arg2: memref<4x8x128xf32, #tpu.memory_space<vmem>>, %arg3: memref<4x8x128xf32, #tpu.memory_space<vmem>>, %arg4: memref<2048x128xf32, #tpu.memory_space<any>>, %arg5: memref<256x512xbf16, #tpu.memory_space<vmem>>, %arg6: memref<256x512xbf16, #tpu.memory_space<vmem>>, %arg7: memref<384x512xbf16, #tpu.memory_space<vmem>>, %arg8: memref<384x512xbf16, #tpu.memory_space<vmem>>, %arg9: memref<1x512xf32, #tpu.memory_space<vmem>>, %arg10: memref<1x512xf32, #tpu.memory_space<vmem>>, %arg11: memref<1x512xf32, #tpu.memory_space<vmem>>, %arg12: memref<1x512xf32, #tpu.memory_space<vmem>>, %arg13: memref<1x256xf32, #tpu.memory_space<vmem>>, %arg14: memref<1x256xf32, #tpu.memory_space<vmem>>, %arg15: memref<256x1024xbf16, #tpu.memory_space<vmem>>, %arg16: memref<1x1024xf32, #tpu.memory_space<vmem>>, %arg17: memref<8x1024xf32, #tpu.memory_space<vmem>>, %arg18: memref<4x8x128xf32, #tpu.memory_space<vmem>>, %arg19: memref<4x8x128xf32, #tpu.memory_space<vmem>>, %arg20: memref<8x128xf32, #tpu.memory_space<vmem>>, %arg21: memref<8x256xbf16, #tpu.memory_space<vmem>>, %arg22: memref<8x!tpu.dma_semaphore, #tpu.memory_space<semaphore_mem>>) attributes {dimension_semantics = [#tpu.dimension_semantics<arbitrary>], iteration_bounds = array<i64: 2>, scalar_prefetch = 1 : i64, scratch_operands = 3 : i64, tpu.core_type = #tpu.core_type<tc>, window_params = [{pipeline_mode = #tpu.pipeline_mode<synchronous>, transform_indices = @transform_0, window_bounds = array<i64: 4, 8, 128>}, {pipeline_mode = #tpu.pipeline_mode<synchronous>, transform_indices = @transform_1, window_bounds = array<i64: 4, 8, 128>}, {}, {pipeline_mode = #tpu.pipeline_mode<synchronous>, transform_indices = @transform_3, window_bounds = array<i64: 256, 512>}, {pipeline_mode = #tpu.pipeline_mode<synchronous>, transform_indices = @transform_4, window_bounds = array<i64: 256, 512>}, {pipeline_mode = #tpu.pipeline_mode<synchronous>, transform_indices = @transform_5, window_bounds = array<i64: 384, 512>}, {pipeline_mode = #tpu.pipeline_mode<synchronous>, transform_indices = @transform_6, window_bounds = array<i64: 384, 512>}, {pipeline_mode = #tpu.pipeline_mode<synchronous>, transform_indices = @transform_7, window_bounds = array<i64: 1, 512>}, {pipeline_mode = #tpu.pipeline_mode<synchronous>, transform_indices = @transform_8, window_bounds = array<i64: 1, 512>}, {pipeline_mode = #tpu.pipeline_mode<synchronous>, transform_indices = @transform_9, window_bounds = array<i64: 1, 512>}, {pipeline_mode = #tpu.pipeline_mode<synchronous>, transform_indices = @transform_10, window_bounds = array<i64: 1, 512>}, {pipeline_mode = #tpu.pipeline_mode<synchronous>, transform_indices = @transform_11, window_bounds = array<i64: 1, 256>}, {pipeline_mode = #tpu.pipeline_mode<synchronous>, transform_indices = @transform_12, window_bounds = array<i64: 1, 256>}, {transform_indices = @transform_13, window_bounds = array<i64: 256, 1024>}, {transform_indices = @transform_14, window_bounds = array<i64: 1, 1024>}, {transform_indices = @transform_15, window_bounds = array<i64: 8, 1024>}, {pipeline_mode = #tpu.pipeline_mode<synchronous>, transform_indices = @transform_16, window_bounds = array<i64: 4, 8, 128>}, {pipeline_mode = #tpu.pipeline_mode<synchronous>, transform_indices = @transform_17, window_bounds = array<i64: 4, 8, 128>}]} {
    %c0_i32 = arith.constant 0 : i32
    %0 = arith.cmpi eq, %arg0, %c0_i32 : i32
    %1 = arith.extui %0 : i1 to i32
    %c0_i32_0 = arith.constant 0 : i32
    %2 = arith.cmpi ne, %1, %c0_i32_0 : i32
    scf.if %2 {
      %c0_8 = arith.constant 0 : index
      %10 = memref.load %arg1[%c0_8] : memref<8xi32, #tpu.memory_space<smem>>
      %c0_i32_9 = arith.constant 0 : i32
      %c0_i32_10 = arith.constant 0 : i32
      %11 = tpu.memref_slice %arg4[%10, %c0_i32_10] : memref<2048x128xf32, #tpu.memory_space<any>> -> memref<1x128xf32, #tpu.memory_space<any>>
      %c0_i32_11 = arith.constant 0 : i32
      %c0_i32_12 = arith.constant 0 : i32
      %12 = tpu.memref_slice %arg20[%c0_i32_11, %c0_i32_12] : memref<8x128xf32, #tpu.memory_space<vmem>> -> memref<1x128xf32, #tpu.memory_space<vmem>>
      %13 = tpu.memref_slice %arg22[%c0_i32_9] : memref<8x!tpu.dma_semaphore, #tpu.memory_space<semaphore_mem>> -> memref<1x!tpu.dma_semaphore, #tpu.memory_space<semaphore_mem>>
      %14 = tpu.memref_squeeze %13 : memref<1x!tpu.dma_semaphore, #tpu.memory_space<semaphore_mem>> -> memref<!tpu.dma_semaphore, #tpu.memory_space<semaphore_mem>>
      tpu.enqueue_dma source(%11 : memref<1x128xf32, #tpu.memory_space<any>>) target(%12 : memref<1x128xf32, #tpu.memory_space<vmem>>) target_semaphore(%14 : memref<!tpu.dma_semaphore, #tpu.memory_space<semaphore_mem>>)
      %c1 = arith.constant 1 : index
      %15 = memref.load %arg1[%c1] : memref<8xi32, #tpu.memory_space<smem>>
      %c1_i32 = arith.constant 1 : i32
      %c0_i32_13 = arith.constant 0 : i32
      %16 = tpu.memref_slice %arg4[%15, %c0_i32_13] : memref<2048x128xf32, #tpu.memory_space<any>> -> memref<1x128xf32, #tpu.memory_space<any>>
      %c1_i32_14 = arith.constant 1 : i32
      %c0_i32_15 = arith.constant 0 : i32
      %17 = tpu.memref_slice %arg20[%c1_i32_14, %c0_i32_15] : memref<8x128xf32, #tpu.memory_space<vmem>> -> memref<1x128xf32, #tpu.memory_space<vmem>>
      %18 = tpu.memref_slice %arg22[%c1_i32] : memref<8x!tpu.dma_semaphore, #tpu.memory_space<semaphore_mem>> -> memref<1x!tpu.dma_semaphore, #tpu.memory_space<semaphore_mem>>
      %19 = tpu.memref_squeeze %18 : memref<1x!tpu.dma_semaphore, #tpu.memory_space<semaphore_mem>> -> memref<!tpu.dma_semaphore, #tpu.memory_space<semaphore_mem>>
      tpu.enqueue_dma source(%16 : memref<1x128xf32, #tpu.memory_space<any>>) target(%17 : memref<1x128xf32, #tpu.memory_space<vmem>>) target_semaphore(%19 : memref<!tpu.dma_semaphore, #tpu.memory_space<semaphore_mem>>)
      %c2 = arith.constant 2 : index
      %20 = memref.load %arg1[%c2] : memref<8xi32, #tpu.memory_space<smem>>
      %c2_i32 = arith.constant 2 : i32
      %c0_i32_16 = arith.constant 0 : i32
      %21 = tpu.memref_slice %arg4[%20, %c0_i32_16] : memref<2048x128xf32, #tpu.memory_space<any>> -> memref<1x128xf32, #tpu.memory_space<any>>
      %c2_i32_17 = arith.constant 2 : i32
      %c0_i32_18 = arith.constant 0 : i32
      %22 = tpu.memref_slice %arg20[%c2_i32_17, %c0_i32_18] : memref<8x128xf32, #tpu.memory_space<vmem>> -> memref<1x128xf32, #tpu.memory_space<vmem>>
      %23 = tpu.memref_slice %arg22[%c2_i32] : memref<8x!tpu.dma_semaphore, #tpu.memory_space<semaphore_mem>> -> memref<1x!tpu.dma_semaphore, #tpu.memory_space<semaphore_mem>>
      %24 = tpu.memref_squeeze %23 : memref<1x!tpu.dma_semaphore, #tpu.memory_space<semaphore_mem>> -> memref<!tpu.dma_semaphore, #tpu.memory_space<semaphore_mem>>
      tpu.enqueue_dma source(%21 : memref<1x128xf32, #tpu.memory_space<any>>) target(%22 : memref<1x128xf32, #tpu.memory_space<vmem>>) target_semaphore(%24 : memref<!tpu.dma_semaphore, #tpu.memory_space<semaphore_mem>>)
      %c3 = arith.constant 3 : index
      %25 = memref.load %arg1[%c3] : memref<8xi32, #tpu.memory_space<smem>>
      %c3_i32 = arith.constant 3 : i32
      %c0_i32_19 = arith.constant 0 : i32
      %26 = tpu.memref_slice %arg4[%25, %c0_i32_19] : memref<2048x128xf32, #tpu.memory_space<any>> -> memref<1x128xf32, #tpu.memory_space<any>>
      %c3_i32_20 = arith.constant 3 : i32
      %c0_i32_21 = arith.constant 0 : i32
      %27 = tpu.memref_slice %arg20[%c3_i32_20, %c0_i32_21] : memref<8x128xf32, #tpu.memory_space<vmem>> -> memref<1x128xf32, #tpu.memory_space<vmem>>
      %28 = tpu.memref_slice %arg22[%c3_i32] : memref<8x!tpu.dma_semaphore, #tpu.memory_space<semaphore_mem>> -> memref<1x!tpu.dma_semaphore, #tpu.memory_space<semaphore_mem>>
      %29 = tpu.memref_squeeze %28 : memref<1x!tpu.dma_semaphore, #tpu.memory_space<semaphore_mem>> -> memref<!tpu.dma_semaphore, #tpu.memory_space<semaphore_mem>>
      tpu.enqueue_dma source(%26 : memref<1x128xf32, #tpu.memory_space<any>>) target(%27 : memref<1x128xf32, #tpu.memory_space<vmem>>) target_semaphore(%29 : memref<!tpu.dma_semaphore, #tpu.memory_space<semaphore_mem>>)
      %c4 = arith.constant 4 : index
      %30 = memref.load %arg1[%c4] : memref<8xi32, #tpu.memory_space<smem>>
      %c4_i32 = arith.constant 4 : i32
      %c0_i32_22 = arith.constant 0 : i32
      %31 = tpu.memref_slice %arg4[%30, %c0_i32_22] : memref<2048x128xf32, #tpu.memory_space<any>> -> memref<1x128xf32, #tpu.memory_space<any>>
      %c4_i32_23 = arith.constant 4 : i32
      %c0_i32_24 = arith.constant 0 : i32
      %32 = tpu.memref_slice %arg20[%c4_i32_23, %c0_i32_24] : memref<8x128xf32, #tpu.memory_space<vmem>> -> memref<1x128xf32, #tpu.memory_space<vmem>>
      %33 = tpu.memref_slice %arg22[%c4_i32] : memref<8x!tpu.dma_semaphore, #tpu.memory_space<semaphore_mem>> -> memref<1x!tpu.dma_semaphore, #tpu.memory_space<semaphore_mem>>
      %34 = tpu.memref_squeeze %33 : memref<1x!tpu.dma_semaphore, #tpu.memory_space<semaphore_mem>> -> memref<!tpu.dma_semaphore, #tpu.memory_space<semaphore_mem>>
      tpu.enqueue_dma source(%31 : memref<1x128xf32, #tpu.memory_space<any>>) target(%32 : memref<1x128xf32, #tpu.memory_space<vmem>>) target_semaphore(%34 : memref<!tpu.dma_semaphore, #tpu.memory_space<semaphore_mem>>)
      %c5 = arith.constant 5 : index
      %35 = memref.load %arg1[%c5] : memref<8xi32, #tpu.memory_space<smem>>
      %c5_i32 = arith.constant 5 : i32
      %c0_i32_25 = arith.constant 0 : i32
      %36 = tpu.memref_slice %arg4[%35, %c0_i32_25] : memref<2048x128xf32, #tpu.memory_space<any>> -> memref<1x128xf32, #tpu.memory_space<any>>
      %c5_i32_26 = arith.constant 5 : i32
      %c0_i32_27 = arith.constant 0 : i32
      %37 = tpu.memref_slice %arg20[%c5_i32_26, %c0_i32_27] : memref<8x128xf32, #tpu.memory_space<vmem>> -> memref<1x128xf32, #tpu.memory_space<vmem>>
      %38 = tpu.memref_slice %arg22[%c5_i32] : memref<8x!tpu.dma_semaphore, #tpu.memory_space<semaphore_mem>> -> memref<1x!tpu.dma_semaphore, #tpu.memory_space<semaphore_mem>>
      %39 = tpu.memref_squeeze %38 : memref<1x!tpu.dma_semaphore, #tpu.memory_space<semaphore_mem>> -> memref<!tpu.dma_semaphore, #tpu.memory_space<semaphore_mem>>
      tpu.enqueue_dma source(%36 : memref<1x128xf32, #tpu.memory_space<any>>) target(%37 : memref<1x128xf32, #tpu.memory_space<vmem>>) target_semaphore(%39 : memref<!tpu.dma_semaphore, #tpu.memory_space<semaphore_mem>>)
      %c6 = arith.constant 6 : index
      %40 = memref.load %arg1[%c6] : memref<8xi32, #tpu.memory_space<smem>>
      %c6_i32 = arith.constant 6 : i32
      %c0_i32_28 = arith.constant 0 : i32
      %41 = tpu.memref_slice %arg4[%40, %c0_i32_28] : memref<2048x128xf32, #tpu.memory_space<any>> -> memref<1x128xf32, #tpu.memory_space<any>>
      %c6_i32_29 = arith.constant 6 : i32
      %c0_i32_30 = arith.constant 0 : i32
      %42 = tpu.memref_slice %arg20[%c6_i32_29, %c0_i32_30] : memref<8x128xf32, #tpu.memory_space<vmem>> -> memref<1x128xf32, #tpu.memory_space<vmem>>
      %43 = tpu.memref_slice %arg22[%c6_i32] : memref<8x!tpu.dma_semaphore, #tpu.memory_space<semaphore_mem>> -> memref<1x!tpu.dma_semaphore, #tpu.memory_space<semaphore_mem>>
      %44 = tpu.memref_squeeze %43 : memref<1x!tpu.dma_semaphore, #tpu.memory_space<semaphore_mem>> -> memref<!tpu.dma_semaphore, #tpu.memory_space<semaphore_mem>>
      tpu.enqueue_dma source(%41 : memref<1x128xf32, #tpu.memory_space<any>>) target(%42 : memref<1x128xf32, #tpu.memory_space<vmem>>) target_semaphore(%44 : memref<!tpu.dma_semaphore, #tpu.memory_space<semaphore_mem>>)
      %c7 = arith.constant 7 : index
      %45 = memref.load %arg1[%c7] : memref<8xi32, #tpu.memory_space<smem>>
      %c7_i32 = arith.constant 7 : i32
      %c0_i32_31 = arith.constant 0 : i32
      %46 = tpu.memref_slice %arg4[%45, %c0_i32_31] : memref<2048x128xf32, #tpu.memory_space<any>> -> memref<1x128xf32, #tpu.memory_space<any>>
      %c7_i32_32 = arith.constant 7 : i32
      %c0_i32_33 = arith.constant 0 : i32
      %47 = tpu.memref_slice %arg20[%c7_i32_32, %c0_i32_33] : memref<8x128xf32, #tpu.memory_space<vmem>> -> memref<1x128xf32, #tpu.memory_space<vmem>>
      %48 = tpu.memref_slice %arg22[%c7_i32] : memref<8x!tpu.dma_semaphore, #tpu.memory_space<semaphore_mem>> -> memref<1x!tpu.dma_semaphore, #tpu.memory_space<semaphore_mem>>
      %49 = tpu.memref_squeeze %48 : memref<1x!tpu.dma_semaphore, #tpu.memory_space<semaphore_mem>> -> memref<!tpu.dma_semaphore, #tpu.memory_space<semaphore_mem>>
      tpu.enqueue_dma source(%46 : memref<1x128xf32, #tpu.memory_space<any>>) target(%47 : memref<1x128xf32, #tpu.memory_space<vmem>>) target_semaphore(%49 : memref<!tpu.dma_semaphore, #tpu.memory_space<semaphore_mem>>)
      %c0_34 = arith.constant 0 : index
      %50 = memref.load %arg1[%c0_34] : memref<8xi32, #tpu.memory_space<smem>>
      %c0_i32_35 = arith.constant 0 : i32
      %c0_i32_36 = arith.constant 0 : i32
      %51 = tpu.memref_slice %arg4[%50, %c0_i32_36] : memref<2048x128xf32, #tpu.memory_space<any>> -> memref<1x128xf32, #tpu.memory_space<any>>
      %c0_i32_37 = arith.constant 0 : i32
      %c0_i32_38 = arith.constant 0 : i32
      %52 = tpu.memref_slice %arg20[%c0_i32_37, %c0_i32_38] : memref<8x128xf32, #tpu.memory_space<vmem>> -> memref<1x128xf32, #tpu.memory_space<vmem>>
      %53 = tpu.memref_slice %arg22[%c0_i32_35] : memref<8x!tpu.dma_semaphore, #tpu.memory_space<semaphore_mem>> -> memref<1x!tpu.dma_semaphore, #tpu.memory_space<semaphore_mem>>
      %54 = tpu.memref_squeeze %53 : memref<1x!tpu.dma_semaphore, #tpu.memory_space<semaphore_mem>> -> memref<!tpu.dma_semaphore, #tpu.memory_space<semaphore_mem>>
      tpu.wait_dma2 semaphore(%54 : memref<!tpu.dma_semaphore, #tpu.memory_space<semaphore_mem>>) src(%51 : memref<1x128xf32, #tpu.memory_space<any>>) dst(%52 : memref<1x128xf32, #tpu.memory_space<vmem>>)
      %c1_39 = arith.constant 1 : index
      %55 = memref.load %arg1[%c1_39] : memref<8xi32, #tpu.memory_space<smem>>
      %c1_i32_40 = arith.constant 1 : i32
      %c0_i32_41 = arith.constant 0 : i32
      %56 = tpu.memref_slice %arg4[%55, %c0_i32_41] : memref<2048x128xf32, #tpu.memory_space<any>> -> memref<1x128xf32, #tpu.memory_space<any>>
      %c1_i32_42 = arith.constant 1 : i32
      %c0_i32_43 = arith.constant 0 : i32
      %57 = tpu.memref_slice %arg20[%c1_i32_42, %c0_i32_43] : memref<8x128xf32, #tpu.memory_space<vmem>> -> memref<1x128xf32, #tpu.memory_space<vmem>>
      %58 = tpu.memref_slice %arg22[%c1_i32_40] : memref<8x!tpu.dma_semaphore, #tpu.memory_space<semaphore_mem>> -> memref<1x!tpu.dma_semaphore, #tpu.memory_space<semaphore_mem>>
      %59 = tpu.memref_squeeze %58 : memref<1x!tpu.dma_semaphore, #tpu.memory_space<semaphore_mem>> -> memref<!tpu.dma_semaphore, #tpu.memory_space<semaphore_mem>>
      tpu.wait_dma2 semaphore(%59 : memref<!tpu.dma_semaphore, #tpu.memory_space<semaphore_mem>>) src(%56 : memref<1x128xf32, #tpu.memory_space<any>>) dst(%57 : memref<1x128xf32, #tpu.memory_space<vmem>>)
      %c2_44 = arith.constant 2 : index
      %60 = memref.load %arg1[%c2_44] : memref<8xi32, #tpu.memory_space<smem>>
      %c2_i32_45 = arith.constant 2 : i32
      %c0_i32_46 = arith.constant 0 : i32
      %61 = tpu.memref_slice %arg4[%60, %c0_i32_46] : memref<2048x128xf32, #tpu.memory_space<any>> -> memref<1x128xf32, #tpu.memory_space<any>>
      %c2_i32_47 = arith.constant 2 : i32
      %c0_i32_48 = arith.constant 0 : i32
      %62 = tpu.memref_slice %arg20[%c2_i32_47, %c0_i32_48] : memref<8x128xf32, #tpu.memory_space<vmem>> -> memref<1x128xf32, #tpu.memory_space<vmem>>
      %63 = tpu.memref_slice %arg22[%c2_i32_45] : memref<8x!tpu.dma_semaphore, #tpu.memory_space<semaphore_mem>> -> memref<1x!tpu.dma_semaphore, #tpu.memory_space<semaphore_mem>>
      %64 = tpu.memref_squeeze %63 : memref<1x!tpu.dma_semaphore, #tpu.memory_space<semaphore_mem>> -> memref<!tpu.dma_semaphore, #tpu.memory_space<semaphore_mem>>
      tpu.wait_dma2 semaphore(%64 : memref<!tpu.dma_semaphore, #tpu.memory_space<semaphore_mem>>) src(%61 : memref<1x128xf32, #tpu.memory_space<any>>) dst(%62 : memref<1x128xf32, #tpu.memory_space<vmem>>)
      %c3_49 = arith.constant 3 : index
      %65 = memref.load %arg1[%c3_49] : memref<8xi32, #tpu.memory_space<smem>>
      %c3_i32_50 = arith.constant 3 : i32
      %c0_i32_51 = arith.constant 0 : i32
      %66 = tpu.memref_slice %arg4[%65, %c0_i32_51] : memref<2048x128xf32, #tpu.memory_space<any>> -> memref<1x128xf32, #tpu.memory_space<any>>
      %c3_i32_52 = arith.constant 3 : i32
      %c0_i32_53 = arith.constant 0 : i32
      %67 = tpu.memref_slice %arg20[%c3_i32_52, %c0_i32_53] : memref<8x128xf32, #tpu.memory_space<vmem>> -> memref<1x128xf32, #tpu.memory_space<vmem>>
      %68 = tpu.memref_slice %arg22[%c3_i32_50] : memref<8x!tpu.dma_semaphore, #tpu.memory_space<semaphore_mem>> -> memref<1x!tpu.dma_semaphore, #tpu.memory_space<semaphore_mem>>
      %69 = tpu.memref_squeeze %68 : memref<1x!tpu.dma_semaphore, #tpu.memory_space<semaphore_mem>> -> memref<!tpu.dma_semaphore, #tpu.memory_space<semaphore_mem>>
      tpu.wait_dma2 semaphore(%69 : memref<!tpu.dma_semaphore, #tpu.memory_space<semaphore_mem>>) src(%66 : memref<1x128xf32, #tpu.memory_space<any>>) dst(%67 : memref<1x128xf32, #tpu.memory_space<vmem>>)
      %c4_54 = arith.constant 4 : index
      %70 = memref.load %arg1[%c4_54] : memref<8xi32, #tpu.memory_space<smem>>
      %c4_i32_55 = arith.constant 4 : i32
      %c0_i32_56 = arith.constant 0 : i32
      %71 = tpu.memref_slice %arg4[%70, %c0_i32_56] : memref<2048x128xf32, #tpu.memory_space<any>> -> memref<1x128xf32, #tpu.memory_space<any>>
      %c4_i32_57 = arith.constant 4 : i32
      %c0_i32_58 = arith.constant 0 : i32
      %72 = tpu.memref_slice %arg20[%c4_i32_57, %c0_i32_58] : memref<8x128xf32, #tpu.memory_space<vmem>> -> memref<1x128xf32, #tpu.memory_space<vmem>>
      %73 = tpu.memref_slice %arg22[%c4_i32_55] : memref<8x!tpu.dma_semaphore, #tpu.memory_space<semaphore_mem>> -> memref<1x!tpu.dma_semaphore, #tpu.memory_space<semaphore_mem>>
      %74 = tpu.memref_squeeze %73 : memref<1x!tpu.dma_semaphore, #tpu.memory_space<semaphore_mem>> -> memref<!tpu.dma_semaphore, #tpu.memory_space<semaphore_mem>>
      tpu.wait_dma2 semaphore(%74 : memref<!tpu.dma_semaphore, #tpu.memory_space<semaphore_mem>>) src(%71 : memref<1x128xf32, #tpu.memory_space<any>>) dst(%72 : memref<1x128xf32, #tpu.memory_space<vmem>>)
      %c5_59 = arith.constant 5 : index
      %75 = memref.load %arg1[%c5_59] : memref<8xi32, #tpu.memory_space<smem>>
      %c5_i32_60 = arith.constant 5 : i32
      %c0_i32_61 = arith.constant 0 : i32
      %76 = tpu.memref_slice %arg4[%75, %c0_i32_61] : memref<2048x128xf32, #tpu.memory_space<any>> -> memref<1x128xf32, #tpu.memory_space<any>>
      %c5_i32_62 = arith.constant 5 : i32
      %c0_i32_63 = arith.constant 0 : i32
      %77 = tpu.memref_slice %arg20[%c5_i32_62, %c0_i32_63] : memref<8x128xf32, #tpu.memory_space<vmem>> -> memref<1x128xf32, #tpu.memory_space<vmem>>
      %78 = tpu.memref_slice %arg22[%c5_i32_60] : memref<8x!tpu.dma_semaphore, #tpu.memory_space<semaphore_mem>> -> memref<1x!tpu.dma_semaphore, #tpu.memory_space<semaphore_mem>>
      %79 = tpu.memref_squeeze %78 : memref<1x!tpu.dma_semaphore, #tpu.memory_space<semaphore_mem>> -> memref<!tpu.dma_semaphore, #tpu.memory_space<semaphore_mem>>
      tpu.wait_dma2 semaphore(%79 : memref<!tpu.dma_semaphore, #tpu.memory_space<semaphore_mem>>) src(%76 : memref<1x128xf32, #tpu.memory_space<any>>) dst(%77 : memref<1x128xf32, #tpu.memory_space<vmem>>)
      %c6_64 = arith.constant 6 : index
      %80 = memref.load %arg1[%c6_64] : memref<8xi32, #tpu.memory_space<smem>>
      %c6_i32_65 = arith.constant 6 : i32
      %c0_i32_66 = arith.constant 0 : i32
      %81 = tpu.memref_slice %arg4[%80, %c0_i32_66] : memref<2048x128xf32, #tpu.memory_space<any>> -> memref<1x128xf32, #tpu.memory_space<any>>
      %c6_i32_67 = arith.constant 6 : i32
      %c0_i32_68 = arith.constant 0 : i32
      %82 = tpu.memref_slice %arg20[%c6_i32_67, %c0_i32_68] : memref<8x128xf32, #tpu.memory_space<vmem>> -> memref<1x128xf32, #tpu.memory_space<vmem>>
      %83 = tpu.memref_slice %arg22[%c6_i32_65] : memref<8x!tpu.dma_semaphore, #tpu.memory_space<semaphore_mem>> -> memref<1x!tpu.dma_semaphore, #tpu.memory_space<semaphore_mem>>
      %84 = tpu.memref_squeeze %83 : memref<1x!tpu.dma_semaphore, #tpu.memory_space<semaphore_mem>> -> memref<!tpu.dma_semaphore, #tpu.memory_space<semaphore_mem>>
      tpu.wait_dma2 semaphore(%84 : memref<!tpu.dma_semaphore, #tpu.memory_space<semaphore_mem>>) src(%81 : memref<1x128xf32, #tpu.memory_space<any>>) dst(%82 : memref<1x128xf32, #tpu.memory_space<vmem>>)
      %c7_69 = arith.constant 7 : index
      %85 = memref.load %arg1[%c7_69] : memref<8xi32, #tpu.memory_space<smem>>
      %c7_i32_70 = arith.constant 7 : i32
      %c0_i32_71 = arith.constant 0 : i32
      %86 = tpu.memref_slice %arg4[%85, %c0_i32_71] : memref<2048x128xf32, #tpu.memory_space<any>> -> memref<1x128xf32, #tpu.memory_space<any>>
      %c7_i32_72 = arith.constant 7 : i32
      %c0_i32_73 = arith.constant 0 : i32
      %87 = tpu.memref_slice %arg20[%c7_i32_72, %c0_i32_73] : memref<8x128xf32, #tpu.memory_space<vmem>> -> memref<1x128xf32, #tpu.memory_space<vmem>>
      %88 = tpu.memref_slice %arg22[%c7_i32_70] : memref<8x!tpu.dma_semaphore, #tpu.memory_space<semaphore_mem>> -> memref<1x!tpu.dma_semaphore, #tpu.memory_space<semaphore_mem>>
      %89 = tpu.memref_squeeze %88 : memref<1x!tpu.dma_semaphore, #tpu.memory_space<semaphore_mem>> -> memref<!tpu.dma_semaphore, #tpu.memory_space<semaphore_mem>>
      tpu.wait_dma2 semaphore(%89 : memref<!tpu.dma_semaphore, #tpu.memory_space<semaphore_mem>>) src(%86 : memref<1x128xf32, #tpu.memory_space<any>>) dst(%87 : memref<1x128xf32, #tpu.memory_space<vmem>>)
      %c0_74 = arith.constant 0 : index
      %c0_75 = arith.constant 0 : index
      %90 = vector.load %arg20[%c0_74, %c0_75] : memref<8x128xf32, #tpu.memory_space<vmem>>, vector<8x128xf32>
      %c0_76 = arith.constant 0 : index
      %c0_77 = arith.constant 0 : index
      %c0_78 = arith.constant 0 : index
      %91 = vector.load %arg2[%c0_76, %c0_77, %c0_78] : memref<4x8x128xf32, #tpu.memory_space<vmem>>, vector<1x8x128xf32>
      %92 = vector.shape_cast %91 : vector<1x8x128xf32> to vector<8x128xf32>
      %c0_79 = arith.constant 0 : index
      %c0_80 = arith.constant 0 : index
      %c0_81 = arith.constant 0 : index
      %93 = vector.load %arg3[%c0_79, %c0_80, %c0_81] : memref<4x8x128xf32, #tpu.memory_space<vmem>>, vector<1x8x128xf32>
      %94 = vector.shape_cast %93 : vector<1x8x128xf32> to vector<8x128xf32>
      %c0_82 = arith.constant 0 : index
      %c0_83 = arith.constant 0 : index
      %95 = vector.load %arg5[%c0_82, %c0_83] : memref<256x512xbf16, #tpu.memory_space<vmem>>, vector<256x512xbf16>
      %c0_84 = arith.constant 0 : index
      %c0_85 = arith.constant 0 : index
      %96 = vector.load %arg9[%c0_84, %c0_85] : memref<1x512xf32, #tpu.memory_space<vmem>>, vector<1x512xf32>
      %97 = arith.truncf %90 : vector<8x128xf32> to vector<8x128xbf16>
      %98 = arith.truncf %92 : vector<8x128xf32> to vector<8x128xbf16>
      %99 = tpu.concatenate %97, %98 in 1 : vector<8x128xbf16>, vector<8x128xbf16> -> vector<8x256xbf16>
      %cst_86 = arith.constant dense<0.000000e+00> : vector<8x512xf32>
      %100 = tpu.matmul %99, %95, %cst_86 {dimension_numbers = #tpu.dot_dimension_numbers<[1], [0], [0], [1], [0, 0, 1, 1], [], []>} : vector<8x256xbf16>, vector<256x512xbf16>, vector<8x512xf32> -> vector<8x512xf32>
      %101 = vector.broadcast %96 : vector<1x512xf32> to vector<8x512xf32>
      %102 = arith.addf %100, %101 : vector<8x512xf32>
      %103 = vector.extract_strided_slice %102 {offsets = [0, 0], sizes = [8, 128], strides = [1, 1]} : vector<8x512xf32> to vector<8x128xf32>
      %104 = arith.negf %103 : vector<8x128xf32>
      %105 = math.exp %104 : vector<8x128xf32>
      %cst_87 = arith.constant 1.000000e+00 : f32
      %106 = vector.broadcast %cst_87 : f32 to vector<8x128xf32>
      %107 = arith.addf %106, %105 : vector<8x128xf32>
      %108 = arith.divf %106, %107 : vector<8x128xf32>
      %109 = vector.extract_strided_slice %102 {offsets = [0, 128], sizes = [8, 128], strides = [1, 1]} : vector<8x512xf32> to vector<8x128xf32>
      %110 = arith.negf %109 : vector<8x128xf32>
      %111 = math.exp %110 : vector<8x128xf32>
      %cst_88 = arith.constant 1.000000e+00 : f32
      %112 = vector.broadcast %cst_88 : f32 to vector<8x128xf32>
      %113 = arith.addf %112, %111 : vector<8x128xf32>
      %114 = arith.divf %112, %113 : vector<8x128xf32>
      %115 = vector.extract_strided_slice %102 {offsets = [0, 256], sizes = [8, 128], strides = [1, 1]} : vector<8x512xf32> to vector<8x128xf32>
      %116 = math.tanh %115 : vector<8x128xf32>
      %117 = vector.extract_strided_slice %102 {offsets = [0, 384], sizes = [8, 128], strides = [1, 1]} : vector<8x512xf32> to vector<8x128xf32>
      %118 = arith.negf %117 : vector<8x128xf32>
      %119 = math.exp %118 : vector<8x128xf32>
      %cst_89 = arith.constant 1.000000e+00 : f32
      %120 = vector.broadcast %cst_89 : f32 to vector<8x128xf32>
      %121 = arith.addf %120, %119 : vector<8x128xf32>
      %122 = arith.divf %120, %121 : vector<8x128xf32>
      %123 = arith.mulf %114, %94 : vector<8x128xf32>
      %124 = arith.mulf %108, %116 : vector<8x128xf32>
      %125 = arith.addf %123, %124 : vector<8x128xf32>
      %126 = math.tanh %125 : vector<8x128xf32>
      %127 = arith.mulf %122, %126 : vector<8x128xf32>
      %c1_90 = arith.constant 1 : index
      %c0_91 = arith.constant 0 : index
      %c0_92 = arith.constant 0 : index
      %128 = vector.load %arg2[%c1_90, %c0_91, %c0_92] : memref<4x8x128xf32, #tpu.memory_space<vmem>>, vector<1x8x128xf32>
      %129 = vector.shape_cast %128 : vector<1x8x128xf32> to vector<8x128xf32>
      %c1_93 = arith.constant 1 : index
      %c0_94 = arith.constant 0 : index
      %c0_95 = arith.constant 0 : index
      %130 = vector.load %arg3[%c1_93, %c0_94, %c0_95] : memref<4x8x128xf32, #tpu.memory_space<vmem>>, vector<1x8x128xf32>
      %131 = vector.shape_cast %130 : vector<1x8x128xf32> to vector<8x128xf32>
      %c0_96 = arith.constant 0 : index
      %c0_97 = arith.constant 0 : index
      %132 = vector.load %arg6[%c0_96, %c0_97] : memref<256x512xbf16, #tpu.memory_space<vmem>>, vector<256x512xbf16>
      %c0_98 = arith.constant 0 : index
      %c0_99 = arith.constant 0 : index
      %133 = vector.load %arg10[%c0_98, %c0_99] : memref<1x512xf32, #tpu.memory_space<vmem>>, vector<1x512xf32>
      %134 = arith.truncf %90 : vector<8x128xf32> to vector<8x128xbf16>
      %135 = arith.truncf %129 : vector<8x128xf32> to vector<8x128xbf16>
      %136 = tpu.concatenate %134, %135 in 1 : vector<8x128xbf16>, vector<8x128xbf16> -> vector<8x256xbf16>
      %cst_100 = arith.constant dense<0.000000e+00> : vector<8x512xf32>
      %137 = tpu.matmul %136, %132, %cst_100 {dimension_numbers = #tpu.dot_dimension_numbers<[1], [0], [0], [1], [0, 0, 1, 1], [], []>} : vector<8x256xbf16>, vector<256x512xbf16>, vector<8x512xf32> -> vector<8x512xf32>
      %138 = vector.broadcast %133 : vector<1x512xf32> to vector<8x512xf32>
      %139 = arith.addf %137, %138 : vector<8x512xf32>
      %140 = vector.extract_strided_slice %139 {offsets = [0, 0], sizes = [8, 128], strides = [1, 1]} : vector<8x512xf32> to vector<8x128xf32>
      %141 = arith.negf %140 : vector<8x128xf32>
      %142 = math.exp %141 : vector<8x128xf32>
      %cst_101 = arith.constant 1.000000e+00 : f32
      %143 = vector.broadcast %cst_101 : f32 to vector<8x128xf32>
      %144 = arith.addf %143, %142 : vector<8x128xf32>
      %145 = arith.divf %143, %144 : vector<8x128xf32>
      %146 = vector.extract_strided_slice %139 {offsets = [0, 128], sizes = [8, 128], strides = [1, 1]} : vector<8x512xf32> to vector<8x128xf32>
      %147 = arith.negf %146 : vector<8x128xf32>
      %148 = math.exp %147 : vector<8x128xf32>
      %cst_102 = arith.constant 1.000000e+00 : f32
      %149 = vector.broadcast %cst_102 : f32 to vector<8x128xf32>
      %150 = arith.addf %149, %148 : vector<8x128xf32>
      %151 = arith.divf %149, %150 : vector<8x128xf32>
      %152 = vector.extract_strided_slice %139 {offsets = [0, 256], sizes = [8, 128], strides = [1, 1]} : vector<8x512xf32> to vector<8x128xf32>
      %153 = math.tanh %152 : vector<8x128xf32>
      %154 = vector.extract_strided_slice %139 {offsets = [0, 384], sizes = [8, 128], strides = [1, 1]} : vector<8x512xf32> to vector<8x128xf32>
      %155 = arith.negf %154 : vector<8x128xf32>
      %156 = math.exp %155 : vector<8x128xf32>
      %cst_103 = arith.constant 1.000000e+00 : f32
      %157 = vector.broadcast %cst_103 : f32 to vector<8x128xf32>
      %158 = arith.addf %157, %156 : vector<8x128xf32>
      %159 = arith.divf %157, %158 : vector<8x128xf32>
      %160 = arith.mulf %151, %131 : vector<8x128xf32>
      %161 = arith.mulf %145, %153 : vector<8x128xf32>
      %162 = arith.addf %160, %161 : vector<8x128xf32>
      %163 = math.tanh %162 : vector<8x128xf32>
      %164 = arith.mulf %159, %163 : vector<8x128xf32>
      %165 = tpu.concatenate %127, %164 in 1 : vector<8x128xf32>, vector<8x128xf32> -> vector<8x256xf32>
      %c2_104 = arith.constant 2 : index
      %c0_105 = arith.constant 0 : index
      %c0_106 = arith.constant 0 : index
      %166 = vector.load %arg2[%c2_104, %c0_105, %c0_106] : memref<4x8x128xf32, #tpu.memory_space<vmem>>, vector<1x8x128xf32>
      %167 = vector.shape_cast %166 : vector<1x8x128xf32> to vector<8x128xf32>
      %c2_107 = arith.constant 2 : index
      %c0_108 = arith.constant 0 : index
      %c0_109 = arith.constant 0 : index
      %168 = vector.load %arg3[%c2_107, %c0_108, %c0_109] : memref<4x8x128xf32, #tpu.memory_space<vmem>>, vector<1x8x128xf32>
      %169 = vector.shape_cast %168 : vector<1x8x128xf32> to vector<8x128xf32>
      %c0_110 = arith.constant 0 : index
      %c0_111 = arith.constant 0 : index
      %170 = vector.load %arg7[%c0_110, %c0_111] : memref<384x512xbf16, #tpu.memory_space<vmem>>, vector<384x512xbf16>
      %c0_112 = arith.constant 0 : index
      %c0_113 = arith.constant 0 : index
      %171 = vector.load %arg11[%c0_112, %c0_113] : memref<1x512xf32, #tpu.memory_space<vmem>>, vector<1x512xf32>
      %172 = arith.truncf %165 : vector<8x256xf32> to vector<8x256xbf16>
      %173 = arith.truncf %167 : vector<8x128xf32> to vector<8x128xbf16>
      %174 = tpu.concatenate %172, %173 in 1 : vector<8x256xbf16>, vector<8x128xbf16> -> vector<8x384xbf16>
      %cst_114 = arith.constant dense<0.000000e+00> : vector<8x512xf32>
      %175 = tpu.matmul %174, %170, %cst_114 {dimension_numbers = #tpu.dot_dimension_numbers<[1], [0], [0], [1], [0, 0, 1, 1], [], []>} : vector<8x384xbf16>, vector<384x512xbf16>, vector<8x512xf32> -> vector<8x512xf32>
      %176 = vector.broadcast %171 : vector<1x512xf32> to vector<8x512xf32>
      %177 = arith.addf %175, %176 : vector<8x512xf32>
      %178 = vector.extract_strided_slice %177 {offsets = [0, 0], sizes = [8, 128], strides = [1, 1]} : vector<8x512xf32> to vector<8x128xf32>
      %179 = arith.negf %178 : vector<8x128xf32>
      %180 = math.exp %179 : vector<8x128xf32>
      %cst_115 = arith.constant 1.000000e+00 : f32
      %181 = vector.broadcast %cst_115 : f32 to vector<8x128xf32>
      %182 = arith.addf %181, %180 : vector<8x128xf32>
      %183 = arith.divf %181, %182 : vector<8x128xf32>
      %184 = vector.extract_strided_slice %177 {offsets = [0, 128], sizes = [8, 128], strides = [1, 1]} : vector<8x512xf32> to vector<8x128xf32>
      %185 = arith.negf %184 : vector<8x128xf32>
      %186 = math.exp %185 : vector<8x128xf32>
      %cst_116 = arith.constant 1.000000e+00 : f32
      %187 = vector.broadcast %cst_116 : f32 to vector<8x128xf32>
      %188 = arith.addf %187, %186 : vector<8x128xf32>
      %189 = arith.divf %187, %188 : vector<8x128xf32>
      %190 = vector.extract_strided_slice %177 {offsets = [0, 256], sizes = [8, 128], strides = [1, 1]} : vector<8x512xf32> to vector<8x128xf32>
      %191 = math.tanh %190 : vector<8x128xf32>
      %192 = vector.extract_strided_slice %177 {offsets = [0, 384], sizes = [8, 128], strides = [1, 1]} : vector<8x512xf32> to vector<8x128xf32>
      %193 = arith.negf %192 : vector<8x128xf32>
      %194 = math.exp %193 : vector<8x128xf32>
      %cst_117 = arith.constant 1.000000e+00 : f32
      %195 = vector.broadcast %cst_117 : f32 to vector<8x128xf32>
      %196 = arith.addf %195, %194 : vector<8x128xf32>
      %197 = arith.divf %195, %196 : vector<8x128xf32>
      %198 = arith.mulf %189, %169 : vector<8x128xf32>
      %199 = arith.mulf %183, %191 : vector<8x128xf32>
      %200 = arith.addf %198, %199 : vector<8x128xf32>
      %201 = math.tanh %200 : vector<8x128xf32>
      %202 = arith.mulf %197, %201 : vector<8x128xf32>
      %c3_118 = arith.constant 3 : index
      %c0_119 = arith.constant 0 : index
      %c0_120 = arith.constant 0 : index
      %203 = vector.load %arg2[%c3_118, %c0_119, %c0_120] : memref<4x8x128xf32, #tpu.memory_space<vmem>>, vector<1x8x128xf32>
      %204 = vector.shape_cast %203 : vector<1x8x128xf32> to vector<8x128xf32>
      %c3_121 = arith.constant 3 : index
      %c0_122 = arith.constant 0 : index
      %c0_123 = arith.constant 0 : index
      %205 = vector.load %arg3[%c3_121, %c0_122, %c0_123] : memref<4x8x128xf32, #tpu.memory_space<vmem>>, vector<1x8x128xf32>
      %206 = vector.shape_cast %205 : vector<1x8x128xf32> to vector<8x128xf32>
      %c0_124 = arith.constant 0 : index
      %c0_125 = arith.constant 0 : index
      %207 = vector.load %arg8[%c0_124, %c0_125] : memref<384x512xbf16, #tpu.memory_space<vmem>>, vector<384x512xbf16>
      %c0_126 = arith.constant 0 : index
      %c0_127 = arith.constant 0 : index
      %208 = vector.load %arg12[%c0_126, %c0_127] : memref<1x512xf32, #tpu.memory_space<vmem>>, vector<1x512xf32>
      %209 = arith.truncf %165 : vector<8x256xf32> to vector<8x256xbf16>
      %210 = arith.truncf %204 : vector<8x128xf32> to vector<8x128xbf16>
      %211 = tpu.concatenate %209, %210 in 1 : vector<8x256xbf16>, vector<8x128xbf16> -> vector<8x384xbf16>
      %cst_128 = arith.constant dense<0.000000e+00> : vector<8x512xf32>
      %212 = tpu.matmul %211, %207, %cst_128 {dimension_numbers = #tpu.dot_dimension_numbers<[1], [0], [0], [1], [0, 0, 1, 1], [], []>} : vector<8x384xbf16>, vector<384x512xbf16>, vector<8x512xf32> -> vector<8x512xf32>
      %213 = vector.broadcast %208 : vector<1x512xf32> to vector<8x512xf32>
      %214 = arith.addf %212, %213 : vector<8x512xf32>
      %215 = vector.extract_strided_slice %214 {offsets = [0, 0], sizes = [8, 128], strides = [1, 1]} : vector<8x512xf32> to vector<8x128xf32>
      %216 = arith.negf %215 : vector<8x128xf32>
      %217 = math.exp %216 : vector<8x128xf32>
      %cst_129 = arith.constant 1.000000e+00 : f32
      %218 = vector.broadcast %cst_129 : f32 to vector<8x128xf32>
      %219 = arith.addf %218, %217 : vector<8x128xf32>
      %220 = arith.divf %218, %219 : vector<8x128xf32>
      %221 = vector.extract_strided_slice %214 {offsets = [0, 128], sizes = [8, 128], strides = [1, 1]} : vector<8x512xf32> to vector<8x128xf32>
      %222 = arith.negf %221 : vector<8x128xf32>
      %223 = math.exp %222 : vector<8x128xf32>
      %cst_130 = arith.constant 1.000000e+00 : f32
      %224 = vector.broadcast %cst_130 : f32 to vector<8x128xf32>
      %225 = arith.addf %224, %223 : vector<8x128xf32>
      %226 = arith.divf %224, %225 : vector<8x128xf32>
      %227 = vector.extract_strided_slice %214 {offsets = [0, 256], sizes = [8, 128], strides = [1, 1]} : vector<8x512xf32> to vector<8x128xf32>
      %228 = math.tanh %227 : vector<8x128xf32>
      %229 = vector.extract_strided_slice %214 {offsets = [0, 384], sizes = [8, 128], strides = [1, 1]} : vector<8x512xf32> to vector<8x128xf32>
      %230 = arith.negf %229 : vector<8x128xf32>
      %231 = math.exp %230 : vector<8x128xf32>
      %cst_131 = arith.constant 1.000000e+00 : f32
      %232 = vector.broadcast %cst_131 : f32 to vector<8x128xf32>
      %233 = arith.addf %232, %231 : vector<8x128xf32>
      %234 = arith.divf %232, %233 : vector<8x128xf32>
      %235 = arith.mulf %226, %206 : vector<8x128xf32>
      %236 = arith.mulf %220, %228 : vector<8x128xf32>
      %237 = arith.addf %235, %236 : vector<8x128xf32>
      %238 = math.tanh %237 : vector<8x128xf32>
      %239 = arith.mulf %234, %238 : vector<8x128xf32>
      %240 = tpu.concatenate %202, %239 in 1 : vector<8x128xf32>, vector<8x128xf32> -> vector<8x256xf32>
      %c0_132 = arith.constant 0 : index
      %c0_133 = arith.constant 0 : index
      %c0_134 = arith.constant 0 : index
      %241 = vector.load %arg18[%c0_132, %c0_133, %c0_134] : memref<4x8x128xf32, #tpu.memory_space<vmem>>, vector<1x8x128xf32>
      %242 = vector.shape_cast %241 : vector<1x8x128xf32> to vector<8x128xf32>
      %243 = vector.shape_cast %127 : vector<8x128xf32> to vector<1x8x128xf32>
      tpu.vector_store %arg18[%c0_132, %c0_133, %c0_134], %243 {strides = array<i32>} : memref<4x8x128xf32, #tpu.memory_space<vmem>>, vector<1x8x128xf32>,
      %c1_135 = arith.constant 1 : index
      %c0_136 = arith.constant 0 : index
      %c0_137 = arith.constant 0 : index
      %244 = vector.load %arg18[%c1_135, %c0_136, %c0_137] : memref<4x8x128xf32, #tpu.memory_space<vmem>>, vector<1x8x128xf32>
      %245 = vector.shape_cast %244 : vector<1x8x128xf32> to vector<8x128xf32>
      %246 = vector.shape_cast %164 : vector<8x128xf32> to vector<1x8x128xf32>
      tpu.vector_store %arg18[%c1_135, %c0_136, %c0_137], %246 {strides = array<i32>} : memref<4x8x128xf32, #tpu.memory_space<vmem>>, vector<1x8x128xf32>,
      %c2_138 = arith.constant 2 : index
      %c0_139 = arith.constant 0 : index
      %c0_140 = arith.constant 0 : index
      %247 = vector.load %arg18[%c2_138, %c0_139, %c0_140] : memref<4x8x128xf32, #tpu.memory_space<vmem>>, vector<1x8x128xf32>
      %248 = vector.shape_cast %247 : vector<1x8x128xf32> to vector<8x128xf32>
      %249 = vector.shape_cast %202 : vector<8x128xf32> to vector<1x8x128xf32>
      tpu.vector_store %arg18[%c2_138, %c0_139, %c0_140], %249 {strides = array<i32>} : memref<4x8x128xf32, #tpu.memory_space<vmem>>, vector<1x8x128xf32>,
      %c3_141 = arith.constant 3 : index
      %c0_142 = arith.constant 0 : index
      %c0_143 = arith.constant 0 : index
      %250 = vector.load %arg18[%c3_141, %c0_142, %c0_143] : memref<4x8x128xf32, #tpu.memory_space<vmem>>, vector<1x8x128xf32>
      %251 = vector.shape_cast %250 : vector<1x8x128xf32> to vector<8x128xf32>
      %252 = vector.shape_cast %239 : vector<8x128xf32> to vector<1x8x128xf32>
      tpu.vector_store %arg18[%c3_141, %c0_142, %c0_143], %252 {strides = array<i32>} : memref<4x8x128xf32, #tpu.memory_space<vmem>>, vector<1x8x128xf32>,
      %c0_144 = arith.constant 0 : index
      %c0_145 = arith.constant 0 : index
      %c0_146 = arith.constant 0 : index
      %253 = vector.load %arg19[%c0_144, %c0_145, %c0_146] : memref<4x8x128xf32, #tpu.memory_space<vmem>>, vector<1x8x128xf32>
      %254 = vector.shape_cast %253 : vector<1x8x128xf32> to vector<8x128xf32>
      %255 = vector.shape_cast %125 : vector<8x128xf32> to vector<1x8x128xf32>
      tpu.vector_store %arg19[%c0_144, %c0_145, %c0_146], %255 {strides = array<i32>} : memref<4x8x128xf32, #tpu.memory_space<vmem>>, vector<1x8x128xf32>,
      %c1_147 = arith.constant 1 : index
      %c0_148 = arith.constant 0 : index
      %c0_149 = arith.constant 0 : index
      %256 = vector.load %arg19[%c1_147, %c0_148, %c0_149] : memref<4x8x128xf32, #tpu.memory_space<vmem>>, vector<1x8x128xf32>
      %257 = vector.shape_cast %256 : vector<1x8x128xf32> to vector<8x128xf32>
      %258 = vector.shape_cast %162 : vector<8x128xf32> to vector<1x8x128xf32>
      tpu.vector_store %arg19[%c1_147, %c0_148, %c0_149], %258 {strides = array<i32>} : memref<4x8x128xf32, #tpu.memory_space<vmem>>, vector<1x8x128xf32>,
      %c2_150 = arith.constant 2 : index
      %c0_151 = arith.constant 0 : index
      %c0_152 = arith.constant 0 : index
      %259 = vector.load %arg19[%c2_150, %c0_151, %c0_152] : memref<4x8x128xf32, #tpu.memory_space<vmem>>, vector<1x8x128xf32>
      %260 = vector.shape_cast %259 : vector<1x8x128xf32> to vector<8x128xf32>
      %261 = vector.shape_cast %200 : vector<8x128xf32> to vector<1x8x128xf32>
      tpu.vector_store %arg19[%c2_150, %c0_151, %c0_152], %261 {strides = array<i32>} : memref<4x8x128xf32, #tpu.memory_space<vmem>>, vector<1x8x128xf32>,
      %c3_153 = arith.constant 3 : index
      %c0_154 = arith.constant 0 : index
      %c0_155 = arith.constant 0 : index
      %262 = vector.load %arg19[%c3_153, %c0_154, %c0_155] : memref<4x8x128xf32, #tpu.memory_space<vmem>>, vector<1x8x128xf32>
      %263 = vector.shape_cast %262 : vector<1x8x128xf32> to vector<8x128xf32>
      %264 = vector.shape_cast %237 : vector<8x128xf32> to vector<1x8x128xf32>
      tpu.vector_store %arg19[%c3_153, %c0_154, %c0_155], %264 {strides = array<i32>} : memref<4x8x128xf32, #tpu.memory_space<vmem>>, vector<1x8x128xf32>,
      %cst_156 = arith.constant dense<0.000000e+00> : vector<8xf32>
      %265 = vector.multi_reduction <add>, %240, %cst_156 [1] : vector<8x256xf32> to vector<8xf32>
      %266 = vector.shape_cast %265 : vector<8xf32> to vector<8x1xf32>
      %cst_157 = arith.constant 2.560000e+02 : f32
      %267 = vector.broadcast %cst_157 : f32 to vector<8x1xf32>
      %268 = arith.divf %266, %267 : vector<8x1xf32>
      %269 = vector.broadcast %268 : vector<8x1xf32> to vector<8x256xf32>
      %270 = arith.subf %240, %269 : vector<8x256xf32>
      %271 = arith.mulf %270, %270 : vector<8x256xf32>
      %cst_158 = arith.constant dense<0.000000e+00> : vector<8xf32>
      %272 = vector.multi_reduction <add>, %271, %cst_158 [1] : vector<8x256xf32> to vector<8xf32>
      %273 = vector.shape_cast %272 : vector<8xf32> to vector<8x1xf32>
      %cst_159 = arith.constant 2.560000e+02 : f32
      %274 = vector.broadcast %cst_159 : f32 to vector<8x1xf32>
      %275 = arith.divf %273, %274 : vector<8x1xf32>
      %cst_160 = arith.constant 9.99999974E-6 : f32
      %276 = vector.broadcast %cst_160 : f32 to vector<8x1xf32>
      %277 = arith.addf %275, %276 : vector<8x1xf32>
      %278 = math.rsqrt %277 : vector<8x1xf32>
      %279 = vector.broadcast %278 : vector<8x1xf32> to vector<8x256xf32>
      %280 = arith.mulf %270, %279 : vector<8x256xf32>
      %c0_161 = arith.constant 0 : index
      %c0_162 = arith.constant 0 : index
      %281 = vector.load %arg13[%c0_161, %c0_162] : memref<1x256xf32, #tpu.memory_space<vmem>>, vector<1x256xf32>
      %282 = vector.broadcast %281 : vector<1x256xf32> to vector<8x256xf32>
      %283 = arith.mulf %280, %282 : vector<8x256xf32>
      %c0_163 = arith.constant 0 : index
      %c0_164 = arith.constant 0 : index
      %284 = vector.load %arg14[%c0_163, %c0_164] : memref<1x256xf32, #tpu.memory_space<vmem>>, vector<1x256xf32>
      %285 = vector.broadcast %284 : vector<1x256xf32> to vector<8x256xf32>
      %286 = arith.addf %283, %285 : vector<8x256xf32>
      %287 = arith.truncf %286 : vector<8x256xf32> to vector<8x256xbf16>
      %c0_165 = arith.constant 0 : index
      %c0_166 = arith.constant 0 : index
      %288 = vector.load %arg21[%c0_165, %c0_166] : memref<8x256xbf16, #tpu.memory_space<vmem>>, vector<8x256xbf16>
      tpu.vector_store %arg21[%c0_165, %c0_166], %287 {strides = array<i32>} : memref<8x256xbf16, #tpu.memory_space<vmem>>, vector<8x256xbf16>,
    } else {
    }
    %c0 = arith.constant 0 : index
    %c0_1 = arith.constant 0 : index
    %3 = vector.load %arg21[%c0, %c0_1] : memref<8x256xbf16, #tpu.memory_space<vmem>>, vector<8x256xbf16>
    %c0_2 = arith.constant 0 : index
    %c0_3 = arith.constant 0 : index
    %4 = vector.load %arg15[%c0_2, %c0_3] : memref<256x1024xbf16, #tpu.memory_space<vmem>>, vector<256x1024xbf16>
    %cst = arith.constant dense<0.000000e+00> : vector<8x1024xf32>
    %5 = tpu.matmul %3, %4, %cst {dimension_numbers = #tpu.dot_dimension_numbers<[1], [0], [0], [1], [0, 0, 1, 1], [], []>} : vector<8x256xbf16>, vector<256x1024xbf16>, vector<8x1024xf32> -> vector<8x1024xf32>
    %c0_4 = arith.constant 0 : index
    %c0_5 = arith.constant 0 : index
    %6 = vector.load %arg16[%c0_4, %c0_5] : memref<1x1024xf32, #tpu.memory_space<vmem>>, vector<1x1024xf32>
    %7 = vector.broadcast %6 : vector<1x1024xf32> to vector<8x1024xf32>
    %8 = arith.addf %5, %7 : vector<8x1024xf32>
    %c0_6 = arith.constant 0 : index
    %c0_7 = arith.constant 0 : index
    %9 = vector.load %arg17[%c0_6, %c0_7] : memref<8x1024xf32, #tpu.memory_space<vmem>>, vector<8x1024xf32>
    tpu.vector_store %arg17[%c0_6, %c0_7], %8 {strides = array<i32>} : memref<8x1024xf32, #tpu.memory_space<vmem>>, vector<8x1024xf32>,
    return
  }
  func.func @transform_0(%arg0: i32, %arg1: memref<8xi32, #tpu.memory_space<smem>>) -> (i32, i32, i32) {
    %c0_i32 = arith.constant 0 : i32
    %c0_i32_0 = arith.constant 0 : i32
    %c0_i32_1 = arith.constant 0 : i32
    %c0_i32_2 = arith.constant 0 : i32
    return %c0_i32, %c0_i32_0, %c0_i32_1 : i32, i32, i32
  }
  func.func @transform_1(%arg0: i32, %arg1: memref<8xi32, #tpu.memory_space<smem>>) -> (i32, i32, i32) {
    %c0_i32 = arith.constant 0 : i32
    %c0_i32_0 = arith.constant 0 : i32
    %c0_i32_1 = arith.constant 0 : i32
    %c0_i32_2 = arith.constant 0 : i32
    return %c0_i32, %c0_i32_0, %c0_i32_1 : i32, i32, i32
  }
  func.func @transform_3(%arg0: i32, %arg1: memref<8xi32, #tpu.memory_space<smem>>) -> (i32, i32) {
    %c0_i32 = arith.constant 0 : i32
    %c0_i32_0 = arith.constant 0 : i32
    %c0_i32_1 = arith.constant 0 : i32
    return %c0_i32, %c0_i32_0 : i32, i32
  }
  func.func @transform_4(%arg0: i32, %arg1: memref<8xi32, #tpu.memory_space<smem>>) -> (i32, i32) {
    %c0_i32 = arith.constant 0 : i32
    %c0_i32_0 = arith.constant 0 : i32
    %c0_i32_1 = arith.constant 0 : i32
    return %c0_i32, %c0_i32_0 : i32, i32
  }
  func.func @transform_5(%arg0: i32, %arg1: memref<8xi32, #tpu.memory_space<smem>>) -> (i32, i32) {
    %c0_i32 = arith.constant 0 : i32
    %c0_i32_0 = arith.constant 0 : i32
    %c0_i32_1 = arith.constant 0 : i32
    return %c0_i32, %c0_i32_0 : i32, i32
  }
  func.func @transform_6(%arg0: i32, %arg1: memref<8xi32, #tpu.memory_space<smem>>) -> (i32, i32) {
    %c0_i32 = arith.constant 0 : i32
    %c0_i32_0 = arith.constant 0 : i32
    %c0_i32_1 = arith.constant 0 : i32
    return %c0_i32, %c0_i32_0 : i32, i32
  }
  func.func @transform_7(%arg0: i32, %arg1: memref<8xi32, #tpu.memory_space<smem>>) -> (i32, i32) {
    %c0_i32 = arith.constant 0 : i32
    %c0_i32_0 = arith.constant 0 : i32
    %c0_i32_1 = arith.constant 0 : i32
    return %c0_i32, %c0_i32_0 : i32, i32
  }
  func.func @transform_8(%arg0: i32, %arg1: memref<8xi32, #tpu.memory_space<smem>>) -> (i32, i32) {
    %c0_i32 = arith.constant 0 : i32
    %c0_i32_0 = arith.constant 0 : i32
    %c0_i32_1 = arith.constant 0 : i32
    return %c0_i32, %c0_i32_0 : i32, i32
  }
  func.func @transform_9(%arg0: i32, %arg1: memref<8xi32, #tpu.memory_space<smem>>) -> (i32, i32) {
    %c0_i32 = arith.constant 0 : i32
    %c0_i32_0 = arith.constant 0 : i32
    %c0_i32_1 = arith.constant 0 : i32
    return %c0_i32, %c0_i32_0 : i32, i32
  }
  func.func @transform_10(%arg0: i32, %arg1: memref<8xi32, #tpu.memory_space<smem>>) -> (i32, i32) {
    %c0_i32 = arith.constant 0 : i32
    %c0_i32_0 = arith.constant 0 : i32
    %c0_i32_1 = arith.constant 0 : i32
    return %c0_i32, %c0_i32_0 : i32, i32
  }
  func.func @transform_11(%arg0: i32, %arg1: memref<8xi32, #tpu.memory_space<smem>>) -> (i32, i32) {
    %c0_i32 = arith.constant 0 : i32
    %c0_i32_0 = arith.constant 0 : i32
    %c0_i32_1 = arith.constant 0 : i32
    return %c0_i32, %c0_i32_0 : i32, i32
  }
  func.func @transform_12(%arg0: i32, %arg1: memref<8xi32, #tpu.memory_space<smem>>) -> (i32, i32) {
    %c0_i32 = arith.constant 0 : i32
    %c0_i32_0 = arith.constant 0 : i32
    %c0_i32_1 = arith.constant 0 : i32
    return %c0_i32, %c0_i32_0 : i32, i32
  }
  func.func @transform_13(%arg0: i32, %arg1: memref<8xi32, #tpu.memory_space<smem>>) -> (i32, i32) {
    %c0_i32 = arith.constant 0 : i32
    %c0_i32_0 = arith.constant 0 : i32
    return %c0_i32, %arg0 : i32, i32
  }
  func.func @transform_14(%arg0: i32, %arg1: memref<8xi32, #tpu.memory_space<smem>>) -> (i32, i32) {
    %c0_i32 = arith.constant 0 : i32
    %c0_i32_0 = arith.constant 0 : i32
    return %c0_i32, %arg0 : i32, i32
  }
  func.func @transform_15(%arg0: i32, %arg1: memref<8xi32, #tpu.memory_space<smem>>) -> (i32, i32) {
    %c0_i32 = arith.constant 0 : i32
    %c0_i32_0 = arith.constant 0 : i32
    return %c0_i32, %arg0 : i32, i32
  }
  func.func @transform_16(%arg0: i32, %arg1: memref<8xi32, #tpu.memory_space<smem>>) -> (i32, i32, i32) {
    %c0_i32 = arith.constant 0 : i32
    %c0_i32_0 = arith.constant 0 : i32
    %c0_i32_1 = arith.constant 0 : i32
    %c0_i32_2 = arith.constant 0 : i32
    return %c0_i32, %c0_i32_0, %c0_i32_1 : i32, i32, i32
  }
  func.func @transform_17(%arg0: i32, %arg1: memref<8xi32, #tpu.memory_space<smem>>) -> (i32, i32, i32) {
    %c0_i32 = arith.constant 0 : i32
    %c0_i32_0 = arith.constant 0 : i32
    %c0_i32_1 = arith.constant 0 : i32
    %c0_i32_2 = arith.constant 0 : i32
    return %c0_i32, %c0_i32_0, %c0_i32_1 : i32, i32, i32
  }
}

</mosaic_0001>

<llo_original>
// kernel: rnn_v3_forward.1
$region0: #{rnn_v3_forward.1}
  #allocation0 [shape = 'u32[]', space=smem, size = 0x4, offset = 0x4, fixed_abs, tag = 'smem constant byte address 0x4 - core index']
  #allocation1 [shape = 'u32[144,128]{1,0:T(1,128)}', space=vmem, size = 0x12000, scoped, tag = 'internal scratch']
  #allocation2 [shape = 'f32[8,128]{1,0:T(8,128)}', space=vmem, size = 0x1000, scoped, tag = 'scratch operand']
  #allocation3 [shape = 'bf16[8,256]{1,0:T(8,128)(2,1)}', space=vmem, size = 0x1000, scoped, tag = 'scratch operand']
  #allocation4 [shape = 's32[8]{0}', space=sflag, size = 0x20, scoped, tag = 'scratch operand']
  #allocation5 [shape = 's32[1]{0}', space=sflag, size = 0x4, scoped, tag = 'scoped memory for rnn_v3_forward.1']
  #allocation6 [shape = 'u8[512]{0}', space=smem, size = 0x200, scoped, tag = 'prefetched SMEM operand 0']
  #allocation23 [shape = 's32[]', space=sflag, size = 0x4, offset = 0, fixed_abs, tag = 'sflag constant byte address 0x0 - dummy sync flag']
  #allocation24 [shape = 's32[]', space=sflag, size = 0x4, offset = 0, fixed_abs, tag = 'sflag constant byte address 0x0 - dummy sync flag']
  #allocation25 [shape = 'u32[]', space=smem, size = 0x4, offset = 0x44, fixed_abs, tag = 'smem constant byte address 0x44 - assertion arg 0']
  #allocation26 [shape = 'u32[]', space=smem, size = 0x4, offset = 0x48, fixed_abs, tag = 'smem constant byte address 0x48 - assertion arg 1']
  #allocation27 [shape = 's32[]', space=sflag, size = 0x4, offset = 0, fixed_abs, tag = 'sflag constant byte address 0x0 - dummy sync flag']
  #allocation28 [shape = 's32[]', space=sflag, size = 0x4, offset = 0, fixed_abs, tag = 'sflag constant byte address 0x0 - dummy sync flag']
  #allocation29 [shape = 's32[]', space=sflag, size = 0x4, offset = 0, fixed_abs, tag = 'sflag constant byte address 0x0 - dummy sync flag']
  #allocation30 [shape = 's32[]', space=sflag, size = 0x4, offset = 0, fixed_abs, tag = 'sflag constant byte address 0x0 - dummy sync flag']
  #allocation31 [shape = 's32[]', space=sflag, size = 0x4, offset = 0, fixed_abs, tag = 'sflag constant byte address 0x0 - dummy sync flag']
  #allocation32 [shape = 's32[]', space=sflag, size = 0x4, offset = 0, fixed_abs, tag = 'sflag constant byte address 0x0 - dummy sync flag']
  #allocation33 [shape = 's32[]', space=sflag, size = 0x4, offset = 0, fixed_abs, tag = 'sflag constant byte address 0x0 - dummy sync flag']
  #allocation34 [shape = 's32[]', space=sflag, size = 0x4, offset = 0, fixed_abs, tag = 'sflag constant byte address 0x0 - dummy sync flag']
  #allocation35 [shape = 's32[]', space=sflag, size = 0x4, offset = 0, fixed_abs, tag = 'sflag constant byte address 0x0 - dummy sync flag']
  #allocation36 [shape = 's32[]', space=sflag, size = 0x4, offset = 0, fixed_abs, tag = 'sflag constant byte address 0x0 - dummy sync flag']
  #allocation37 [shape = 's32[]', space=sflag, size = 0x4, offset = 0, fixed_abs, tag = 'sflag constant byte address 0x0 - dummy sync flag']
  #allocation38 [shape = 's32[]', space=sflag, size = 0x4, offset = 0, fixed_abs, tag = 'sflag constant byte address 0x0 - dummy sync flag']
  #allocation39 [shape = 's32[]', space=sflag, size = 0x4, offset = 0, fixed_abs, tag = 'sflag constant byte address 0x0 - dummy sync flag']
  #allocation40 [shape = 's32[]', space=sflag, size = 0x4, offset = 0, fixed_abs, tag = 'sflag constant byte address 0x0 - dummy sync flag']
  %s0 = inlined_call_operand.vmem [shape: s32[8], index: 0, kind: input, shape index: {}]
  %s1 = inlined_call_operand.hbm [shape: f32[4,8,128], index: 1, kind: input, shape index: {}, may-alias: {1,17}]
  %s2 = inlined_call_operand.hbm [shape: f32[4,8,128], index: 2, kind: input, shape index: {}, may-alias: {2,18}]
  %s3 = inlined_call_operand.hbm [shape: f32[2048,128], index: 3, kind: input, shape index: {}]
  %s4 = inlined_call_operand.hbm [shape: bf16[256,512], index: 4, kind: input, shape index: {}]
  %s5 = inlined_call_operand.hbm [shape: bf16[256,512], index: 5, kind: input, shape index: {}]
  %s6 = inlined_call_operand.hbm [shape: bf16[384,512], index: 6, kind: input, shape index: {}]
  %s7 = inlined_call_operand.hbm [shape: bf16[384,512], index: 7, kind: input, shape index: {}]
  %s8 = inlined_call_operand.vmem [shape: f32[1,512], index: 8, kind: input, shape index: {}]
  %s9 = inlined_call_operand.vmem [shape: f32[1,512], index: 9, kind: input, shape index: {}]
  %s10 = inlined_call_operand.vmem [shape: f32[1,512], index: 10, kind: input, shape index: {}]
  %s11 = inlined_call_operand.vmem [shape: f32[1,512], index: 11, kind: input, shape index: {}]
  %s12 = inlined_call_operand.vmem [shape: f32[1,256], index: 12, kind: input, shape index: {}]
  %s13 = inlined_call_operand.vmem [shape: f32[1,256], index: 13, kind: input, shape index: {}]
  %s14 = inlined_call_operand.hbm [shape: bf16[256,2048], index: 14, kind: input, shape index: {}]
  %s15 = inlined_call_operand.vmem [shape: f32[1,2048], index: 15, kind: input, shape index: {}]
  %s16 = inlined_call_operand.hbm [shape: f32[8,2048], index: 16, kind: output, shape index: {0}]
  %s17 = inlined_call_operand.hbm [shape: f32[4,8,128], index: 17, kind: output, shape index: {1}, may-alias: {1,17}]
  %s18 = inlined_call_operand.hbm [shape: f32[4,8,128], index: 18, kind: output, shape index: {2}, may-alias: {2,18}]
  %19 = xla_tuple %s16, %s17, %s18
  %s20 = sld [smem:[#allocation0]]
  $region169: #{rnn_v3_forward.1} parent=0
    _
  %s22 = ssub.s32 1, %s20
  %s23 = scalar_select 0, %s22, %s20
  %s24 = sshll.u32 %s0, 4
  %s25 = int_to_ptr.vmem [resolvable:$true] %s24
  %27 = dma.vmem_to_smem %s25, 16, [#allocation6], [#allocation5]
  %28 = dma.done [#allocation5], 16
  %29 = sfence
  $region1: #{rnn_v3_forward.1} parent=0
    #allocation7 [shape = 'u8[16384]{0}', space=vmem, size = 0x4000, scoped, tag = 'input window, operand 1, single buffered']
    #allocation8 [shape = 's32[2]{0}', space=sflag, size = 0x8, scoped, tag = 'scoped memory for rnn_v3_forward.1']
    #allocation9 [shape = 's32[2]{0}', space=sflag, size = 0x8, scoped, tag = 'scoped memory for rnn_v3_forward.1']
    #allocation10 [shape = 'u8[16384]{0}', space=vmem, size = 0x4000, scoped, tag = 'input window, operand 2, single buffered']
    #allocation11 [shape = 's32[1]{0}', space=sflag, size = 0x4, scoped, tag = 'scoped memory for rnn_v3_forward.1']
    #allocation12 [shape = 'u8[262144]{0}', space=vmem, size = 0x40000, scoped, tag = 'input window, operand 4, single buffered']
    #allocation13 [shape = 'u8[262144]{0}', space=vmem, size = 0x40000, scoped, tag = 'input window, operand 5, single buffered']
    #allocation14 [shape = 's32[1]{0}', space=sflag, size = 0x4, scoped, tag = 'scoped memory for rnn_v3_forward.1']
    #allocation15 [shape = 'u8[393216]{0}', space=vmem, size = 0x60000, scoped, tag = 'input window, operand 6, single buffered']
    #allocation16 [shape = 'u8[393216]{0}', space=vmem, size = 0x60000, scoped, tag = 'input window, operand 7, single buffered']
    #allocation17 [shape = 's32[1]{0}', space=sflag, size = 0x4, scoped, tag = 'scoped memory for rnn_v3_forward.1']
    #allocation18 [shape = 'u8[1048576]{0}', space=vmem, size = 0x100000, scoped, tag = 'input window, operand 14']
    #allocation19 [shape = 'u8[65536]{0}', space=vmem, size = 0x10000, scoped, tag = 'output window, operand 0']
    #allocation20 [shape = 'u8[16384]{0}', space=vmem, size = 0x4000, scoped, tag = 'output window, operand 1, single buffered']
    #allocation21 [shape = 's32[1]{0}', space=sflag, size = 0x4, scoped, tag = 'scoped memory for rnn_v3_forward.1']
    #allocation22 [shape = 'u8[16384]{0}', space=vmem, size = 0x4000, scoped, tag = 'output window, operand 2, single buffered']
    %30 = vsyncpa [#allocation8], 0
    %31 = vsyncpa [#allocation11], 0
    %32 = vsyncpa [#allocation14], 0
    %33 = vsyncpa [#allocation17], 0
    %34 = vsyncpa [#allocation9], 0
    %s35 = scalar_lea.sflag [#allocation9], 1
    %36 = vsyncpa %s35, 0
    %37 = vsyncpa [#allocation21], 0
    loop: start=0, step=1, limit=4
    $region2: #{rnn_v3_forward.1} parent=1 // loop_pre_header
      _
    $region3: #{rnn_v3_forward.1} parent=1 // loop_header
      %s39 = sphi 0, %s43
      %p40 = scmp.ge.s32.totalorder %s39, 4
      %s47 = sphi 0, %s47
      %s49 = sphi 0, %s47
      %s50 = sphi 0, %s49
      %s64 = sphi 0, %s50
      %s68 = sphi 0, %s68
      %s70 = sphi 0, %s68
      %s71 = sphi 0, %s70
      %s85 = sphi 0, %s71
      %s89 = sphi 0, %s89
      %s91 = sphi 0, %s89
      %s92 = sphi 0, %s91
      %s106 = sphi 0, %s92
      %s110 = sphi 0, %s110
      %s112 = sphi 0, %s110
      %s113 = sphi 0, %s112
      %s127 = sphi 0, %s113
      %s131 = sphi 0, %s131
      %s133 = sphi 0, %s131
      %s134 = sphi 0, %s133
      %s148 = sphi 0, %s134
      %s152 = sphi 0, %s152
      %s154 = sphi 0, %s152
      %s155 = sphi 0, %s154
      %s169 = sphi 0, %s155
      %s173 = sphi 0, %s173
      %s175 = sphi 0, %s173
      %s176 = sphi 0, %s175
      %s190 = sphi 0, %s176
      %s194 = sphi 0, %s194
      %s196 = sphi 0, %s194
      %s197 = sphi 0, %s196
      %s211 = sphi 0, %s197
      %s215 = sphi 0, %s215
      %s217 = sphi 0, %s215
      %s218 = sphi 0, %s217
      %s232 = sphi 0, %s218
      %s236 = sphi 0, %s236
      %s238 = sphi 0, %s236
      %s239 = sphi 0, %s238
      %s253 = sphi 0, %s239
      %s257 = sphi 0, %s257
      %s259 = sphi 0, %s257
      %s260 = sphi 0, %s259
      %s274 = sphi 0, %s260
      %s278 = sphi 0, %s278
      %s280 = sphi 0, %s278
      %s281 = sphi 0, %s280
      %s295 = sphi 0, %s281
      %s301 = sphi 0, %s303
      %s304 = sphi 0, %s301
      %s305 = sphi 0, %s304
      %s321 = sphi 0, %s305
      %s327 = sphi 0, %s329
      %s330 = sphi 0, %s327
      %s331 = sphi 0, %s330
      %s347 = sphi 0, %s331
      %s353 = sphi 0, %s355
      %s356 = sphi 0, %s353
      %s357 = sphi 0, %s356
      %s373 = sphi 0, %s357
      %s377 = sphi 0, %s377
      %s379 = sphi 0, %s377
      %s380 = sphi 0, %s379
      %s394 = sphi 0, %s380
      %s398 = sphi 0, %s398
      %s400 = sphi 0, %s398
      %s401 = sphi 0, %s400
      %s415 = sphi 0, %s401
    $region4: #{rnn_v3_forward.1} parent=1 // loop_header_branch
      %42 = sbr.rel (%p40) target = $region8
    $region5: #{rnn_v3_forward.1} parent=1 // loop_body
      %s44 = ssub.s32 %s39, 1
      %s45 = ssub.s32 %s39, 2
      %s46 = sadd.s32 %s39, 1
      %s48 = sadd.s32 %s47, 1
      %p51 = scmp.eq.s32.totalorder %s39, 1
      %p52 = scmp.ne.s32.totalorder %s47, %s49
      %p53 = scmp.eq.s32.totalorder %s39, 0
      %p54 = por %p52, %p53
      %p55 = scmp.ne.s32.totalorder %s47, %s49
      %p56 = scmp.eq.s32.totalorder %s44, 1
      %p57 = por %p55, %p56
      %p58 = scmp.ne.s32.totalorder %s49, %s50
      %p59 = scmp.eq.s32.totalorder %s44, 0
      %p60 = por %p58, %p59
      %p61 = scmp.ne.s32.totalorder %s49, %s50
      %p62 = scmp.eq.s32.totalorder %s45, 1
      %p63 = por %p61, %p62
      %p65 = scmp.ne.s32.totalorder %s50, %s64
      %p66 = scmp.eq.s32.totalorder %s45, 0
      %p67 = por %p65, %p66
      %s69 = sadd.s32 %s68, 1
      %p72 = scmp.eq.s32.totalorder %s39, 1
      %p73 = scmp.ne.s32.totalorder %s68, %s70
      %p74 = scmp.eq.s32.totalorder %s39, 0
      %p75 = por %p73, %p74
      %p76 = scmp.ne.s32.totalorder %s68, %s70
      %p77 = scmp.eq.s32.totalorder %s44, 1
      %p78 = por %p76, %p77
      %p79 = scmp.ne.s32.totalorder %s70, %s71
      %p80 = scmp.eq.s32.totalorder %s44, 0
      %p81 = por %p79, %p80
      %p82 = scmp.ne.s32.totalorder %s70, %s71
      %p83 = scmp.eq.s32.totalorder %s45, 1
      %p84 = por %p82, %p83
      %p86 = scmp.ne.s32.totalorder %s71, %s85
      %p87 = scmp.eq.s32.totalorder %s45, 0
      %p88 = por %p86, %p87
      %s90 = sadd.s32 %s89, 1
      %p93 = scmp.eq.s32.totalorder %s39, 1
      %p94 = scmp.ne.s32.totalorder %s89, %s91
      %p95 = scmp.eq.s32.totalorder %s39, 0
      %p96 = por %p94, %p95
      %p97 = scmp.ne.s32.totalorder %s89, %s91
      %p98 = scmp.eq.s32.totalorder %s44, 1
      %p99 = por %p97, %p98
      %p100 = scmp.ne.s32.totalorder %s91, %s92
      %p101 = scmp.eq.s32.totalorder %s44, 0
      %p102 = por %p100, %p101
      %p103 = scmp.ne.s32.totalorder %s91, %s92
      %p104 = scmp.eq.s32.totalorder %s45, 1
      %p105 = por %p103, %p104
      %p107 = scmp.ne.s32.totalorder %s92, %s106
      %p108 = scmp.eq.s32.totalorder %s45, 0
      %p109 = por %p107, %p108
      %s111 = sadd.s32 %s110, 1
      %p114 = scmp.eq.s32.totalorder %s39, 1
      %p115 = scmp.ne.s32.totalorder %s110, %s112
      %p116 = scmp.eq.s32.totalorder %s39, 0
      %p117 = por %p115, %p116
      %p118 = scmp.ne.s32.totalorder %s110, %s112
      %p119 = scmp.eq.s32.totalorder %s44, 1
      %p120 = por %p118, %p119
      %p121 = scmp.ne.s32.totalorder %s112, %s113
      %p122 = scmp.eq.s32.totalorder %s44, 0
      %p123 = por %p121, %p122
      %p124 = scmp.ne.s32.totalorder %s112, %s113
      %p125 = scmp.eq.s32.totalorder %s45, 1
      %p126 = por %p124, %p125
      %p128 = scmp.ne.s32.totalorder %s113, %s127
      %p129 = scmp.eq.s32.totalorder %s45, 0
      %p130 = por %p128, %p129
      %s132 = sadd.s32 %s131, 1
      %p135 = scmp.eq.s32.totalorder %s39, 1
      %p136 = scmp.ne.s32.totalorder %s131, %s133
      %p137 = scmp.eq.s32.totalorder %s39, 0
      %p138 = por %p136, %p137
      %p139 = scmp.ne.s32.totalorder %s131, %s133
      %p140 = scmp.eq.s32.totalorder %s44, 1
      %p141 = por %p139, %p140
      %p142 = scmp.ne.s32.totalorder %s133, %s134
      %p143 = scmp.eq.s32.totalorder %s44, 0
      %p144 = por %p142, %p143
      %p145 = scmp.ne.s32.totalorder %s133, %s134
      %p146 = scmp.eq.s32.totalorder %s45, 1
      %p147 = por %p145, %p146
      %p149 = scmp.ne.s32.totalorder %s134, %s148
      %p150 = scmp.eq.s32.totalorder %s45, 0
      %p151 = por %p149, %p150
      %s153 = sadd.s32 %s152, 1
      %p156 = scmp.eq.s32.totalorder %s39, 1
      %p157 = scmp.ne.s32.totalorder %s152, %s154
      %p158 = scmp.eq.s32.totalorder %s39, 0
      %p159 = por %p157, %p158
      %p160 = scmp.ne.s32.totalorder %s152, %s154
      %p161 = scmp.eq.s32.totalorder %s44, 1
      %p162 = por %p160, %p161
      %p163 = scmp.ne.s32.totalorder %s154, %s155
      %p164 = scmp.eq.s32.totalorder %s44, 0
      %p165 = por %p163, %p164
      %p166 = scmp.ne.s32.totalorder %s154, %s155
      %p167 = scmp.eq.s32.totalorder %s45, 1
      %p168 = por %p166, %p167
      %p170 = scmp.ne.s32.totalorder %s155, %s169
      %p171 = scmp.eq.s32.totalorder %s45, 0
      %p172 = por %p170, %p171
      %s174 = sadd.s32 %s173, 1
      %p177 = scmp.eq.s32.totalorder %s39, 1
      %p178 = scmp.ne.s32.totalorder %s173, %s175
      %p179 = scmp.eq.s32.totalorder %s39, 0
      %p180 = por %p178, %p179
      %p181 = scmp.ne.s32.totalorder %s173, %s175
      %p182 = scmp.eq.s32.totalorder %s44, 1
      %p183 = por %p181, %p182
      %p184 = scmp.ne.s32.totalorder %s175, %s176
      %p185 = scmp.eq.s32.totalorder %s44, 0
      %p186 = por %p184, %p185
      %p187 = scmp.ne.s32.totalorder %s175, %s176
      %p188 = scmp.eq.s32.totalorder %s45, 1
      %p189 = por %p187, %p188
      %p191 = scmp.ne.s32.totalorder %s176, %s190
      %p192 = scmp.eq.s32.totalorder %s45, 0
      %p193 = por %p191, %p192
      %s195 = sadd.s32 %s194, 1
      %p198 = scmp.eq.s32.totalorder %s39, 1
      %p199 = scmp.ne.s32.totalorder %s194, %s196
      %p200 = scmp.eq.s32.totalorder %s39, 0
      %p201 = por %p199, %p200
      %p202 = scmp.ne.s32.totalorder %s194, %s196
      %p203 = scmp.eq.s32.totalorder %s44, 1
      %p204 = por %p202, %p203
      %p205 = scmp.ne.s32.totalorder %s196, %s197
      %p206 = scmp.eq.s32.totalorder %s44, 0
      %p207 = por %p205, %p206
      %p208 = scmp.ne.s32.totalorder %s196, %s197
      %p209 = scmp.eq.s32.totalorder %s45, 1
      %p210 = por %p208, %p209
      %p212 = scmp.ne.s32.totalorder %s197, %s211
      %p213 = scmp.eq.s32.totalorder %s45, 0
      %p214 = por %p212, %p213
      %s216 = sadd.s32 %s215, 1
      %p219 = scmp.eq.s32.totalorder %s39, 1
      %p220 = scmp.ne.s32.totalorder %s215, %s217
      %p221 = scmp.eq.s32.totalorder %s39, 0
      %p222 = por %p220, %p221
      %p223 = scmp.ne.s32.totalorder %s215, %s217
      %p224 = scmp.eq.s32.totalorder %s44, 1
      %p225 = por %p223, %p224
      %p226 = scmp.ne.s32.totalorder %s217, %s218
      %p227 = scmp.eq.s32.totalorder %s44, 0
      %p228 = por %p226, %p227
      %p229 = scmp.ne.s32.totalorder %s217, %s218
      %p230 = scmp.eq.s32.totalorder %s45, 1
      %p231 = por %p229, %p230
      %p233 = scmp.ne.s32.totalorder %s218, %s232
      %p234 = scmp.eq.s32.totalorder %s45, 0
      %p235 = por %p233, %p234
      %s237 = sadd.s32 %s236, 1
      %p240 = scmp.eq.s32.totalorder %s39, 1
      %p241 = scmp.ne.s32.totalorder %s236, %s238
      %p242 = scmp.eq.s32.totalorder %s39, 0
      %p243 = por %p241, %p242
      %p244 = scmp.ne.s32.totalorder %s236, %s238
      %p245 = scmp.eq.s32.totalorder %s44, 1
      %p246 = por %p244, %p245
      %p247 = scmp.ne.s32.totalorder %s238, %s239
      %p248 = scmp.eq.s32.totalorder %s44, 0
      %p249 = por %p247, %p248
      %p250 = scmp.ne.s32.totalorder %s238, %s239
      %p251 = scmp.eq.s32.totalorder %s45, 1
      %p252 = por %p250, %p251
      %p254 = scmp.ne.s32.totalorder %s239, %s253
      %p255 = scmp.eq.s32.totalorder %s45, 0
      %p256 = por %p254, %p255
      %s258 = sadd.s32 %s257, 1
      %p261 = scmp.eq.s32.totalorder %s39, 1
      %p262 = scmp.ne.s32.totalorder %s257, %s259
      %p263 = scmp.eq.s32.totalorder %s39, 0
      %p264 = por %p262, %p263
      %p265 = scmp.ne.s32.totalorder %s257, %s259
      %p266 = scmp.eq.s32.totalorder %s44, 1
      %p267 = por %p265, %p266
      %p268 = scmp.ne.s32.totalorder %s259, %s260
      %p269 = scmp.eq.s32.totalorder %s44, 0
      %p270 = por %p268, %p269
      %p271 = scmp.ne.s32.totalorder %s259, %s260
      %p272 = scmp.eq.s32.totalorder %s45, 1
      %p273 = por %p271, %p272
      %p275 = scmp.ne.s32.totalorder %s260, %s274
      %p276 = scmp.eq.s32.totalorder %s45, 0
      %p277 = por %p275, %p276
      %s279 = sadd.s32 %s278, 1
      %p282 = scmp.eq.s32.totalorder %s39, 1
      %p283 = scmp.ne.s32.totalorder %s278, %s280
      %p284 = scmp.eq.s32.totalorder %s39, 0
      %p285 = por %p283, %p284
      %p286 = scmp.ne.s32.totalorder %s278, %s280
      %p287 = scmp.eq.s32.totalorder %s44, 1
      %p288 = por %p286, %p287
      %p289 = scmp.ne.s32.totalorder %s280, %s281
      %p290 = scmp.eq.s32.totalorder %s44, 0
      %p291 = por %p289, %p290
      %p292 = scmp.ne.s32.totalorder %s280, %s281
      %p293 = scmp.eq.s32.totalorder %s45, 1
      %p294 = por %p292, %p293
      %p296 = scmp.ne.s32.totalorder %s281, %s295
      %p297 = scmp.eq.s32.totalorder %s45, 0
      %p298 = por %p296, %p297
      %s299 = ssub.s32 %s39, %s46
      %p300 = scmp.eq.s32.totalorder %s299, 0
      %s302 = sadd.s32 %s301, 1
      %s303 = scalar_select %p300, %s301, %s302
      %p306 = pneg %p300
      %p307 = scmp.eq.s32.totalorder %s39, 1
      %p308 = por %p306, %p307
      %p309 = scmp.ne.s32.totalorder %s301, %s304
      %p310 = scmp.eq.s32.totalorder %s39, 0
      %p311 = por %p309, %p310
      %p312 = scmp.ne.s32.totalorder %s301, %s304
      %p313 = scmp.eq.s32.totalorder %s44, 1
      %p314 = por %p312, %p313
      %p315 = scmp.ne.s32.totalorder %s304, %s305
      %p316 = scmp.eq.s32.totalorder %s44, 0
      %p317 = por %p315, %p316
      %p318 = scmp.ne.s32.totalorder %s304, %s305
      %p319 = scmp.eq.s32.totalorder %s45, 1
      %p320 = por %p318, %p319
      %p322 = scmp.ne.s32.totalorder %s305, %s321
      %p323 = scmp.eq.s32.totalorder %s45, 0
      %p324 = por %p322, %p323
      %s325 = ssub.s32 %s39, %s46
      %p326 = scmp.eq.s32.totalorder %s325, 0
      %s328 = sadd.s32 %s327, 1
      %s329 = scalar_select %p326, %s327, %s328
      %p332 = pneg %p326
      %p333 = scmp.eq.s32.totalorder %s39, 1
      %p334 = por %p332, %p333
      %p335 = scmp.ne.s32.totalorder %s327, %s330
      %p336 = scmp.eq.s32.totalorder %s39, 0
      %p337 = por %p335, %p336
      %p338 = scmp.ne.s32.totalorder %s327, %s330
      %p339 = scmp.eq.s32.totalorder %s44, 1
      %p340 = por %p338, %p339
      %p341 = scmp.ne.s32.totalorder %s330, %s331
      %p342 = scmp.eq.s32.totalorder %s44, 0
      %p343 = por %p341, %p342
      %p344 = scmp.ne.s32.totalorder %s330, %s331
      %p345 = scmp.eq.s32.totalorder %s45, 1
      %p346 = por %p344, %p345
      %p348 = scmp.ne.s32.totalorder %s331, %s347
      %p349 = scmp.eq.s32.totalorder %s45, 0
      %p350 = por %p348, %p349
      %s351 = ssub.s32 %s39, %s46
      %p352 = scmp.eq.s32.totalorder %s351, 0
      %s354 = sadd.s32 %s353, 1
      %s355 = scalar_select %p352, %s353, %s354
      %p358 = pneg %p352
      %p359 = scmp.eq.s32.totalorder %s39, 1
      %p360 = por %p358, %p359
      %p361 = scmp.ne.s32.totalorder %s353, %s356
      %p362 = scmp.eq.s32.totalorder %s39, 0
      %p363 = por %p361, %p362
      %p364 = scmp.ne.s32.totalorder %s353, %s356
      %p365 = scmp.eq.s32.totalorder %s44, 1
      %p366 = por %p364, %p365
      %p367 = scmp.ne.s32.totalorder %s356, %s357
      %p368 = scmp.eq.s32.totalorder %s44, 0
      %p369 = por %p367, %p368
      %p370 = scmp.ne.s32.totalorder %s356, %s357
      %p371 = scmp.eq.s32.totalorder %s45, 1
      %p372 = por %p370, %p371
      %p374 = scmp.ne.s32.totalorder %s357, %s373
      %p375 = scmp.eq.s32.totalorder %s45, 0
      %p376 = por %p374, %p375
      %s378 = sadd.s32 %s377, 1
      %p381 = scmp.eq.s32.totalorder %s39, 1
      %p382 = scmp.ne.s32.totalorder %s377, %s379
      %p383 = scmp.eq.s32.totalorder %s39, 0
      %p384 = por %p382, %p383
      %p385 = scmp.ne.s32.totalorder %s377, %s379
      %p386 = scmp.eq.s32.totalorder %s44, 1
      %p387 = por %p385, %p386
      %p388 = scmp.ne.s32.totalorder %s379, %s380
      %p389 = scmp.eq.s32.totalorder %s44, 0
      %p390 = por %p388, %p389
      %p391 = scmp.ne.s32.totalorder %s379, %s380
      %p392 = scmp.eq.s32.totalorder %s45, 1
      %p393 = por %p391, %p392
      %p395 = scmp.ne.s32.totalorder %s380, %s394
      %p396 = scmp.eq.s32.totalorder %s45, 0
      %p397 = por %p395, %p396
      %s399 = sadd.s32 %s398, 1
      %p402 = scmp.eq.s32.totalorder %s39, 1
      %p403 = scmp.ne.s32.totalorder %s398, %s400
      %p404 = scmp.eq.s32.totalorder %s39, 0
      %p405 = por %p403, %p404
      %p406 = scmp.ne.s32.totalorder %s398, %s400
      %p407 = scmp.eq.s32.totalorder %s44, 1
      %p408 = por %p406, %p407
      %p409 = scmp.ne.s32.totalorder %s400, %s401
      %p410 = scmp.eq.s32.totalorder %s44, 0
      %p411 = por %p409, %p410
      %p412 = scmp.ne.s32.totalorder %s400, %s401
      %p413 = scmp.eq.s32.totalorder %s45, 1
      %p414 = por %p412, %p413
      %p416 = scmp.ne.s32.totalorder %s401, %s415
      %p417 = scmp.eq.s32.totalorder %s45, 0
      %p418 = por %p416, %p417
      %p419 = scmp.le.s32.totalorder 1, %s39
      %p420 = scmp.lt.s32.totalorder %s39, 3
      %p421 = pnand %p419, %p420
      %p422 = pneg %p421
      // Predicated region
      $region9: #{rnn_v3_forward.1} parent=5 // pred_check
        _
      $region10: #{rnn_v3_forward.1} parent=5 // pred_check_branch
        %424 = sbr.rel (%p421) target = $region12
      $region11: #{rnn_v3_forward.1} parent=5 // pred_region
        %s425 = ssub.s32 %s39, 1
        // Predicated region
        $region13: #{rnn_v3_forward.1} parent=11 // pred_check
          %p426 = pneg %p60
        $region14: #{rnn_v3_forward.1} parent=11 // pred_check_branch
          %428 = sbr.rel (%p426) target = $region16
        $region15: #{rnn_v3_forward.1} parent=11 // pred_region
          %s430 = ssub.s32 512, 512
          %431 = vsyncadd [#allocation8], %s430
          %s432 = sshll.u32 [#allocation7], 4
          %s433 = int_to_ptr.vmem [resolvable:$true] %s432
          %438 = dma.hbm_to_vmem [thread:$0]  %s1, 512, %s433, [#allocation8], 128, 128, 8
        $region16: #{rnn_v3_forward.1} parent=11 // pred_fallthru
          _
        // Predicated region
        $region17: #{rnn_v3_forward.1} parent=11 // pred_check
          %p439 = pneg %p81
        $region18: #{rnn_v3_forward.1} parent=11 // pred_check_branch
          %441 = sbr.rel (%p439) target = $region20
        $region19: #{rnn_v3_forward.1} parent=11 // pred_region
          %s443 = ssub.s32 512, 512
          %444 = vsyncadd [#allocation11], %s443
          %s445 = sshll.u32 [#allocation10], 4
          %s446 = int_to_ptr.vmem [resolvable:$true] %s445
          %451 = dma.hbm_to_vmem [thread:$0]  %s2, 512, %s446, [#allocation11], 128, 128, 8
        $region20: #{rnn_v3_forward.1} parent=11 // pred_fallthru
          _
        // Predicated region
        $region21: #{rnn_v3_forward.1} parent=11 // pred_check
          %p452 = pneg %p102
        $region22: #{rnn_v3_forward.1} parent=11 // pred_check_branch
          %454 = sbr.rel (%p452) target = $region24
        $region23: #{rnn_v3_forward.1} parent=11 // pred_region
          %s456 = ssub.s32 8192, 8192
          %457 = vsyncadd [#allocation11], %s456
          %s458 = sshll.u32 [#allocation12], 4
          %s459 = int_to_ptr.vmem [resolvable:$true] %s458
          %464 = dma.hbm_to_vmem [thread:$0]  %s4, 8192, %s459, [#allocation11], 256, 256, 16
        $region24: #{rnn_v3_forward.1} parent=11 // pred_fallthru
          _
        // Predicated region
        $region25: #{rnn_v3_forward.1} parent=11 // pred_check
          %p465 = pneg %p123
        $region26: #{rnn_v3_forward.1} parent=11 // pred_check_branch
          %467 = sbr.rel (%p465) target = $region28
        $region27: #{rnn_v3_forward.1} parent=11 // pred_region
          %s469 = ssub.s32 8192, 8192
          %470 = vsyncadd [#allocation14], %s469
          %s471 = sshll.u32 [#allocation13], 4
          %s472 = int_to_ptr.vmem [resolvable:$true] %s471
          %477 = dma.hbm_to_vmem [thread:$0]  %s5, 8192, %s472, [#allocation14], 256, 256, 16
        $region28: #{rnn_v3_forward.1} parent=11 // pred_fallthru
          _
        // Predicated region
        $region29: #{rnn_v3_forward.1} parent=11 // pred_check
          %p478 = pneg %p144
        $region30: #{rnn_v3_forward.1} parent=11 // pred_check_branch
          %480 = sbr.rel (%p478) target = $region32
        $region31: #{rnn_v3_forward.1} parent=11 // pred_region
          %s482 = ssub.s32 12288, 12288
          %483 = vsyncadd [#allocation14], %s482
          %s484 = sshll.u32 [#allocation15], 4
          %s485 = int_to_ptr.vmem [resolvable:$true] %s484
          %490 = dma.hbm_to_vmem [thread:$0]  %s6, 12288, %s485, [#allocation14], 256, 256, 16
        $region32: #{rnn_v3_forward.1} parent=11 // pred_fallthru
          _
        // Predicated region
        $region33: #{rnn_v3_forward.1} parent=11 // pred_check
          %p491 = pneg %p165
        $region34: #{rnn_v3_forward.1} parent=11 // pred_check_branch
          %493 = sbr.rel (%p491) target = $region36
        $region35: #{rnn_v3_forward.1} parent=11 // pred_region
          %s495 = ssub.s32 12288, 12288
          %496 = vsyncadd [#allocation17], %s495
          %s497 = sshll.u32 [#allocation16], 4
          %s498 = int_to_ptr.vmem [resolvable:$true] %s497
          %503 = dma.hbm_to_vmem [thread:$0]  %s7, 12288, %s498, [#allocation17], 256, 256, 16
        $region36: #{rnn_v3_forward.1} parent=11 // pred_fallthru
          _
        // Predicated region
        $region37: #{rnn_v3_forward.1} parent=11 // pred_check
          %p504 = pneg %p186
        $region38: #{rnn_v3_forward.1} parent=11 // pred_check_branch
          %506 = sbr.rel (%p504) target = $region40
        $region39: #{rnn_v3_forward.1} parent=11 // pred_region
          _
        $region40: #{rnn_v3_forward.1} parent=11 // pred_fallthru
          _
        // Predicated region
        $region41: #{rnn_v3_forward.1} parent=11 // pred_check
          %p507 = pneg %p207
        $region42: #{rnn_v3_forward.1} parent=11 // pred_check_branch
          %509 = sbr.rel (%p507) target = $region44
        $region43: #{rnn_v3_forward.1} parent=11 // pred_region
          _
        $region44: #{rnn_v3_forward.1} parent=11 // pred_fallthru
          _
        // Predicated region
        $region45: #{rnn_v3_forward.1} parent=11 // pred_check
          %p510 = pneg %p228
        $region46: #{rnn_v3_forward.1} parent=11 // pred_check_branch
          %512 = sbr.rel (%p510) target = $region48
        $region47: #{rnn_v3_forward.1} parent=11 // pred_region
          _
        $region48: #{rnn_v3_forward.1} parent=11 // pred_fallthru
          _
        // Predicated region
        $region49: #{rnn_v3_forward.1} parent=11 // pred_check
          %p513 = pneg %p249
        $region50: #{rnn_v3_forward.1} parent=11 // pred_check_branch
          %515 = sbr.rel (%p513) target = $region52
        $region51: #{rnn_v3_forward.1} parent=11 // pred_region
          _
        $region52: #{rnn_v3_forward.1} parent=11 // pred_fallthru
          _
        // Predicated region
        $region53: #{rnn_v3_forward.1} parent=11 // pred_check
          %p516 = pneg %p270
        $region54: #{rnn_v3_forward.1} parent=11 // pred_check_branch
          %518 = sbr.rel (%p516) target = $region56
        $region55: #{rnn_v3_forward.1} parent=11 // pred_region
          _
        $region56: #{rnn_v3_forward.1} parent=11 // pred_fallthru
          _
        // Predicated region
        $region57: #{rnn_v3_forward.1} parent=11 // pred_check
          %p519 = pneg %p291
        $region58: #{rnn_v3_forward.1} parent=11 // pred_check_branch
          %521 = sbr.rel (%p519) target = $region60
        $region59: #{rnn_v3_forward.1} parent=11 // pred_region
          _
        $region60: #{rnn_v3_forward.1} parent=11 // pred_fallthru
          _
      $region12: #{rnn_v3_forward.1} parent=5 // pred_fallthru
        _
      %p522 = scmp.lt.s32.totalorder %s39, 2
      // Predicated region
      $region61: #{rnn_v3_forward.1} parent=5 // pred_check
        %p523 = pneg %p522
      $region62: #{rnn_v3_forward.1} parent=5 // pred_check_branch
        %525 = sbr.rel (%p523) target = $region64
      $region63: #{rnn_v3_forward.1} parent=5 // pred_region
        // Predicated region
        $region65: #{rnn_v3_forward.1} parent=63 // pred_check
          %p526 = pneg %p311
        $region66: #{rnn_v3_forward.1} parent=63 // pred_check_branch
          %528 = sbr.rel (%p526) target = $region68
        $region67: #{rnn_v3_forward.1} parent=63 // pred_region
          %s529 = sand.u32 %s39, 1
          %s530 = scalar_lea.sflag [#allocation8], %s529
          %s531 = sand.u32 %s301, 1
          %s532 = smul.addr %s531, 1024
          %s533 = scalar_lea.vmem [#allocation18], %s532
          %s534 = smul.u32 8, %s39
          %s536 = ssub.s32 16384, 16384
          %537 = vsyncadd %s530, %s536
          %s538 = smul.addr %s534, 64
          %s539 = scalar_lea.hbm %s14, %s538
          %s540 = sshll.u32 %s533, 4
          %s541 = int_to_ptr.vmem [resolvable:$true] %s540
          %546 = dma.hbm_to_vmem [thread:$0]  %s539, 16384, %s541, %s530, 1024, 512, 32
        $region68: #{rnn_v3_forward.1} parent=63 // pred_fallthru
          _
        // Predicated region
        $region69: #{rnn_v3_forward.1} parent=63 // pred_check
          %p547 = pneg %p337
        $region70: #{rnn_v3_forward.1} parent=63 // pred_check_branch
          %549 = sbr.rel (%p547) target = $region72
        $region71: #{rnn_v3_forward.1} parent=63 // pred_region
          %s550 = smul.u32 8, %s39
          %p551 = scmp.lt.s32.totalorder %s550, 15
          %s552 = scalar_select %p551, %s550, 15
          %s553 = scalar_lea.vmem %s15, %s552
          %s554 = smul.u32 8, %s39
        $region72: #{rnn_v3_forward.1} parent=63 // pred_fallthru
          _
      $region64: #{rnn_v3_forward.1} parent=5 // pred_fallthru
        _
      %p555 = scmp.le.s32.totalorder 1, %s39
      %p556 = scmp.lt.s32.totalorder %s39, 3
      %p557 = pnand %p555, %p556
      %p558 = pneg %p557
      // Predicated region
      $region73: #{rnn_v3_forward.1} parent=5 // pred_check
        _
      $region74: #{rnn_v3_forward.1} parent=5 // pred_check_branch
        %560 = sbr.rel (%p557) target = $region76
      $region75: #{rnn_v3_forward.1} parent=5 // pred_region
        %s561 = ssub.s32 %s39, 1
        // Predicated region
        $region77: #{rnn_v3_forward.1} parent=75 // pred_check
          %p562 = pneg %p60
        $region78: #{rnn_v3_forward.1} parent=75 // pred_check_branch
          %564 = sbr.rel (%p562) target = $region80
        $region79: #{rnn_v3_forward.1} parent=75 // pred_region
          %565 = dma.done [#allocation8], 512
        $region80: #{rnn_v3_forward.1} parent=75 // pred_fallthru
          _
        // Predicated region
        $region81: #{rnn_v3_forward.1} parent=75 // pred_check
          %p566 = pneg %p81
        $region82: #{rnn_v3_forward.1} parent=75 // pred_check_branch
          %568 = sbr.rel (%p566) target = $region84
        $region83: #{rnn_v3_forward.1} parent=75 // pred_region
          %569 = dma.done [#allocation11], 512
        $region84: #{rnn_v3_forward.1} parent=75 // pred_fallthru
          _
        // Predicated region
        $region85: #{rnn_v3_forward.1} parent=75 // pred_check
          %p570 = pneg %p102
        $region86: #{rnn_v3_forward.1} parent=75 // pred_check_branch
          %572 = sbr.rel (%p570) target = $region88
        $region87: #{rnn_v3_forward.1} parent=75 // pred_region
          %573 = dma.done [#allocation11], 8192
        $region88: #{rnn_v3_forward.1} parent=75 // pred_fallthru
          _
        // Predicated region
        $region89: #{rnn_v3_forward.1} parent=75 // pred_check
          %p574 = pneg %p123
        $region90: #{rnn_v3_forward.1} parent=75 // pred_check_branch
          %576 = sbr.rel (%p574) target = $region92
        $region91: #{rnn_v3_forward.1} parent=75 // pred_region
          %577 = dma.done [#allocation14], 8192
        $region92: #{rnn_v3_forward.1} parent=75 // pred_fallthru
          _
        // Predicated region
        $region93: #{rnn_v3_forward.1} parent=75 // pred_check
          %p578 = pneg %p144
        $region94: #{rnn_v3_forward.1} parent=75 // pred_check_branch
          %580 = sbr.rel (%p578) target = $region96
        $region95: #{rnn_v3_forward.1} parent=75 // pred_region
          %581 = dma.done [#allocation14], 12288
        $region96: #{rnn_v3_forward.1} parent=75 // pred_fallthru
          _
        // Predicated region
        $region97: #{rnn_v3_forward.1} parent=75 // pred_check
          %p582 = pneg %p165
        $region98: #{rnn_v3_forward.1} parent=75 // pred_check_branch
          %584 = sbr.rel (%p582) target = $region100
        $region99: #{rnn_v3_forward.1} parent=75 // pred_region
          %585 = dma.done [#allocation17], 12288
        $region100: #{rnn_v3_forward.1} parent=75 // pred_fallthru
          _
        %s586 = sand.u32 %s44, 1
        %s587 = scalar_lea.sflag [#allocation8], %s586
        %s588 = sand.u32 %s304, 1
        %s589 = smul.addr %s588, 1024
        %s590 = scalar_lea.vmem [#allocation18], %s589
        // Predicated region
        $region101: #{rnn_v3_forward.1} parent=75 // pred_check
          %p591 = pneg %p317
        $region102: #{rnn_v3_forward.1} parent=75 // pred_check_branch
          %593 = sbr.rel (%p591) target = $region104
        $region103: #{rnn_v3_forward.1} parent=75 // pred_region
          %594 = dma.done %s587, 16384
        $region104: #{rnn_v3_forward.1} parent=75 // pred_fallthru
          _
        %p595 = pneg %p60
        %p596 = pneg %p57
        %p597 = pneg %p81
        %p598 = pneg %p78
        %p599 = pneg %p102
        %p600 = pneg %p99
        %p601 = pneg %p123
        %p602 = pneg %p120
        %p603 = pneg %p144
        %p604 = pneg %p141
        %p605 = pneg %p165
        %p606 = pneg %p162
        %p607 = pneg %p186
        %p608 = pneg %p183
        %p609 = pneg %p207
        %p610 = pneg %p204
        %p611 = pneg %p228
        %p612 = pneg %p225
        %p613 = pneg %p249
        %p614 = pneg %p246
        %p615 = pneg %p270
        %p616 = pneg %p267
        %p617 = pneg %p291
        %p618 = pneg %p288
        %s619 = sand.u32 %s44, 1
        %s620 = scalar_lea.sflag [#allocation8], %s619
        %s621 = sand.u32 %s304, 1
        %s622 = smul.addr %s621, 1024
        %s623 = scalar_lea.vmem [#allocation18], %s622
        %p624 = pneg %p317
        %p625 = pneg %p314
        %s626 = smul.u32 8, %s44
        %p627 = scmp.lt.s32.totalorder %s626, 15
        %s628 = scalar_select %p627, %s626, 15
        %s629 = scalar_lea.vmem %s15, %s628
        %p630 = pneg %p343
        %p631 = pneg %p340
        %p632 = pneg %p369
        %p633 = pneg %p366
        %s634 = sand.u32 %s356, 1
        %s635 = scalar_lea.sflag [#allocation9], %s634
        %s636 = sand.u32 %s356, 1
        %s637 = smul.addr %s636, 64
        %s638 = scalar_lea.vmem [#allocation19], %s637
        %p639 = pneg %p390
        %p640 = pneg %p387
        %p641 = pneg %p411
        %p642 = pneg %p408
        %s643 = smul.u32 8, %s44
        %s644 = smul.u32 8, %s44
        %p645 = scmp.lt.s32.totalorder %s644, 15
        %s646 = scalar_select %p645, %s644, 15
        %s647 = scalar_lea.vmem %s15, %s646
        %s648 = smul.u32 8, %s44
        %s649 = smul.u32 8, %s44
        %p651 = scmp.eq.s32.totalorder %s44, 0
        // Predicated region
        $region105: #{rnn_v3_forward.1} parent=75 // pred_check
          %p652 = pneg %p651
        $region106: #{rnn_v3_forward.1} parent=75 // pred_check_branch
          %654 = sbr.rel (%p652) target = $region108
        $region107: #{rnn_v3_forward.1} parent=75 // pred_region
          %s655 = sld [smem:[#allocation6]]
          %s656 = smul.addr %s655, 16
          %s657 = scalar_lea.hbm %s3, %s656
          // Predicated region
          $region109: #{rnn_v3_forward.1} parent=107 // pred_check
            _
          $region110: #{rnn_v3_forward.1} parent=107 // pred_check_branch
            %659 = sbr.rel target = $region112
          $region111: #{rnn_v3_forward.1} parent=107 // pred_region
            %660 = sst [smem:[#allocation25]] [#allocation24]
            %661 = sst [smem:[#allocation26]] [#allocation23]
          $region112: #{rnn_v3_forward.1} parent=107 // pred_fallthru
            _
          %663 = shalt.err (0)
          %s665 = sshll.u32 [#allocation2], 4
          %s666 = int_to_ptr.vmem [resolvable:$true] %s665
          %668 = dma.hbm_to_vmem [thread:$0]  %s657, 16, %s666, [#allocation4]
          %s669 = sld [smem:[#allocation6 + $0x1]]
          %s670 = smul.addr %s669, 16
          %s671 = scalar_lea.hbm %s3, %s670
          %s672 = scalar_lea.vmem [#allocation2], 1
          %s673 = scalar_lea.sflag [#allocation4], 1
          // Predicated region
          $region113: #{rnn_v3_forward.1} parent=107 // pred_check
            _
          $region114: #{rnn_v3_forward.1} parent=107 // pred_check_branch
            %675 = sbr.rel target = $region116
          $region115: #{rnn_v3_forward.1} parent=107 // pred_region
            %676 = sst [smem:[#allocation25]] [#allocation28]
            %677 = sst [smem:[#allocation26]] [#allocation27]
          $region116: #{rnn_v3_forward.1} parent=107 // pred_fallthru
            _
          %679 = shalt.err (0)
          %s681 = sshll.u32 %s672, 4
          %s682 = int_to_ptr.vmem [resolvable:$true] %s681
          %684 = dma.hbm_to_vmem [thread:$0]  %s671, 16, %s682, %s673
          %s685 = sld [smem:[#allocation6 + $0x2]]
          %s686 = smul.addr %s685, 16
          %s687 = scalar_lea.hbm %s3, %s686
          %s688 = scalar_lea.vmem [#allocation2], 2
          %s689 = scalar_lea.sflag [#allocation4], 2
          // Predicated region
          $region117: #{rnn_v3_forward.1} parent=107 // pred_check
            _
          $region118: #{rnn_v3_forward.1} parent=107 // pred_check_branch
            %691 = sbr.rel target = $region120
          $region119: #{rnn_v3_forward.1} parent=107 // pred_region
            %692 = sst [smem:[#allocation25]] [#allocation30]
            %693 = sst [smem:[#allocation26]] [#allocation29]
          $region120: #{rnn_v3_forward.1} parent=107 // pred_fallthru
            _
          %695 = shalt.err (0)
          %s697 = sshll.u32 %s688, 4
          %s698 = int_to_ptr.vmem [resolvable:$true] %s697
          %700 = dma.hbm_to_vmem [thread:$0]  %s687, 16, %s698, %s689
          %s701 = sld [smem:[#allocation6 + $0x3]]
          %s702 = smul.addr %s701, 16
          %s703 = scalar_lea.hbm %s3, %s702
          %s704 = scalar_lea.vmem [#allocation2], 3
          %s705 = scalar_lea.sflag [#allocation4], 3
          // Predicated region
          $region121: #{rnn_v3_forward.1} parent=107 // pred_check
            _
          $region122: #{rnn_v3_forward.1} parent=107 // pred_check_branch
            %707 = sbr.rel target = $region124
          $region123: #{rnn_v3_forward.1} parent=107 // pred_region
            %708 = sst [smem:[#allocation25]] [#allocation32]
            %709 = sst [smem:[#allocation26]] [#allocation31]
          $region124: #{rnn_v3_forward.1} parent=107 // pred_fallthru
            _
          %711 = shalt.err (0)
          %s713 = sshll.u32 %s704, 4
          %s714 = int_to_ptr.vmem [resolvable:$true] %s713
          %716 = dma.hbm_to_vmem [thread:$0]  %s703, 16, %s714, %s705
          %s717 = sld [smem:[#allocation6 + $0x4]]
          %s718 = smul.addr %s717, 16
          %s719 = scalar_lea.hbm %s3, %s718
          %s720 = scalar_lea.vmem [#allocation2], 4
          %s721 = scalar_lea.sflag [#allocation4], 4
          // Predicated region
          $region125: #{rnn_v3_forward.1} parent=107 // pred_check
            _
          $region126: #{rnn_v3_forward.1} parent=107 // pred_check_branch
            %723 = sbr.rel target = $region128
          $region127: #{rnn_v3_forward.1} parent=107 // pred_region
            %724 = sst [smem:[#allocation25]] [#allocation34]
            %725 = sst [smem:[#allocation26]] [#allocation33]
          $region128: #{rnn_v3_forward.1} parent=107 // pred_fallthru
            _
          %727 = shalt.err (0)
          %s729 = sshll.u32 %s720, 4
          %s730 = int_to_ptr.vmem [resolvable:$true] %s729
          %732 = dma.hbm_to_vmem [thread:$0]  %s719, 16, %s730, %s721
          %s733 = sld [smem:[#allocation6 + $0x5]]
          %s734 = smul.addr %s733, 16
          %s735 = scalar_lea.hbm %s3, %s734
          %s736 = scalar_lea.vmem [#allocation2], 5
          %s737 = scalar_lea.sflag [#allocation4], 5
          // Predicated region
          $region129: #{rnn_v3_forward.1} parent=107 // pred_check
            _
          $region130: #{rnn_v3_forward.1} parent=107 // pred_check_branch
            %739 = sbr.rel target = $region132
          $region131: #{rnn_v3_forward.1} parent=107 // pred_region
            %740 = sst [smem:[#allocation25]] [#allocation36]
            %741 = sst [smem:[#allocation26]] [#allocation35]
          $region132: #{rnn_v3_forward.1} parent=107 // pred_fallthru
            _
          %743 = shalt.err (0)
          %s745 = sshll.u32 %s736, 4
          %s746 = int_to_ptr.vmem [resolvable:$true] %s745
          %748 = dma.hbm_to_vmem [thread:$0]  %s735, 16, %s746, %s737
          %s749 = sld [smem:[#allocation6 + $0x6]]
          %s750 = smul.addr %s749, 16
          %s751 = scalar_lea.hbm %s3, %s750
          %s752 = scalar_lea.vmem [#allocation2], 6
          %s753 = scalar_lea.sflag [#allocation4], 6
          // Predicated region
          $region133: #{rnn_v3_forward.1} parent=107 // pred_check
            _
          $region134: #{rnn_v3_forward.1} parent=107 // pred_check_branch
            %755 = sbr.rel target = $region136
          $region135: #{rnn_v3_forward.1} parent=107 // pred_region
            %756 = sst [smem:[#allocation25]] [#allocation38]
            %757 = sst [smem:[#allocation26]] [#allocation37]
          $region136: #{rnn_v3_forward.1} parent=107 // pred_fallthru
            _
          %759 = shalt.err (0)
          %s761 = sshll.u32 %s752, 4
          %s762 = int_to_ptr.vmem [resolvable:$true] %s761
          %764 = dma.hbm_to_vmem [thread:$0]  %s751, 16, %s762, %s753
          %s765 = sld [smem:[#allocation6 + $0x7]]
          %s766 = smul.addr %s765, 16
          %s767 = scalar_lea.hbm %s3, %s766
          %s768 = scalar_lea.vmem [#allocation2], 7
          %s769 = scalar_lea.sflag [#allocation4], 7
          // Predicated region
          $region137: #{rnn_v3_forward.1} parent=107 // pred_check
            _
          $region138: #{rnn_v3_forward.1} parent=107 // pred_check_branch
            %771 = sbr.rel target = $region140
          $region139: #{rnn_v3_forward.1} parent=107 // pred_region
            %772 = sst [smem:[#allocation25]] [#allocation40]
            %773 = sst [smem:[#allocation26]] [#allocation39]
          $region140: #{rnn_v3_forward.1} parent=107 // pred_fallthru
            _
          %775 = shalt.err (0)
          %s777 = sshll.u32 %s768, 4
          %s778 = int_to_ptr.vmem [resolvable:$true] %s777
          %780 = dma.hbm_to_vmem [thread:$0]  %s767, 16, %s778, %s769
          %s781 = sld [smem:[#allocation6]]
          %s782 = smul.u32 1, 1
          %s783 = sshll.u32 %s782, 4
          %784 = dma.done [#allocation4], %s783
          %s785 = sld [smem:[#allocation6 + $0x1]]
          %s786 = sshll.u32 %s782, 4
          %787 = dma.done %s673, %s786
          %s788 = sld [smem:[#allocation6 + $0x2]]
          %s789 = sshll.u32 %s782, 4
          %790 = dma.done %s689, %s789
          %s791 = sld [smem:[#allocation6 + $0x3]]
          %s792 = sshll.u32 %s782, 4
          %793 = dma.done %s705, %s792
          %s794 = sld [smem:[#allocation6 + $0x4]]
          %s795 = sshll.u32 %s782, 4
          %796 = dma.done %s721, %s795
          %s797 = sld [smem:[#allocation6 + $0x5]]
          %s798 = sshll.u32 %s782, 4
          %799 = dma.done %s737, %s798
          %s800 = sld [smem:[#allocation6 + $0x6]]
          %s801 = sshll.u32 %s782, 4
          %802 = dma.done %s753, %s801
          %s803 = sld [smem:[#allocation6 + $0x7]]
          %s804 = sshll.u32 %s782, 4
          %805 = dma.done %s769, %s804
          %v806 = vld [vmem:[#allocation2] sm:$0xff]
          %v807 = vld [vmem:[#allocation7] sm:$0xff]
          %v808 = vld [vmem:[#allocation10] sm:$0xff]
          %v809 = vld [vmem:[#allocation12] sm:$0xff]
          %v810 = vld [vmem:[#allocation12 + $0x8] sm:$0xff]
          %v811 = vld [vmem:[#allocation12 + $0x10] sm:$0xff]
          %v812 = vld [vmem:[#allocation12 + $0x18] sm:$0xff]
          %v813 = vld [vmem:[#allocation12 + $0x20] sm:$0xff]
          %v814 = vld [vmem:[#allocation12 + $0x28] sm:$0xff]
          %v815 = vld [vmem:[#allocation12 + $0x30] sm:$0xff]
          %v816 = vld [vmem:[#allocation12 + $0x38] sm:$0xff]
          %v817 = vld [vmem:[#allocation12 + $0x40] sm:$0xff]
          %v818 = vld [vmem:[#allocation12 + $0x48] sm:$0xff]
          %v819 = vld [vmem:[#allocation12 + $0x50] sm:$0xff]
          %v820 = vld [vmem:[#allocation12 + $0x58] sm:$0xff]
          %v821 = vld [vmem:[#allocation12 + $0x60] sm:$0xff]
          %v822 = vld [vmem:[#allocation12 + $0x68] sm:$0xff]
          %v823 = vld [vmem:[#allocation12 + $0x70] sm:$0xff]
          %v824 = vld [vmem:[#allocation12 + $0x78] sm:$0xff]
          %v825 = vld [vmem:[#allocation12 + $0x80] sm:$0xff]
          %v826 = vld [vmem:[#allocation12 + $0x88] sm:$0xff]
          %v827 = vld [vmem:[#allocation12 + $0x90] sm:$0xff]
          %v828 = vld [vmem:[#allocation12 + $0x98] sm:$0xff]
          %v829 = vld [vmem:[#allocation12 + $0xa0] sm:$0xff]
          %v830 = vld [vmem:[#allocation12 + $0xa8] sm:$0xff]
          %v831 = vld [vmem:[#allocation12 + $0xb0] sm:$0xff]
          %v832 = vld [vmem:[#allocation12 + $0xb8] sm:$0xff]
          %v833 = vld [vmem:[#allocation12 + $0xc0] sm:$0xff]
          %v834 = vld [vmem:[#allocation12 + $0xc8] sm:$0xff]
          %v835 = vld [vmem:[#allocation12 + $0xd0] sm:$0xff]
          %v836 = vld [vmem:[#allocation12 + $0xd8] sm:$0xff]
          %v837 = vld [vmem:[#allocation12 + $0xe0] sm:$0xff]
          %v838 = vld [vmem:[#allocation12 + $0xe8] sm:$0xff]
          %v839 = vld [vmem:[#allocation12 + $0xf0] sm:$0xff]
          %v840 = vld [vmem:[#allocation12 + $0xf8] sm:$0xff]
          %v841 = vld [vmem:[#allocation12 + $0x100] sm:$0xff]
          %v842 = vld [vmem:[#allocation12 + $0x108] sm:$0xff]
          %v843 = vld [vmem:[#allocation12 + $0x110] sm:$0xff]
          %v844 = vld [vmem:[#allocation12 + $0x118] sm:$0xff]
          %v845 = vld [vmem:[#allocation12 + $0x120] sm:$0xff]
          %v846 = vld [vmem:[#allocation12 + $0x128] sm:$0xff]
          %v847 = vld [vmem:[#allocation12 + $0x130] sm:$0xff]
          %v848 = vld [vmem:[#allocation12 + $0x138] sm:$0xff]
          %v849 = vld [vmem:[#allocation12 + $0x140] sm:$0xff]
          %v850 = vld [vmem:[#allocation12 + $0x148] sm:$0xff]
          %v851 = vld [vmem:[#allocation12 + $0x150] sm:$0xff]
          %v852 = vld [vmem:[#allocation12 + $0x158] sm:$0xff]
          %v853 = vld [vmem:[#allocation12 + $0x160] sm:$0xff]
          %v854 = vld [vmem:[#allocation12 + $0x168] sm:$0xff]
          %v855 = vld [vmem:[#allocation12 + $0x170] sm:$0xff]
          %v856 = vld [vmem:[#allocation12 + $0x178] sm:$0xff]
          %v857 = vld [vmem:[#allocation12 + $0x180] sm:$0xff]
          %v858 = vld [vmem:[#allocation12 + $0x188] sm:$0xff]
          %v859 = vld [vmem:[#allocation12 + $0x190] sm:$0xff]
          %v860 = vld [vmem:[#allocation12 + $0x198] sm:$0xff]
          %v861 = vld [vmem:[#allocation12 + $0x1a0] sm:$0xff]
          %v862 = vld [vmem:[#allocation12 + $0x1a8] sm:$0xff]
          %v863 = vld [vmem:[#allocation12 + $0x1b0] sm:$0xff]
          %v864 = vld [vmem:[#allocation12 + $0x1b8] sm:$0xff]
          %v865 = vld [vmem:[#allocation12 + $0x1c0] sm:$0xff]
          %v866 = vld [vmem:[#allocation12 + $0x1c8] sm:$0xff]
          %v867 = vld [vmem:[#allocation12 + $0x1d0] sm:$0xff]
          %v868 = vld [vmem:[#allocation12 + $0x1d8] sm:$0xff]
          %v869 = vld [vmem:[#allocation12 + $0x1e0] sm:$0xff]
          %v870 = vld [vmem:[#allocation12 + $0x1e8] sm:$0xff]
          %v871 = vld [vmem:[#allocation12 + $0x1f0] sm:$0xff]
          %v872 = vld [vmem:[#allocation12 + $0x1f8] sm:$0xff]
          %v873 = vld [vmem:[%s8] sm:$0xf]
          %v874 = vpack.c.bf16 %v806, %v806
          %v875 = vpack.c.bf16 %v807, %v807
          %v877 = vlaneseq
          %v878 = vshrl.u32 %v877, 7
          %v879 = vsub.s32 0, %v878
          %v880 = vrot.slane %v873, %v879
          %v881 = vlaneseq
          %v882 = vshrl.u32 %v881, 7
          %v883 = vsub.s32 1, %v882
          %v884 = vrot.slane %v873, %v883
          %v885 = vlaneseq
          %v886 = vshrl.u32 %v885, 7
          %v887 = vsub.s32 2, %v886
          %v888 = vrot.slane %v873, %v887
          %v889 = vlaneseq
          %v890 = vshrl.u32 %v889, 7
          %v891 = vsub.s32 3, %v890
          %v892 = vrot.slane %v873, %v891
          %v961 = vunpack.c.l.b16 %v809
          %v962 = vunpack.c.h.b16 %v809
          %v963 = vunpack.c.l.b16 %v810
          %v964 = vunpack.c.h.b16 %v810
          %v965 = vunpack.c.l.b16 %v811
          %v966 = vunpack.c.h.b16 %v811
          %v967 = vunpack.c.l.b16 %v812
          %v968 = vunpack.c.h.b16 %v812
          %v969 = vunpack.c.l.b16 %v813
          %v970 = vunpack.c.h.b16 %v813
          %v971 = vunpack.c.l.b16 %v814
          %v972 = vunpack.c.h.b16 %v814
          %v973 = vunpack.c.l.b16 %v815
          %v974 = vunpack.c.h.b16 %v815
          %v975 = vunpack.c.l.b16 %v816
          %v976 = vunpack.c.h.b16 %v816
          %v977 = vunpack.c.l.b16 %v817
          %v978 = vunpack.c.h.b16 %v817
          %v979 = vunpack.c.l.b16 %v818
          %v980 = vunpack.c.h.b16 %v818
          %v981 = vunpack.c.l.b16 %v819
          %v982 = vunpack.c.h.b16 %v819
          %v983 = vunpack.c.l.b16 %v820
          %v984 = vunpack.c.h.b16 %v820
          %v985 = vunpack.c.l.b16 %v821
          %v986 = vunpack.c.h.b16 %v821
          %v987 = vunpack.c.l.b16 %v822
          %v988 = vunpack.c.h.b16 %v822
          %v989 = vunpack.c.l.b16 %v823
          %v990 = vunpack.c.h.b16 %v823
          %v991 = vunpack.c.l.b16 %v824
          %v992 = vunpack.c.h.b16 %v824
          %v993 = vunpack.c.l.b16 %v825
          %v994 = vunpack.c.h.b16 %v825
          %v995 = vunpack.c.l.b16 %v826
          %v996 = vunpack.c.h.b16 %v826
          %v997 = vunpack.c.l.b16 %v827
          %v998 = vunpack.c.h.b16 %v827
          %v999 = vunpack.c.l.b16 %v828
          %v1000 = vunpack.c.h.b16 %v828
          %v1001 = vunpack.c.l.b16 %v829
          %v1002 = vunpack.c.h.b16 %v829
          %v1003 = vunpack.c.l.b16 %v830
          %v1004 = vunpack.c.h.b16 %v830
          %v1005 = vunpack.c.l.b16 %v831
          %v1006 = vunpack.c.h.b16 %v831
          %v1007 = vunpack.c.l.b16 %v832
          %v1008 = vunpack.c.h.b16 %v832
          %v1009 = vunpack.c.l.b16 %v833
          %v1010 = vunpack.c.h.b16 %v833
          %v1011 = vunpack.c.l.b16 %v834
          %v1012 = vunpack.c.h.b16 %v834
          %v1013 = vunpack.c.l.b16 %v835
          %v1014 = vunpack.c.h.b16 %v835
          %v1015 = vunpack.c.l.b16 %v836
          %v1016 = vunpack.c.h.b16 %v836
          %v1017 = vunpack.c.l.b16 %v837
          %v1018 = vunpack.c.h.b16 %v837
          %v1019 = vunpack.c.l.b16 %v838
          %v1020 = vunpack.c.h.b16 %v838
          %v1021 = vunpack.c.l.b16 %v839
          %v1022 = vunpack.c.h.b16 %v839
          %v1023 = vunpack.c.l.b16 %v840
          %v1024 = vunpack.c.h.b16 %v840
          %v1025 = vunpack.c.l.b16 %v841
          %v1026 = vunpack.c.h.b16 %v841
          %v1027 = vunpack.c.l.b16 %v842
          %v1028 = vunpack.c.h.b16 %v842
          %v1029 = vunpack.c.l.b16 %v843
          %v1030 = vunpack.c.h.b16 %v843
          %v1031 = vunpack.c.l.b16 %v844
          %v1032 = vunpack.c.h.b16 %v844
          %v1033 = vunpack.c.l.b16 %v845
          %v1034 = vunpack.c.h.b16 %v845
          %v1035 = vunpack.c.l.b16 %v846
          %v1036 = vunpack.c.h.b16 %v846
          %v1037 = vunpack.c.l.b16 %v847
          %v1038 = vunpack.c.h.b16 %v847
          %v1039 = vunpack.c.l.b16 %v848
          %v1040 = vunpack.c.h.b16 %v848
          %v1041 = vunpack.c.l.b16 %v849
          %v1042 = vunpack.c.h.b16 %v849
          %v1043 = vunpack.c.l.b16 %v850
          %v1044 = vunpack.c.h.b16 %v850
          %v1045 = vunpack.c.l.b16 %v851
          %v1046 = vunpack.c.h.b16 %v851
          %v1047 = vunpack.c.l.b16 %v852
          %v1048 = vunpack.c.h.b16 %v852
          %v1049 = vunpack.c.l.b16 %v853
          %v1050 = vunpack.c.h.b16 %v853
          %v1051 = vunpack.c.l.b16 %v854
          %v1052 = vunpack.c.h.b16 %v854
          %v1053 = vunpack.c.l.b16 %v855
          %v1054 = vunpack.c.h.b16 %v855
          %v1055 = vunpack.c.l.b16 %v856
          %v1056 = vunpack.c.h.b16 %v856
          %v1057 = vunpack.c.l.b16 %v857
          %v1058 = vunpack.c.h.b16 %v857
          %v1059 = vunpack.c.l.b16 %v858
          %v1060 = vunpack.c.h.b16 %v858
          %v1061 = vunpack.c.l.b16 %v859
          %v1062 = vunpack.c.h.b16 %v859
          %v1063 = vunpack.c.l.b16 %v860
          %v1064 = vunpack.c.h.b16 %v860
          %v1065 = vunpack.c.l.b16 %v861
          %v1066 = vunpack.c.h.b16 %v861
          %v1067 = vunpack.c.l.b16 %v862
          %v1068 = vunpack.c.h.b16 %v862
          %v1069 = vunpack.c.l.b16 %v863
          %v1070 = vunpack.c.h.b16 %v863
          %v1071 = vunpack.c.l.b16 %v864
          %v1072 = vunpack.c.h.b16 %v864
          %v1073 = vunpack.c.l.b16 %v865
          %v1074 = vunpack.c.h.b16 %v865
          %v1075 = vunpack.c.l.b16 %v866
          %v1076 = vunpack.c.h.b16 %v866
          %v1077 = vunpack.c.l.b16 %v867
          %v1078 = vunpack.c.h.b16 %v867
          %v1079 = vunpack.c.l.b16 %v868
          %v1080 = vunpack.c.h.b16 %v868
          %v1081 = vunpack.c.l.b16 %v869
          %v1082 = vunpack.c.h.b16 %v869
          %v1083 = vunpack.c.l.b16 %v870
          %v1084 = vunpack.c.h.b16 %v870
          %v1085 = vunpack.c.l.b16 %v871
          %v1086 = vunpack.c.h.b16 %v871
          %v1087 = vunpack.c.l.b16 %v872
          %v1088 = vunpack.c.h.b16 %v872
          %v1089 = vpack.c.b16 %v965, %v961
          %v1090 = vpack.c.b16 %v966, %v962
          %v1091 = vpack.c.b16 %v967, %v963
          %v1092 = vpack.c.b16 %v968, %v964
          %v1093 = vpack.c.b16 %v973, %v969
          %v1094 = vpack.c.b16 %v974, %v970
          %v1095 = vpack.c.b16 %v975, %v971
          %v1096 = vpack.c.b16 %v976, %v972
          %v1097 = vpack.c.b16 %v981, %v977
          %v1098 = vpack.c.b16 %v982, %v978
          %v1099 = vpack.c.b16 %v983, %v979
          %v1100 = vpack.c.b16 %v984, %v980
          %v1101 = vpack.c.b16 %v989, %v985
          %v1102 = vpack.c.b16 %v990, %v986
          %v1103 = vpack.c.b16 %v991, %v987
          %v1104 = vpack.c.b16 %v992, %v988
          %v1105 = vpack.c.b16 %v997, %v993
          %v1106 = vpack.c.b16 %v998, %v994
          %v1107 = vpack.c.b16 %v999, %v995
          %v1108 = vpack.c.b16 %v1000, %v996
          %v1109 = vpack.c.b16 %v1005, %v1001
          %v1110 = vpack.c.b16 %v1006, %v1002
          %v1111 = vpack.c.b16 %v1007, %v1003
          %v1112 = vpack.c.b16 %v1008, %v1004
          %v1113 = vpack.c.b16 %v1013, %v1009
          %v1114 = vpack.c.b16 %v1014, %v1010
          %v1115 = vpack.c.b16 %v1015, %v1011
          %v1116 = vpack.c.b16 %v1016, %v1012
          %v1117 = vpack.c.b16 %v1021, %v1017
          %v1118 = vpack.c.b16 %v1022, %v1018
          %v1119 = vpack.c.b16 %v1023, %v1019
          %v1120 = vpack.c.b16 %v1024, %v1020
          %v1121 = vpack.c.b16 %v1029, %v1025
          %v1122 = vpack.c.b16 %v1030, %v1026
          %v1123 = vpack.c.b16 %v1031, %v1027
          %v1124 = vpack.c.b16 %v1032, %v1028
          %v1125 = vpack.c.b16 %v1037, %v1033
          %v1126 = vpack.c.b16 %v1038, %v1034
          %v1127 = vpack.c.b16 %v1039, %v1035
          %v1128 = vpack.c.b16 %v1040, %v1036
          %v1129 = vpack.c.b16 %v1045, %v1041
          %v1130 = vpack.c.b16 %v1046, %v1042
          %v1131 = vpack.c.b16 %v1047, %v1043
          %v1132 = vpack.c.b16 %v1048, %v1044
          %v1133 = vpack.c.b16 %v1053, %v1049
          %v1134 = vpack.c.b16 %v1054, %v1050
          %v1135 = vpack.c.b16 %v1055, %v1051
          %v1136 = vpack.c.b16 %v1056, %v1052
          %v1137 = vpack.c.b16 %v1061, %v1057
          %v1138 = vpack.c.b16 %v1062, %v1058
          %v1139 = vpack.c.b16 %v1063, %v1059
          %v1140 = vpack.c.b16 %v1064, %v1060
          %v1141 = vpack.c.b16 %v1069, %v1065
          %v1142 = vpack.c.b16 %v1070, %v1066
          %v1143 = vpack.c.b16 %v1071, %v1067
          %v1144 = vpack.c.b16 %v1072, %v1068
          %v1145 = vpack.c.b16 %v1077, %v1073
          %v1146 = vpack.c.b16 %v1078, %v1074
          %v1147 = vpack.c.b16 %v1079, %v1075
          %v1148 = vpack.c.b16 %v1080, %v1076
          %v1149 = vpack.c.b16 %v1085, %v1081
          %v1150 = vpack.c.b16 %v1086, %v1082
          %v1151 = vpack.c.b16 %v1087, %v1083
          %v1152 = vpack.c.b16 %v1088, %v1084
          %1217 = vmatprep.subr.bf16.mxu0 %v1090
          %1218 = vmatpush1.bf16.msra.mxu0 %v1089
          %1219 = vmatprep.subr.bf16.mxu0 %v1094
          %1220 = vmatpush1.bf16.msra.mxu0 %v1093
          %1221 = vmatprep.subr.bf16.mxu0 %v1098
          %1222 = vmatpush1.bf16.msra.mxu0 %v1097
          %1223 = vmatprep.subr.bf16.mxu0 %v1102
          %1224 = vmatpush1.bf16.msra.mxu0 %v1101
          %1225 = vmatprep.subr.bf16.mxu0 %v1106
          %1226 = vmatpush1.bf16.msra.mxu0 %v1105
          %1227 = vmatprep.subr.bf16.mxu0 %v1110
          %1228 = vmatpush1.bf16.msra.mxu0 %v1109
          %1229 = vmatprep.subr.bf16.mxu0 %v1114
          %1230 = vmatpush1.bf16.msra.mxu0 %v1113
          %1231 = vmatprep.subr.bf16.mxu0 %v1118
          %1232 = vmatpush1.bf16.msra.mxu0 %v1117
          %1233 = vmatprep.subr.bf16.mxu0 %v1122
          %1234 = vmatpush1.bf16.msra.mxu0 %v1121
          %1235 = vmatprep.subr.bf16.mxu0 %v1126
          %1236 = vmatpush1.bf16.msra.mxu0 %v1125
          %1237 = vmatprep.subr.bf16.mxu0 %v1130
          %1238 = vmatpush1.bf16.msra.mxu0 %v1129
          %1239 = vmatprep.subr.bf16.mxu0 %v1134
          %1240 = vmatpush1.bf16.msra.mxu0 %v1133
          %1241 = vmatprep.subr.bf16.mxu0 %v1138
          %1242 = vmatpush1.bf16.msra.mxu0 %v1137
          %1243 = vmatprep.subr.bf16.mxu0 %v1142
          %1244 = vmatpush1.bf16.msra.mxu0 %v1141
          %1245 = vmatprep.subr.bf16.mxu0 %v1146
          %1246 = vmatpush1.bf16.msra.mxu0 %v1145
          %1247 = vmatprep.subr.bf16.mxu0 %v1150
          %1248 = vmatpush1.bf16.msra.mxu0 %v1149
          %1249 = vmatprep.mubr.bf16.mxu0 %v875
          %1250 = vmatmul.mubr.bf16.gmra.mrb[0].mxu0 %v874
          %v1251 = vpop.f32.mrb[0].mxu0
          %v1252 = vadd.f32 %v880, %v1251
          %v1253 = vpop.f32.mrb[0].mxu0
          %v1254 = vadd.f32 %v884, %v1253
          %v1255 = vpop.f32.mrb[0].mxu0
          %v1256 = vpop.f32.mrb[0].mxu0
          %1257 = vdwg.mxu0
          %1258 = vmatprep.subr.bf16.mxu0 %v1092
          %1259 = vmatpush1.bf16.msra.mxu0 %v1091
          %1260 = vmatprep.subr.bf16.mxu0 %v1096
          %1261 = vmatpush1.bf16.msra.mxu0 %v1095
          %1262 = vmatprep.subr.bf16.mxu0 %v1100
          %1263 = vmatpush1.bf16.msra.mxu0 %v1099
          %1264 = vmatprep.subr.bf16.mxu0 %v1104
          %1265 = vmatpush1.bf16.msra.mxu0 %v1103
          %1266 = vmatprep.subr.bf16.mxu0 %v1108
          %1267 = vmatpush1.bf16.msra.mxu0 %v1107
          %1268 = vmatprep.subr.bf16.mxu0 %v1112
          %1269 = vmatpush1.bf16.msra.mxu0 %v1111
          %1270 = vmatprep.subr.bf16.mxu0 %v1116
          %1271 = vmatpush1.bf16.msra.mxu0 %v1115
          %1272 = vmatprep.subr.bf16.mxu0 %v1120
          %1273 = vmatpush1.bf16.msra.mxu0 %v1119
          %1274 = vmatprep.subr.bf16.mxu0 %v1124
          %1275 = vmatpush1.bf16.msra.mxu0 %v1123
          %1276 = vmatprep.subr.bf16.mxu0 %v1128
          %1277 = vmatpush1.bf16.msra.mxu0 %v1127
          %1278 = vmatprep.subr.bf16.mxu0 %v1132
          %1279 = vmatpush1.bf16.msra.mxu0 %v1131
          %1280 = vmatprep.subr.bf16.mxu0 %v1136
          %1281 = vmatpush1.bf16.msra.mxu0 %v1135
          %1282 = vmatprep.subr.bf16.mxu0 %v1140
          %1283 = vmatpush1.bf16.msra.mxu0 %v1139
          %1284 = vmatprep.subr.bf16.mxu0 %v1144
          %1285 = vmatpush1.bf16.msra.mxu0 %v1143
          %1286 = vmatprep.subr.bf16.mxu0 %v1148
          %1287 = vmatpush1.bf16.msra.mxu0 %v1147
          %1288 = vmatprep.subr.bf16.mxu0 %v1152
          %1289 = vmatpush1.bf16.msra.mxu0 %v1151
          %1290 = vmatprep.mubr.bf16.mxu0 %v875
          %1291 = vmatmul.mubr.bf16.gmra.mrb[0].mxu0 %v874
          %v1292 = vpop.f32.mrb[0].mxu0
          %v1293 = vadd.f32 %v888, %v1292
          %v1294 = vpop.f32.mrb[0].mxu0
          %v1295 = vadd.f32 %v892, %v1294
          %v1296 = vpop.f32.mrb[0].mxu0
          %v1297 = vpop.f32.mrb[0].mxu0
          %1298 = vdwg.mxu0
          %v1299 = vxor.u32 %v1252, 2147483648
          %v1300 = vmul.f32 %v1299, 1.442695
          %v1301 = vpow.pop %v1300
          %v1302 = vadd.f32 %v1301, 1.0
          %v1303 = vrcp.pop %v1302
          %v1304 = vmul.f32 1.0, %v1303
          %v1305 = vxor.u32 %v1254, 2147483648
          %v1306 = vmul.f32 %v1305, 1.442695
          %v1307 = vpow.pop %v1306
          %v1308 = vadd.f32 %v1307, 1.0
          %v1309 = vrcp.pop %v1308
          %v1310 = vmul.f32 1.0, %v1309
          %v1311 = vtanh.pop %v1293
          %v1312 = vxor.u32 %v1295, 2147483648
          %v1313 = vmul.f32 %v1312, 1.442695
          %v1314 = vpow.pop %v1313
          %v1315 = vadd.f32 %v1314, 1.0
          %v1316 = vrcp.pop %v1315
          %v1317 = vmul.f32 1.0, %v1316
          %v1318 = vmul.f32 %v1310, %v808
          %v1319 = vmul.f32 %v1304, %v1311
          %v1320 = vadd.f32 %v1318, %v1319
          %v1321 = vtanh.pop %v1320
          %v1322 = vmul.f32 %v1317, %v1321
          %s1323 = scalar_lea.vmem [#allocation7], 8
          %v1324 = vld [vmem:[%s1323] sm:$0xff]
          %s1325 = scalar_lea.vmem [#allocation10], 8
          %v1326 = vld [vmem:[%s1325] sm:$0xff]
          %v1327 = vld [vmem:[#allocation13] sm:$0xff]
          %v1328 = vld [vmem:[#allocation13 + $0x8] sm:$0xff]
          %v1329 = vld [vmem:[#allocation13 + $0x10] sm:$0xff]
          %v1330 = vld [vmem:[#allocation13 + $0x18] sm:$0xff]
          %v1331 = vld [vmem:[#allocation13 + $0x20] sm:$0xff]
          %v1332 = vld [vmem:[#allocation13 + $0x28] sm:$0xff]
          %v1333 = vld [vmem:[#allocation13 + $0x30] sm:$0xff]
          %v1334 = vld [vmem:[#allocation13 + $0x38] sm:$0xff]
          %v1335 = vld [vmem:[#allocation13 + $0x40] sm:$0xff]
          %v1336 = vld [vmem:[#allocation13 + $0x48] sm:$0xff]
          %v1337 = vld [vmem:[#allocation13 + $0x50] sm:$0xff]
          %v1338 = vld [vmem:[#allocation13 + $0x58] sm:$0xff]
          %v1339 = vld [vmem:[#allocation13 + $0x60] sm:$0xff]
          %v1340 = vld [vmem:[#allocation13 + $0x68] sm:$0xff]
          %v1341 = vld [vmem:[#allocation13 + $0x70] sm:$0xff]
          %v1342 = vld [vmem:[#allocation13 + $0x78] sm:$0xff]
          %v1343 = vld [vmem:[#allocation13 + $0x80] sm:$0xff]
          %v1344 = vld [vmem:[#allocation13 + $0x88] sm:$0xff]
          %v1345 = vld [vmem:[#allocation13 + $0x90] sm:$0xff]
          %v1346 = vld [vmem:[#allocation13 + $0x98] sm:$0xff]
          %v1347 = vld [vmem:[#allocation13 + $0xa0] sm:$0xff]
          %v1348 = vld [vmem:[#allocation13 + $0xa8] sm:$0xff]
          %v1349 = vld [vmem:[#allocation13 + $0xb0] sm:$0xff]
          %v1350 = vld [vmem:[#allocation13 + $0xb8] sm:$0xff]
          %v1351 = vld [vmem:[#allocation13 + $0xc0] sm:$0xff]
          %v1352 = vld [vmem:[#allocation13 + $0xc8] sm:$0xff]
          %v1353 = vld [vmem:[#allocation13 + $0xd0] sm:$0xff]
          %v1354 = vld [vmem:[#allocation13 + $0xd8] sm:$0xff]
          %v1355 = vld [vmem:[#allocation13 + $0xe0] sm:$0xff]
          %v1356 = vld [vmem:[#allocation13 + $0xe8] sm:$0xff]
          %v1357 = vld [vmem:[#allocation13 + $0xf0] sm:$0xff]
          %v1358 = vld [vmem:[#allocation13 + $0xf8] sm:$0xff]
          %v1359 = vld [vmem:[#allocation13 + $0x100] sm:$0xff]
          %v1360 = vld [vmem:[#allocation13 + $0x108] sm:$0xff]
          %v1361 = vld [vmem:[#allocation13 + $0x110] sm:$0xff]
          %v1362 = vld [vmem:[#allocation13 + $0x118] sm:$0xff]
          %v1363 = vld [vmem:[#allocation13 + $0x120] sm:$0xff]
          %v1364 = vld [vmem:[#allocation13 + $0x128] sm:$0xff]
          %v1365 = vld [vmem:[#allocation13 + $0x130] sm:$0xff]
          %v1366 = vld [vmem:[#allocation13 + $0x138] sm:$0xff]
          %v1367 = vld [vmem:[#allocation13 + $0x140] sm:$0xff]
          %v1368 = vld [vmem:[#allocation13 + $0x148] sm:$0xff]
          %v1369 = vld [vmem:[#allocation13 + $0x150] sm:$0xff]
          %v1370 = vld [vmem:[#allocation13 + $0x158] sm:$0xff]
          %v1371 = vld [vmem:[#allocation13 + $0x160] sm:$0xff]
          %v1372 = vld [vmem:[#allocation13 + $0x168] sm:$0xff]
          %v1373 = vld [vmem:[#allocation13 + $0x170] sm:$0xff]
          %v1374 = vld [vmem:[#allocation13 + $0x178] sm:$0xff]
          %v1375 = vld [vmem:[#allocation13 + $0x180] sm:$0xff]
          %v1376 = vld [vmem:[#allocation13 + $0x188] sm:$0xff]
          %v1377 = vld [vmem:[#allocation13 + $0x190] sm:$0xff]
          %v1378 = vld [vmem:[#allocation13 + $0x198] sm:$0xff]
          %v1379 = vld [vmem:[#allocation13 + $0x1a0] sm:$0xff]
          %v1380 = vld [vmem:[#allocation13 + $0x1a8] sm:$0xff]
          %v1381 = vld [vmem:[#allocation13 + $0x1b0] sm:$0xff]
          %v1382 = vld [vmem:[#allocation13 + $0x1b8] sm:$0xff]
          %v1383 = vld [vmem:[#allocation13 + $0x1c0] sm:$0xff]
          %v1384 = vld [vmem:[#allocation13 + $0x1c8] sm:$0xff]
          %v1385 = vld [vmem:[#allocation13 + $0x1d0] sm:$0xff]
          %v1386 = vld [vmem:[#allocation13 + $0x1d8] sm:$0xff]
          %v1387 = vld [vmem:[#allocation13 + $0x1e0] sm:$0xff]
          %v1388 = vld [vmem:[#allocation13 + $0x1e8] sm:$0xff]
          %v1389 = vld [vmem:[#allocation13 + $0x1f0] sm:$0xff]
          %v1390 = vld [vmem:[#allocation13 + $0x1f8] sm:$0xff]
          %v1391 = vld [vmem:[%s9] sm:$0xf]
          %v1392 = vpack.c.bf16 %v1324, %v1324
          %v1394 = vlaneseq
          %v1395 = vshrl.u32 %v1394, 7
          %v1396 = vsub.s32 0, %v1395
          %v1397 = vrot.slane %v1391, %v1396
          %v1398 = vlaneseq
          %v1399 = vshrl.u32 %v1398, 7
          %v1400 = vsub.s32 1, %v1399
          %v1401 = vrot.slane %v1391, %v1400
          %v1402 = vlaneseq
          %v1403 = vshrl.u32 %v1402, 7
          %v1404 = vsub.s32 2, %v1403
          %v1405 = vrot.slane %v1391, %v1404
          %v1406 = vlaneseq
          %v1407 = vshrl.u32 %v1406, 7
          %v1408 = vsub.s32 3, %v1407
          %v1409 = vrot.slane %v1391, %v1408
          %v1478 = vunpack.c.l.b16 %v1327
          %v1479 = vunpack.c.h.b16 %v1327
          %v1480 = vunpack.c.l.b16 %v1328
          %v1481 = vunpack.c.h.b16 %v1328
          %v1482 = vunpack.c.l.b16 %v1329
          %v1483 = vunpack.c.h.b16 %v1329
          %v1484 = vunpack.c.l.b16 %v1330
          %v1485 = vunpack.c.h.b16 %v1330
          %v1486 = vunpack.c.l.b16 %v1331
          %v1487 = vunpack.c.h.b16 %v1331
          %v1488 = vunpack.c.l.b16 %v1332
          %v1489 = vunpack.c.h.b16 %v1332
          %v1490 = vunpack.c.l.b16 %v1333
          %v1491 = vunpack.c.h.b16 %v1333
          %v1492 = vunpack.c.l.b16 %v1334
          %v1493 = vunpack.c.h.b16 %v1334
          %v1494 = vunpack.c.l.b16 %v1335
          %v1495 = vunpack.c.h.b16 %v1335
          %v1496 = vunpack.c.l.b16 %v1336
          %v1497 = vunpack.c.h.b16 %v1336
          %v1498 = vunpack.c.l.b16 %v1337
          %v1499 = vunpack.c.h.b16 %v1337
          %v1500 = vunpack.c.l.b16 %v1338
          %v1501 = vunpack.c.h.b16 %v1338
          %v1502 = vunpack.c.l.b16 %v1339
          %v1503 = vunpack.c.h.b16 %v1339
          %v1504 = vunpack.c.l.b16 %v1340
          %v1505 = vunpack.c.h.b16 %v1340
          %v1506 = vunpack.c.l.b16 %v1341
          %v1507 = vunpack.c.h.b16 %v1341
          %v1508 = vunpack.c.l.b16 %v1342
          %v1509 = vunpack.c.h.b16 %v1342
          %v1510 = vunpack.c.l.b16 %v1343
          %v1511 = vunpack.c.h.b16 %v1343
          %v1512 = vunpack.c.l.b16 %v1344
          %v1513 = vunpack.c.h.b16 %v1344
          %v1514 = vunpack.c.l.b16 %v1345
          %v1515 = vunpack.c.h.b16 %v1345
          %v1516 = vunpack.c.l.b16 %v1346
          %v1517 = vunpack.c.h.b16 %v1346
          %v1518 = vunpack.c.l.b16 %v1347
          %v1519 = vunpack.c.h.b16 %v1347
          %v1520 = vunpack.c.l.b16 %v1348
          %v1521 = vunpack.c.h.b16 %v1348
          %v1522 = vunpack.c.l.b16 %v1349
          %v1523 = vunpack.c.h.b16 %v1349
          %v1524 = vunpack.c.l.b16 %v1350
          %v1525 = vunpack.c.h.b16 %v1350
          %v1526 = vunpack.c.l.b16 %v1351
          %v1527 = vunpack.c.h.b16 %v1351
          %v1528 = vunpack.c.l.b16 %v1352
          %v1529 = vunpack.c.h.b16 %v1352
          %v1530 = vunpack.c.l.b16 %v1353
          %v1531 = vunpack.c.h.b16 %v1353
          %v1532 = vunpack.c.l.b16 %v1354
          %v1533 = vunpack.c.h.b16 %v1354
          %v1534 = vunpack.c.l.b16 %v1355
          %v1535 = vunpack.c.h.b16 %v1355
          %v1536 = vunpack.c.l.b16 %v1356
          %v1537 = vunpack.c.h.b16 %v1356
          %v1538 = vunpack.c.l.b16 %v1357
          %v1539 = vunpack.c.h.b16 %v1357
          %v1540 = vunpack.c.l.b16 %v1358
          %v1541 = vunpack.c.h.b16 %v1358
          %v1542 = vunpack.c.l.b16 %v1359
          %v1543 = vunpack.c.h.b16 %v1359
          %v1544 = vunpack.c.l.b16 %v1360
          %v1545 = vunpack.c.h.b16 %v1360
          %v1546 = vunpack.c.l.b16 %v1361
          %v1547 = vunpack.c.h.b16 %v1361
          %v1548 = vunpack.c.l.b16 %v1362
          %v1549 = vunpack.c.h.b16 %v1362
          %v1550 = vunpack.c.l.b16 %v1363
          %v1551 = vunpack.c.h.b16 %v1363
          %v1552 = vunpack.c.l.b16 %v1364
          %v1553 = vunpack.c.h.b16 %v1364
          %v1554 = vunpack.c.l.b16 %v1365
          %v1555 = vunpack.c.h.b16 %v1365
          %v1556 = vunpack.c.l.b16 %v1366
          %v1557 = vunpack.c.h.b16 %v1366
          %v1558 = vunpack.c.l.b16 %v1367
          %v1559 = vunpack.c.h.b16 %v1367
          %v1560 = vunpack.c.l.b16 %v1368
          %v1561 = vunpack.c.h.b16 %v1368
          %v1562 = vunpack.c.l.b16 %v1369
          %v1563 = vunpack.c.h.b16 %v1369
          %v1564 = vunpack.c.l.b16 %v1370
          %v1565 = vunpack.c.h.b16 %v1370
          %v1566 = vunpack.c.l.b16 %v1371
          %v1567 = vunpack.c.h.b16 %v1371
          %v1568 = vunpack.c.l.b16 %v1372
          %v1569 = vunpack.c.h.b16 %v1372
          %v1570 = vunpack.c.l.b16 %v1373
          %v1571 = vunpack.c.h.b16 %v1373
          %v1572 = vunpack.c.l.b16 %v1374
          %v1573 = vunpack.c.h.b16 %v1374
          %v1574 = vunpack.c.l.b16 %v1375
          %v1575 = vunpack.c.h.b16 %v1375
          %v1576 = vunpack.c.l.b16 %v1376
          %v1577 = vunpack.c.h.b16 %v1376
          %v1578 = vunpack.c.l.b16 %v1377
          %v1579 = vunpack.c.h.b16 %v1377
          %v1580 = vunpack.c.l.b16 %v1378
          %v1581 = vunpack.c.h.b16 %v1378
          %v1582 = vunpack.c.l.b16 %v1379
          %v1583 = vunpack.c.h.b16 %v1379
          %v1584 = vunpack.c.l.b16 %v1380
          %v1585 = vunpack.c.h.b16 %v1380
          %v1586 = vunpack.c.l.b16 %v1381
          %v1587 = vunpack.c.h.b16 %v1381
          %v1588 = vunpack.c.l.b16 %v1382
          %v1589 = vunpack.c.h.b16 %v1382
          %v1590 = vunpack.c.l.b16 %v1383
          %v1591 = vunpack.c.h.b16 %v1383
          %v1592 = vunpack.c.l.b16 %v1384
          %v1593 = vunpack.c.h.b16 %v1384
          %v1594 = vunpack.c.l.b16 %v1385
          %v1595 = vunpack.c.h.b16 %v1385
          %v1596 = vunpack.c.l.b16 %v1386
          %v1597 = vunpack.c.h.b16 %v1386
          %v1598 = vunpack.c.l.b16 %v1387
          %v1599 = vunpack.c.h.b16 %v1387
          %v1600 = vunpack.c.l.b16 %v1388
          %v1601 = vunpack.c.h.b16 %v1388
          %v1602 = vunpack.c.l.b16 %v1389
          %v1603 = vunpack.c.h.b16 %v1389
          %v1604 = vunpack.c.l.b16 %v1390
          %v1605 = vunpack.c.h.b16 %v1390
          %v1606 = vpack.c.b16 %v1482, %v1478
          %v1607 = vpack.c.b16 %v1483, %v1479
          %v1608 = vpack.c.b16 %v1484, %v1480
          %v1609 = vpack.c.b16 %v1485, %v1481
          %v1610 = vpack.c.b16 %v1490, %v1486
          %v1611 = vpack.c.b16 %v1491, %v1487
          %v1612 = vpack.c.b16 %v1492, %v1488
          %v1613 = vpack.c.b16 %v1493, %v1489
          %v1614 = vpack.c.b16 %v1498, %v1494
          %v1615 = vpack.c.b16 %v1499, %v1495
          %v1616 = vpack.c.b16 %v1500, %v1496
          %v1617 = vpack.c.b16 %v1501, %v1497
          %v1618 = vpack.c.b16 %v1506, %v1502
          %v1619 = vpack.c.b16 %v1507, %v1503
          %v1620 = vpack.c.b16 %v1508, %v1504
          %v1621 = vpack.c.b16 %v1509, %v1505
          %v1622 = vpack.c.b16 %v1514, %v1510
          %v1623 = vpack.c.b16 %v1515, %v1511
          %v1624 = vpack.c.b16 %v1516, %v1512
          %v1625 = vpack.c.b16 %v1517, %v1513
          %v1626 = vpack.c.b16 %v1522, %v1518
          %v1627 = vpack.c.b16 %v1523, %v1519
          %v1628 = vpack.c.b16 %v1524, %v1520
          %v1629 = vpack.c.b16 %v1525, %v1521
          %v1630 = vpack.c.b16 %v1530, %v1526
          %v1631 = vpack.c.b16 %v1531, %v1527
          %v1632 = vpack.c.b16 %v1532, %v1528
          %v1633 = vpack.c.b16 %v1533, %v1529
          %v1634 = vpack.c.b16 %v1538, %v1534
          %v1635 = vpack.c.b16 %v1539, %v1535
          %v1636 = vpack.c.b16 %v1540, %v1536
          %v1637 = vpack.c.b16 %v1541, %v1537
          %v1638 = vpack.c.b16 %v1546, %v1542
          %v1639 = vpack.c.b16 %v1547, %v1543
          %v1640 = vpack.c.b16 %v1548, %v1544
          %v1641 = vpack.c.b16 %v1549, %v1545
          %v1642 = vpack.c.b16 %v1554, %v1550
          %v1643 = vpack.c.b16 %v1555, %v1551
          %v1644 = vpack.c.b16 %v1556, %v1552
          %v1645 = vpack.c.b16 %v1557, %v1553
          %v1646 = vpack.c.b16 %v1562, %v1558
          %v1647 = vpack.c.b16 %v1563, %v1559
          %v1648 = vpack.c.b16 %v1564, %v1560
          %v1649 = vpack.c.b16 %v1565, %v1561
          %v1650 = vpack.c.b16 %v1570, %v1566
          %v1651 = vpack.c.b16 %v1571, %v1567
          %v1652 = vpack.c.b16 %v1572, %v1568
          %v1653 = vpack.c.b16 %v1573, %v1569
          %v1654 = vpack.c.b16 %v1578, %v1574
          %v1655 = vpack.c.b16 %v1579, %v1575
          %v1656 = vpack.c.b16 %v1580, %v1576
          %v1657 = vpack.c.b16 %v1581, %v1577
          %v1658 = vpack.c.b16 %v1586, %v1582
          %v1659 = vpack.c.b16 %v1587, %v1583
          %v1660 = vpack.c.b16 %v1588, %v1584
          %v1661 = vpack.c.b16 %v1589, %v1585
          %v1662 = vpack.c.b16 %v1594, %v1590
          %v1663 = vpack.c.b16 %v1595, %v1591
          %v1664 = vpack.c.b16 %v1596, %v1592
          %v1665 = vpack.c.b16 %v1597, %v1593
          %v1666 = vpack.c.b16 %v1602, %v1598
          %v1667 = vpack.c.b16 %v1603, %v1599
          %v1668 = vpack.c.b16 %v1604, %v1600
          %v1669 = vpack.c.b16 %v1605, %v1601
          %1734 = vmatprep.subr.bf16.mxu0 %v1607
          %1735 = vmatpush1.bf16.msra.mxu0 %v1606
          %1736 = vmatprep.subr.bf16.mxu0 %v1611
          %1737 = vmatpush1.bf16.msra.mxu0 %v1610
          %1738 = vmatprep.subr.bf16.mxu0 %v1615
          %1739 = vmatpush1.bf16.msra.mxu0 %v1614
          %1740 = vmatprep.subr.bf16.mxu0 %v1619
          %1741 = vmatpush1.bf16.msra.mxu0 %v1618
          %1742 = vmatprep.subr.bf16.mxu0 %v1623
          %1743 = vmatpush1.bf16.msra.mxu0 %v1622
          %1744 = vmatprep.subr.bf16.mxu0 %v1627
          %1745 = vmatpush1.bf16.msra.mxu0 %v1626
          %1746 = vmatprep.subr.bf16.mxu0 %v1631
          %1747 = vmatpush1.bf16.msra.mxu0 %v1630
          %1748 = vmatprep.subr.bf16.mxu0 %v1635
          %1749 = vmatpush1.bf16.msra.mxu0 %v1634
          %1750 = vmatprep.subr.bf16.mxu0 %v1639
          %1751 = vmatpush1.bf16.msra.mxu0 %v1638
          %1752 = vmatprep.subr.bf16.mxu0 %v1643
          %1753 = vmatpush1.bf16.msra.mxu0 %v1642
          %1754 = vmatprep.subr.bf16.mxu0 %v1647
          %1755 = vmatpush1.bf16.msra.mxu0 %v1646
          %1756 = vmatprep.subr.bf16.mxu0 %v1651
          %1757 = vmatpush1.bf16.msra.mxu0 %v1650
          %1758 = vmatprep.subr.bf16.mxu0 %v1655
          %1759 = vmatpush1.bf16.msra.mxu0 %v1654
          %1760 = vmatprep.subr.bf16.mxu0 %v1659
          %1761 = vmatpush1.bf16.msra.mxu0 %v1658
          %1762 = vmatprep.subr.bf16.mxu0 %v1663
          %1763 = vmatpush1.bf16.msra.mxu0 %v1662
          %1764 = vmatprep.subr.bf16.mxu0 %v1667
          %1765 = vmatpush1.bf16.msra.mxu0 %v1666
          %1766 = vmatprep.mubr.bf16.mxu0 %v1392
          %1767 = vmatmul.mubr.bf16.gmra.mrb[0].mxu0 %v874
          %v1768 = vpop.f32.mrb[0].mxu0
          %v1769 = vadd.f32 %v1397, %v1768
          %v1770 = vpop.f32.mrb[0].mxu0
          %v1771 = vadd.f32 %v1401, %v1770
          %v1772 = vpop.f32.mrb[0].mxu0
          %v1773 = vpop.f32.mrb[0].mxu0
          %1774 = vdwg.mxu0
          %1775 = vmatprep.subr.bf16.mxu0 %v1609
          %1776 = vmatpush1.bf16.msra.mxu0 %v1608
          %1777 = vmatprep.subr.bf16.mxu0 %v1613
          %1778 = vmatpush1.bf16.msra.mxu0 %v1612
          %1779 = vmatprep.subr.bf16.mxu0 %v1617
          %1780 = vmatpush1.bf16.msra.mxu0 %v1616
          %1781 = vmatprep.subr.bf16.mxu0 %v1621
          %1782 = vmatpush1.bf16.msra.mxu0 %v1620
          %1783 = vmatprep.subr.bf16.mxu0 %v1625
          %1784 = vmatpush1.bf16.msra.mxu0 %v1624
          %1785 = vmatprep.subr.bf16.mxu0 %v1629
          %1786 = vmatpush1.bf16.msra.mxu0 %v1628
          %1787 = vmatprep.subr.bf16.mxu0 %v1633
          %1788 = vmatpush1.bf16.msra.mxu0 %v1632
          %1789 = vmatprep.subr.bf16.mxu0 %v1637
          %1790 = vmatpush1.bf16.msra.mxu0 %v1636
          %1791 = vmatprep.subr.bf16.mxu0 %v1641
          %1792 = vmatpush1.bf16.msra.mxu0 %v1640
          %1793 = vmatprep.subr.bf16.mxu0 %v1645
          %1794 = vmatpush1.bf16.msra.mxu0 %v1644
          %1795 = vmatprep.subr.bf16.mxu0 %v1649
          %1796 = vmatpush1.bf16.msra.mxu0 %v1648
          %1797 = vmatprep.subr.bf16.mxu0 %v1653
          %1798 = vmatpush1.bf16.msra.mxu0 %v1652
          %1799 = vmatprep.subr.bf16.mxu0 %v1657
          %1800 = vmatpush1.bf16.msra.mxu0 %v1656
          %1801 = vmatprep.subr.bf16.mxu0 %v1661
          %1802 = vmatpush1.bf16.msra.mxu0 %v1660
          %1803 = vmatprep.subr.bf16.mxu0 %v1665
          %1804 = vmatpush1.bf16.msra.mxu0 %v1664
          %1805 = vmatprep.subr.bf16.mxu0 %v1669
          %1806 = vmatpush1.bf16.msra.mxu0 %v1668
          %1807 = vmatprep.mubr.bf16.mxu0 %v1392
          %1808 = vmatmul.mubr.bf16.gmra.mrb[0].mxu0 %v874
          %v1809 = vpop.f32.mrb[0].mxu0
          %v1810 = vadd.f32 %v1405, %v1809
          %v1811 = vpop.f32.mrb[0].mxu0
          %v1812 = vadd.f32 %v1409, %v1811
          %v1813 = vpop.f32.mrb[0].mxu0
          %v1814 = vpop.f32.mrb[0].mxu0
          %1815 = vdwg.mxu0
          %v1816 = vxor.u32 %v1769, 2147483648
          %v1817 = vmul.f32 %v1816, 1.442695
          %v1818 = vpow.pop %v1817
          %v1819 = vadd.f32 %v1818, 1.0
          %v1820 = vrcp.pop %v1819
          %v1821 = vmul.f32 1.0, %v1820
          %v1822 = vxor.u32 %v1771, 2147483648
          %v1823 = vmul.f32 %v1822, 1.442695
          %v1824 = vpow.pop %v1823
          %v1825 = vadd.f32 %v1824, 1.0
          %v1826 = vrcp.pop %v1825
          %v1827 = vmul.f32 1.0, %v1826
          %v1828 = vtanh.pop %v1810
          %v1829 = vxor.u32 %v1812, 2147483648
          %v1830 = vmul.f32 %v1829, 1.442695
          %v1831 = vpow.pop %v1830
          %v1832 = vadd.f32 %v1831, 1.0
          %v1833 = vrcp.pop %v1832
          %v1834 = vmul.f32 1.0, %v1833
          %v1835 = vmul.f32 %v1827, %v1326
          %v1836 = vmul.f32 %v1821, %v1828
          %v1837 = vadd.f32 %v1835, %v1836
          %v1838 = vtanh.pop %v1837
          %v1839 = vmul.f32 %v1834, %v1838
          %s1840 = scalar_lea.vmem [#allocation7], 16
          %v1841 = vld [vmem:[%s1840] sm:$0xff]
          %s1842 = scalar_lea.vmem [#allocation10], 16
          %v1843 = vld [vmem:[%s1842] sm:$0xff]
          %v1844 = vld [vmem:[#allocation15] sm:$0xff]
          %v1845 = vld [vmem:[#allocation15 + $0x8] sm:$0xff]
          %v1846 = vld [vmem:[#allocation15 + $0x10] sm:$0xff]
          %v1847 = vld [vmem:[#allocation15 + $0x18] sm:$0xff]
          %v1848 = vld [vmem:[#allocation15 + $0x20] sm:$0xff]
          %v1849 = vld [vmem:[#allocation15 + $0x28] sm:$0xff]
          %v1850 = vld [vmem:[#allocation15 + $0x30] sm:$0xff]
          %v1851 = vld [vmem:[#allocation15 + $0x38] sm:$0xff]
          %v1852 = vld [vmem:[#allocation15 + $0x40] sm:$0xff]
          %v1853 = vld [vmem:[#allocation15 + $0x48] sm:$0xff]
          %v1854 = vld [vmem:[#allocation15 + $0x50] sm:$0xff]
          %v1855 = vld [vmem:[#allocation15 + $0x58] sm:$0xff]
          %v1856 = vld [vmem:[#allocation15 + $0x60] sm:$0xff]
          %v1857 = vld [vmem:[#allocation15 + $0x68] sm:$0xff]
          %v1858 = vld [vmem:[#allocation15 + $0x70] sm:$0xff]
          %v1859 = vld [vmem:[#allocation15 + $0x78] sm:$0xff]
          %v1860 = vld [vmem:[#allocation15 + $0x80] sm:$0xff]
          %v1861 = vld [vmem:[#allocation15 + $0x88] sm:$0xff]
          %v1862 = vld [vmem:[#allocation15 + $0x90] sm:$0xff]
          %v1863 = vld [vmem:[#allocation15 + $0x98] sm:$0xff]
          %v1864 = vld [vmem:[#allocation15 + $0xa0] sm:$0xff]
          %v1865 = vld [vmem:[#allocation15 + $0xa8] sm:$0xff]
          %v1866 = vld [vmem:[#allocation15 + $0xb0] sm:$0xff]
          %v1867 = vld [vmem:[#allocation15 + $0xb8] sm:$0xff]
          %v1868 = vld [vmem:[#allocation15 + $0xc0] sm:$0xff]
          %v1869 = vld [vmem:[#allocation15 + $0xc8] sm:$0xff]
          %v1870 = vld [vmem:[#allocation15 + $0xd0] sm:$0xff]
          %v1871 = vld [vmem:[#allocation15 + $0xd8] sm:$0xff]
          %v1872 = vld [vmem:[#allocation15 + $0xe0] sm:$0xff]
          %v1873 = vld [vmem:[#allocation15 + $0xe8] sm:$0xff]
          %v1874 = vld [vmem:[#allocation15 + $0xf0] sm:$0xff]
          %v1875 = vld [vmem:[#allocation15 + $0xf8] sm:$0xff]
          %v1876 = vld [vmem:[#allocation15 + $0x100] sm:$0xff]
          %v1877 = vld [vmem:[#allocation15 + $0x108] sm:$0xff]
          %v1878 = vld [vmem:[#allocation15 + $0x110] sm:$0xff]
          %v1879 = vld [vmem:[#allocation15 + $0x118] sm:$0xff]
          %v1880 = vld [vmem:[#allocation15 + $0x120] sm:$0xff]
          %v1881 = vld [vmem:[#allocation15 + $0x128] sm:$0xff]
          %v1882 = vld [vmem:[#allocation15 + $0x130] sm:$0xff]
          %v1883 = vld [vmem:[#allocation15 + $0x138] sm:$0xff]
          %v1884 = vld [vmem:[#allocation15 + $0x140] sm:$0xff]
          %v1885 = vld [vmem:[#allocation15 + $0x148] sm:$0xff]
          %v1886 = vld [vmem:[#allocation15 + $0x150] sm:$0xff]
          %v1887 = vld [vmem:[#allocation15 + $0x158] sm:$0xff]
          %v1888 = vld [vmem:[#allocation15 + $0x160] sm:$0xff]
          %v1889 = vld [vmem:[#allocation15 + $0x168] sm:$0xff]
          %v1890 = vld [vmem:[#allocation15 + $0x170] sm:$0xff]
          %v1891 = vld [vmem:[#allocation15 + $0x178] sm:$0xff]
          %v1892 = vld [vmem:[#allocation15 + $0x180] sm:$0xff]
          %v1893 = vld [vmem:[#allocation15 + $0x188] sm:$0xff]
          %v1894 = vld [vmem:[#allocation15 + $0x190] sm:$0xff]
          %v1895 = vld [vmem:[#allocation15 + $0x198] sm:$0xff]
          %v1896 = vld [vmem:[#allocation15 + $0x1a0] sm:$0xff]
          %v1897 = vld [vmem:[#allocation15 + $0x1a8] sm:$0xff]
          %v1898 = vld [vmem:[#allocation15 + $0x1b0] sm:$0xff]
          %v1899 = vld [vmem:[#allocation15 + $0x1b8] sm:$0xff]
          %v1900 = vld [vmem:[#allocation15 + $0x1c0] sm:$0xff]
          %v1901 = vld [vmem:[#allocation15 + $0x1c8] sm:$0xff]
          %v1902 = vld [vmem:[#allocation15 + $0x1d0] sm:$0xff]
          %v1903 = vld [vmem:[#allocation15 + $0x1d8] sm:$0xff]
          %v1904 = vld [vmem:[#allocation15 + $0x1e0] sm:$0xff]
          %v1905 = vld [vmem:[#allocation15 + $0x1e8] sm:$0xff]
          %v1906 = vld [vmem:[#allocation15 + $0x1f0] sm:$0xff]
          %v1907 = vld [vmem:[#allocation15 + $0x1f8] sm:$0xff]
          %v1908 = vld [vmem:[#allocation15 + $0x200] sm:$0xff]
          %v1909 = vld [vmem:[#allocation15 + $0x208] sm:$0xff]
          %v1910 = vld [vmem:[#allocation15 + $0x210] sm:$0xff]
          %v1911 = vld [vmem:[#allocation15 + $0x218] sm:$0xff]
          %v1912 = vld [vmem:[#allocation15 + $0x220] sm:$0xff]
          %v1913 = vld [vmem:[#allocation15 + $0x228] sm:$0xff]
          %v1914 = vld [vmem:[#allocation15 + $0x230] sm:$0xff]
          %v1915 = vld [vmem:[#allocation15 + $0x238] sm:$0xff]
          %v1916 = vld [vmem:[#allocation15 + $0x240] sm:$0xff]
          %v1917 = vld [vmem:[#allocation15 + $0x248] sm:$0xff]
          %v1918 = vld [vmem:[#allocation15 + $0x250] sm:$0xff]
          %v1919 = vld [vmem:[#allocation15 + $0x258] sm:$0xff]
          %v1920 = vld [vmem:[#allocation15 + $0x260] sm:$0xff]
          %v1921 = vld [vmem:[#allocation15 + $0x268] sm:$0xff]
          %v1922 = vld [vmem:[#allocation15 + $0x270] sm:$0xff]
          %v1923 = vld [vmem:[#allocation15 + $0x278] sm:$0xff]
          %v1924 = vld [vmem:[#allocation15 + $0x280] sm:$0xff]
          %v1925 = vld [vmem:[#allocation15 + $0x288] sm:$0xff]
          %v1926 = vld [vmem:[#allocation15 + $0x290] sm:$0xff]
          %v1927 = vld [vmem:[#allocation15 + $0x298] sm:$0xff]
          %v1928 = vld [vmem:[#allocation15 + $0x2a0] sm:$0xff]
          %v1929 = vld [vmem:[#allocation15 + $0x2a8] sm:$0xff]
          %v1930 = vld [vmem:[#allocation15 + $0x2b0] sm:$0xff]
          %v1931 = vld [vmem:[#allocation15 + $0x2b8] sm:$0xff]
          %v1932 = vld [vmem:[#allocation15 + $0x2c0] sm:$0xff]
          %v1933 = vld [vmem:[#allocation15 + $0x2c8] sm:$0xff]
          %v1934 = vld [vmem:[#allocation15 + $0x2d0] sm:$0xff]
          %v1935 = vld [vmem:[#allocation15 + $0x2d8] sm:$0xff]
          %v1936 = vld [vmem:[#allocation15 + $0x2e0] sm:$0xff]
          %v1937 = vld [vmem:[#allocation15 + $0x2e8] sm:$0xff]
          %v1938 = vld [vmem:[#allocation15 + $0x2f0] sm:$0xff]
          %v1939 = vld [vmem:[#allocation15 + $0x2f8] sm:$0xff]
          %v1940 = vld [vmem:[%s10] sm:$0xf]
          %v1941 = vpack.c.bf16 %v1322, %v1322
          %v1942 = vpack.c.bf16 %v1839, %v1839
          %v1943 = vpack.c.bf16 %v1841, %v1841
          %v1945 = vlaneseq
          %v1946 = vshrl.u32 %v1945, 7
          %v1947 = vsub.s32 0, %v1946
          %v1948 = vrot.slane %v1940, %v1947
          %v1949 = vlaneseq
          %v1950 = vshrl.u32 %v1949, 7
          %v1951 = vsub.s32 1, %v1950
          %v1952 = vrot.slane %v1940, %v1951
          %v1953 = vlaneseq
          %v1954 = vshrl.u32 %v1953, 7
          %v1955 = vsub.s32 2, %v1954
          %v1956 = vrot.slane %v1940, %v1955
          %v1957 = vlaneseq
          %v1958 = vshrl.u32 %v1957, 7
          %v1959 = vsub.s32 3, %v1958
          %v1960 = vrot.slane %v1940, %v1959
          %v2061 = vunpack.c.l.b16 %v1844
          %v2062 = vunpack.c.h.b16 %v1844
          %v2063 = vunpack.c.l.b16 %v1845
          %v2064 = vunpack.c.h.b16 %v1845
          %v2065 = vunpack.c.l.b16 %v1846
          %v2066 = vunpack.c.h.b16 %v1846
          %v2067 = vunpack.c.l.b16 %v1847
          %v2068 = vunpack.c.h.b16 %v1847
          %v2069 = vunpack.c.l.b16 %v1848
          %v2070 = vunpack.c.h.b16 %v1848
          %v2071 = vunpack.c.l.b16 %v1849
          %v2072 = vunpack.c.h.b16 %v1849
          %v2073 = vunpack.c.l.b16 %v1850
          %v2074 = vunpack.c.h.b16 %v1850
          %v2075 = vunpack.c.l.b16 %v1851
          %v2076 = vunpack.c.h.b16 %v1851
          %v2077 = vunpack.c.l.b16 %v1852
          %v2078 = vunpack.c.h.b16 %v1852
          %v2079 = vunpack.c.l.b16 %v1853
          %v2080 = vunpack.c.h.b16 %v1853
          %v2081 = vunpack.c.l.b16 %v1854
          %v2082 = vunpack.c.h.b16 %v1854
          %v2083 = vunpack.c.l.b16 %v1855
          %v2084 = vunpack.c.h.b16 %v1855
          %v2085 = vunpack.c.l.b16 %v1856
          %v2086 = vunpack.c.h.b16 %v1856
          %v2087 = vunpack.c.l.b16 %v1857
          %v2088 = vunpack.c.h.b16 %v1857
          %v2089 = vunpack.c.l.b16 %v1858
          %v2090 = vunpack.c.h.b16 %v1858
          %v2091 = vunpack.c.l.b16 %v1859
          %v2092 = vunpack.c.h.b16 %v1859
          %v2093 = vunpack.c.l.b16 %v1860
          %v2094 = vunpack.c.h.b16 %v1860
          %v2095 = vunpack.c.l.b16 %v1861
          %v2096 = vunpack.c.h.b16 %v1861
          %v2097 = vunpack.c.l.b16 %v1862
          %v2098 = vunpack.c.h.b16 %v1862
          %v2099 = vunpack.c.l.b16 %v1863
          %v2100 = vunpack.c.h.b16 %v1863
          %v2101 = vunpack.c.l.b16 %v1864
          %v2102 = vunpack.c.h.b16 %v1864
          %v2103 = vunpack.c.l.b16 %v1865
          %v2104 = vunpack.c.h.b16 %v1865
          %v2105 = vunpack.c.l.b16 %v1866
          %v2106 = vunpack.c.h.b16 %v1866
          %v2107 = vunpack.c.l.b16 %v1867
          %v2108 = vunpack.c.h.b16 %v1867
          %v2109 = vunpack.c.l.b16 %v1868
          %v2110 = vunpack.c.h.b16 %v1868
          %v2111 = vunpack.c.l.b16 %v1869
          %v2112 = vunpack.c.h.b16 %v1869
          %v2113 = vunpack.c.l.b16 %v1870
          %v2114 = vunpack.c.h.b16 %v1870
          %v2115 = vunpack.c.l.b16 %v1871
          %v2116 = vunpack.c.h.b16 %v1871
          %v2117 = vunpack.c.l.b16 %v1872
          %v2118 = vunpack.c.h.b16 %v1872
          %v2119 = vunpack.c.l.b16 %v1873
          %v2120 = vunpack.c.h.b16 %v1873
          %v2121 = vunpack.c.l.b16 %v1874
          %v2122 = vunpack.c.h.b16 %v1874
          %v2123 = vunpack.c.l.b16 %v1875
          %v2124 = vunpack.c.h.b16 %v1875
          %v2125 = vunpack.c.l.b16 %v1876
          %v2126 = vunpack.c.h.b16 %v1876
          %v2127 = vunpack.c.l.b16 %v1877
          %v2128 = vunpack.c.h.b16 %v1877
          %v2129 = vunpack.c.l.b16 %v1878
          %v2130 = vunpack.c.h.b16 %v1878
          %v2131 = vunpack.c.l.b16 %v1879
          %v2132 = vunpack.c.h.b16 %v1879
          %v2133 = vunpack.c.l.b16 %v1880
          %v2134 = vunpack.c.h.b16 %v1880
          %v2135 = vunpack.c.l.b16 %v1881
          %v2136 = vunpack.c.h.b16 %v1881
          %v2137 = vunpack.c.l.b16 %v1882
          %v2138 = vunpack.c.h.b16 %v1882
          %v2139 = vunpack.c.l.b16 %v1883
          %v2140 = vunpack.c.h.b16 %v1883
          %v2141 = vunpack.c.l.b16 %v1884
          %v2142 = vunpack.c.h.b16 %v1884
          %v2143 = vunpack.c.l.b16 %v1885
          %v2144 = vunpack.c.h.b16 %v1885
          %v2145 = vunpack.c.l.b16 %v1886
          %v2146 = vunpack.c.h.b16 %v1886
          %v2147 = vunpack.c.l.b16 %v1887
          %v2148 = vunpack.c.h.b16 %v1887
          %v2149 = vunpack.c.l.b16 %v1888
          %v2150 = vunpack.c.h.b16 %v1888
          %v2151 = vunpack.c.l.b16 %v1889
          %v2152 = vunpack.c.h.b16 %v1889
          %v2153 = vunpack.c.l.b16 %v1890
          %v2154 = vunpack.c.h.b16 %v1890
          %v2155 = vunpack.c.l.b16 %v1891
          %v2156 = vunpack.c.h.b16 %v1891
          %v2157 = vunpack.c.l.b16 %v1892
          %v2158 = vunpack.c.h.b16 %v1892
          %v2159 = vunpack.c.l.b16 %v1893
          %v2160 = vunpack.c.h.b16 %v1893
          %v2161 = vunpack.c.l.b16 %v1894
          %v2162 = vunpack.c.h.b16 %v1894
          %v2163 = vunpack.c.l.b16 %v1895
          %v2164 = vunpack.c.h.b16 %v1895
          %v2165 = vunpack.c.l.b16 %v1896
          %v2166 = vunpack.c.h.b16 %v1896
          %v2167 = vunpack.c.l.b16 %v1897
          %v2168 = vunpack.c.h.b16 %v1897
          %v2169 = vunpack.c.l.b16 %v1898
          %v2170 = vunpack.c.h.b16 %v1898
          %v2171 = vunpack.c.l.b16 %v1899
          %v2172 = vunpack.c.h.b16 %v1899
          %v2173 = vunpack.c.l.b16 %v1900
          %v2174 = vunpack.c.h.b16 %v1900
          %v2175 = vunpack.c.l.b16 %v1901
          %v2176 = vunpack.c.h.b16 %v1901
          %v2177 = vunpack.c.l.b16 %v1902
          %v2178 = vunpack.c.h.b16 %v1902
          %v2179 = vunpack.c.l.b16 %v1903
          %v2180 = vunpack.c.h.b16 %v1903
          %v2181 = vunpack.c.l.b16 %v1904
          %v2182 = vunpack.c.h.b16 %v1904
          %v2183 = vunpack.c.l.b16 %v1905
          %v2184 = vunpack.c.h.b16 %v1905
          %v2185 = vunpack.c.l.b16 %v1906
          %v2186 = vunpack.c.h.b16 %v1906
          %v2187 = vunpack.c.l.b16 %v1907
          %v2188 = vunpack.c.h.b16 %v1907
          %v2189 = vunpack.c.l.b16 %v1908
          %v2190 = vunpack.c.h.b16 %v1908
          %v2191 = vunpack.c.l.b16 %v1909
          %v2192 = vunpack.c.h.b16 %v1909
          %v2193 = vunpack.c.l.b16 %v1910
          %v2194 = vunpack.c.h.b16 %v1910
          %v2195 = vunpack.c.l.b16 %v1911
          %v2196 = vunpack.c.h.b16 %v1911
          %v2197 = vunpack.c.l.b16 %v1912
          %v2198 = vunpack.c.h.b16 %v1912
          %v2199 = vunpack.c.l.b16 %v1913
          %v2200 = vunpack.c.h.b16 %v1913
          %v2201 = vunpack.c.l.b16 %v1914
          %v2202 = vunpack.c.h.b16 %v1914
          %v2203 = vunpack.c.l.b16 %v1915
          %v2204 = vunpack.c.h.b16 %v1915
          %v2205 = vunpack.c.l.b16 %v1916
          %v2206 = vunpack.c.h.b16 %v1916
          %v2207 = vunpack.c.l.b16 %v1917
          %v2208 = vunpack.c.h.b16 %v1917
          %v2209 = vunpack.c.l.b16 %v1918
          %v2210 = vunpack.c.h.b16 %v1918
          %v2211 = vunpack.c.l.b16 %v1919
          %v2212 = vunpack.c.h.b16 %v1919
          %v2213 = vunpack.c.l.b16 %v1920
          %v2214 = vunpack.c.h.b16 %v1920
          %v2215 = vunpack.c.l.b16 %v1921
          %v2216 = vunpack.c.h.b16 %v1921
          %v2217 = vunpack.c.l.b16 %v1922
          %v2218 = vunpack.c.h.b16 %v1922
          %v2219 = vunpack.c.l.b16 %v1923
          %v2220 = vunpack.c.h.b16 %v1923
          %v2221 = vunpack.c.l.b16 %v1924
          %v2222 = vunpack.c.h.b16 %v1924
          %v2223 = vunpack.c.l.b16 %v1925
          %v2224 = vunpack.c.h.b16 %v1925
          %v2225 = vunpack.c.l.b16 %v1926
          %v2226 = vunpack.c.h.b16 %v1926
          %v2227 = vunpack.c.l.b16 %v1927
          %v2228 = vunpack.c.h.b16 %v1927
          %v2229 = vunpack.c.l.b16 %v1928
          %v2230 = vunpack.c.h.b16 %v1928
          %v2231 = vunpack.c.l.b16 %v1929
          %v2232 = vunpack.c.h.b16 %v1929
          %v2233 = vunpack.c.l.b16 %v1930
          %v2234 = vunpack.c.h.b16 %v1930
          %v2235 = vunpack.c.l.b16 %v1931
          %v2236 = vunpack.c.h.b16 %v1931
          %v2237 = vunpack.c.l.b16 %v1932
          %v2238 = vunpack.c.h.b16 %v1932
          %v2239 = vunpack.c.l.b16 %v1933
          %v2240 = vunpack.c.h.b16 %v1933
          %v2241 = vunpack.c.l.b16 %v1934
          %v2242 = vunpack.c.h.b16 %v1934
          %v2243 = vunpack.c.l.b16 %v1935
          %v2244 = vunpack.c.h.b16 %v1935
          %v2245 = vunpack.c.l.b16 %v1936
          %v2246 = vunpack.c.h.b16 %v1936
          %v2247 = vunpack.c.l.b16 %v1937
          %v2248 = vunpack.c.h.b16 %v1937
          %v2249 = vunpack.c.l.b16 %v1938
          %v2250 = vunpack.c.h.b16 %v1938
          %v2251 = vunpack.c.l.b16 %v1939
          %v2252 = vunpack.c.h.b16 %v1939
          %v2253 = vpack.c.b16 %v2065, %v2061
          %v2254 = vpack.c.b16 %v2066, %v2062
          %v2255 = vpack.c.b16 %v2067, %v2063
          %v2256 = vpack.c.b16 %v2068, %v2064
          %v2257 = vpack.c.b16 %v2073, %v2069
          %v2258 = vpack.c.b16 %v2074, %v2070
          %v2259 = vpack.c.b16 %v2075, %v2071
          %v2260 = vpack.c.b16 %v2076, %v2072
          %v2261 = vpack.c.b16 %v2081, %v2077
          %v2262 = vpack.c.b16 %v2082, %v2078
          %v2263 = vpack.c.b16 %v2083, %v2079
          %v2264 = vpack.c.b16 %v2084, %v2080
          %v2265 = vpack.c.b16 %v2089, %v2085
          %v2266 = vpack.c.b16 %v2090, %v2086
          %v2267 = vpack.c.b16 %v2091, %v2087
          %v2268 = vpack.c.b16 %v2092, %v2088
          %v2269 = vpack.c.b16 %v2097, %v2093
          %v2270 = vpack.c.b16 %v2098, %v2094
          %v2271 = vpack.c.b16 %v2099, %v2095
          %v2272 = vpack.c.b16 %v2100, %v2096
          %v2273 = vpack.c.b16 %v2105, %v2101
          %v2274 = vpack.c.b16 %v2106, %v2102
          %v2275 = vpack.c.b16 %v2107, %v2103
          %v2276 = vpack.c.b16 %v2108, %v2104
          %v2277 = vpack.c.b16 %v2113, %v2109
          %v2278 = vpack.c.b16 %v2114, %v2110
          %v2279 = vpack.c.b16 %v2115, %v2111
          %v2280 = vpack.c.b16 %v2116, %v2112
          %v2281 = vpack.c.b16 %v2121, %v2117
          %v2282 = vpack.c.b16 %v2122, %v2118
          %v2283 = vpack.c.b16 %v2123, %v2119
          %v2284 = vpack.c.b16 %v2124, %v2120
          %v2285 = vpack.c.b16 %v2129, %v2125
          %v2286 = vpack.c.b16 %v2130, %v2126
          %v2287 = vpack.c.b16 %v2131, %v2127
          %v2288 = vpack.c.b16 %v2132, %v2128
          %v2289 = vpack.c.b16 %v2137, %v2133
          %v2290 = vpack.c.b16 %v2138, %v2134
          %v2291 = vpack.c.b16 %v2139, %v2135
          %v2292 = vpack.c.b16 %v2140, %v2136
          %v2293 = vpack.c.b16 %v2145, %v2141
          %v2294 = vpack.c.b16 %v2146, %v2142
          %v2295 = vpack.c.b16 %v2147, %v2143
          %v2296 = vpack.c.b16 %v2148, %v2144
          %v2297 = vpack.c.b16 %v2153, %v2149
          %v2298 = vpack.c.b16 %v2154, %v2150
          %v2299 = vpack.c.b16 %v2155, %v2151
          %v2300 = vpack.c.b16 %v2156, %v2152
          %v2301 = vpack.c.b16 %v2161, %v2157
          %v2302 = vpack.c.b16 %v2162, %v2158
          %v2303 = vpack.c.b16 %v2163, %v2159
          %v2304 = vpack.c.b16 %v2164, %v2160
          %v2305 = vpack.c.b16 %v2169, %v2165
          %v2306 = vpack.c.b16 %v2170, %v2166
          %v2307 = vpack.c.b16 %v2171, %v2167
          %v2308 = vpack.c.b16 %v2172, %v2168
          %v2309 = vpack.c.b16 %v2177, %v2173
          %v2310 = vpack.c.b16 %v2178, %v2174
          %v2311 = vpack.c.b16 %v2179, %v2175
          %v2312 = vpack.c.b16 %v2180, %v2176
          %v2313 = vpack.c.b16 %v2185, %v2181
          %v2314 = vpack.c.b16 %v2186, %v2182
          %v2315 = vpack.c.b16 %v2187, %v2183
          %v2316 = vpack.c.b16 %v2188, %v2184
          %v2317 = vpack.c.b16 %v2193, %v2189
          %v2318 = vpack.c.b16 %v2194, %v2190
          %v2319 = vpack.c.b16 %v2195, %v2191
          %v2320 = vpack.c.b16 %v2196, %v2192
          %v2321 = vpack.c.b16 %v2201, %v2197
          %v2322 = vpack.c.b16 %v2202, %v2198
          %v2323 = vpack.c.b16 %v2203, %v2199
          %v2324 = vpack.c.b16 %v2204, %v2200
          %v2325 = vpack.c.b16 %v2209, %v2205
          %v2326 = vpack.c.b16 %v2210, %v2206
          %v2327 = vpack.c.b16 %v2211, %v2207
          %v2328 = vpack.c.b16 %v2212, %v2208
          %v2329 = vpack.c.b16 %v2217, %v2213
          %v2330 = vpack.c.b16 %v2218, %v2214
          %v2331 = vpack.c.b16 %v2219, %v2215
          %v2332 = vpack.c.b16 %v2220, %v2216
          %v2333 = vpack.c.b16 %v2225, %v2221
          %v2334 = vpack.c.b16 %v2226, %v2222
          %v2335 = vpack.c.b16 %v2227, %v2223
          %v2336 = vpack.c.b16 %v2228, %v2224
          %v2337 = vpack.c.b16 %v2233, %v2229
          %v2338 = vpack.c.b16 %v2234, %v2230
          %v2339 = vpack.c.b16 %v2235, %v2231
          %v2340 = vpack.c.b16 %v2236, %v2232
          %v2341 = vpack.c.b16 %v2241, %v2237
          %v2342 = vpack.c.b16 %v2242, %v2238
          %v2343 = vpack.c.b16 %v2243, %v2239
          %v2344 = vpack.c.b16 %v2244, %v2240
          %v2345 = vpack.c.b16 %v2249, %v2245
          %v2346 = vpack.c.b16 %v2250, %v2246
          %v2347 = vpack.c.b16 %v2251, %v2247
          %v2348 = vpack.c.b16 %v2252, %v2248
          %2445 = vmatprep.subr.bf16.mxu0 %v2254
          %2446 = vmatpush1.bf16.msra.mxu0 %v2253
          %2447 = vmatprep.subr.bf16.mxu0 %v2258
          %2448 = vmatpush1.bf16.msra.mxu0 %v2257
          %2449 = vmatprep.subr.bf16.mxu0 %v2262
          %2450 = vmatpush1.bf16.msra.mxu0 %v2261
          %2451 = vmatprep.subr.bf16.mxu0 %v2266
          %2452 = vmatpush1.bf16.msra.mxu0 %v2265
          %2453 = vmatprep.subr.bf16.mxu0 %v2270
          %2454 = vmatpush1.bf16.msra.mxu0 %v2269
          %2455 = vmatprep.subr.bf16.mxu0 %v2274
          %2456 = vmatpush1.bf16.msra.mxu0 %v2273
          %2457 = vmatprep.subr.bf16.mxu0 %v2278
          %2458 = vmatpush1.bf16.msra.mxu0 %v2277
          %2459 = vmatprep.subr.bf16.mxu0 %v2282
          %2460 = vmatpush1.bf16.msra.mxu0 %v2281
          %2461 = vmatprep.subr.bf16.mxu0 %v2286
          %2462 = vmatpush1.bf16.msra.mxu0 %v2285
          %2463 = vmatprep.subr.bf16.mxu0 %v2290
          %2464 = vmatpush1.bf16.msra.mxu0 %v2289
          %2465 = vmatprep.subr.bf16.mxu0 %v2294
          %2466 = vmatpush1.bf16.msra.mxu0 %v2293
          %2467 = vmatprep.subr.bf16.mxu0 %v2298
          %2468 = vmatpush1.bf16.msra.mxu0 %v2297
          %2469 = vmatprep.subr.bf16.mxu0 %v2302
          %2470 = vmatpush1.bf16.msra.mxu0 %v2301
          %2471 = vmatprep.subr.bf16.mxu0 %v2306
          %2472 = vmatpush1.bf16.msra.mxu0 %v2305
          %2473 = vmatprep.subr.bf16.mxu0 %v2310
          %2474 = vmatpush1.bf16.msra.mxu0 %v2309
          %2475 = vmatprep.subr.bf16.mxu0 %v2314
          %2476 = vmatpush1.bf16.msra.mxu0 %v2313
          %2477 = vmatprep.mubr.bf16.mxu0 %v1942
          %2478 = vmatmul.mubr.bf16.gmra.mrb[0].mxu0 %v1941
          %v2479 = vpop.f32.mrb[0].mxu0
          %v2480 = vadd.f32 %v1948, %v2479
          %v2481 = vpop.f32.mrb[0].mxu0
          %v2482 = vadd.f32 %v1952, %v2481
          %v2483 = vpop.f32.mrb[0].mxu0
          %v2484 = vpop.f32.mrb[0].mxu0
          %2485 = vdwg.mxu0
          %2486 = vmatprep.subr.bf16.mxu0 %v2318
          %2487 = vmatpush1.bf16.msra.mxu0 %v2317
          %2488 = vmatprep.subr.bf16.mxu0 %v2322
          %2489 = vmatpush1.bf16.msra.mxu0 %v2321
          %2490 = vmatprep.subr.bf16.mxu0 %v2326
          %2491 = vmatpush1.bf16.msra.mxu0 %v2325
          %2492 = vmatprep.subr.bf16.mxu0 %v2330
          %2493 = vmatpush1.bf16.msra.mxu0 %v2329
          %2494 = vmatprep.subr.bf16.mxu0 %v2334
          %2495 = vmatpush1.bf16.msra.mxu0 %v2333
          %2496 = vmatprep.subr.bf16.mxu0 %v2338
          %2497 = vmatpush1.bf16.msra.mxu0 %v2337
          %2498 = vmatprep.subr.bf16.mxu0 %v2342
          %2499 = vmatpush1.bf16.msra.mxu0 %v2341
          %2500 = vmatprep.subr.bf16.mxu0 %v2346
          %2501 = vmatpush1.bf16.msra.mxu0 %v2345
          %2502 = vmatprep.subr.bf16.mxu0 0
          %2503 = vmatpush1.bf16.msra.mxu0 0
          %2504 = vmatprep.subr.bf16.mxu0 0
          %2505 = vmatpush1.bf16.msra.mxu0 0
          %2506 = vmatprep.subr.bf16.mxu0 0
          %2507 = vmatpush1.bf16.msra.mxu0 0
          %2508 = vmatprep.subr.bf16.mxu0 0
          %2509 = vmatpush1.bf16.msra.mxu0 0
          %2510 = vmatprep.subr.bf16.mxu0 0
          %2511 = vmatpush1.bf16.msra.mxu0 0
          %2512 = vmatprep.subr.bf16.mxu0 0
          %2513 = vmatpush1.bf16.msra.mxu0 0
          %2514 = vmatprep.subr.bf16.mxu0 0
          %2515 = vmatpush1.bf16.msra.mxu0 0
          %2516 = vmatprep.subr.bf16.mxu0 0
          %2517 = vmatpush1.bf16.msra.mxu0 0
          %2518 = vmatprep.mubr.bf16.mxu0 0
          %2519 = vmatmul.mubr.bf16.gmra.mrb[0].mxu0 %v1943
          %v2520 = vpop.f32.mrb[0].mxu0
          %v2521 = vadd.f32 %v2480, %v2520
          %v2522 = vpop.f32.mrb[0].mxu0
          %v2523 = vadd.f32 %v2482, %v2522
          %v2524 = vpop.f32.mrb[0].mxu0
          %v2525 = vpop.f32.mrb[0].mxu0
          %2526 = vdwg.mxu0
          %2527 = vmatprep.subr.bf16.mxu0 %v2256
          %2528 = vmatpush1.bf16.msra.mxu0 %v2255
          %2529 = vmatprep.subr.bf16.mxu0 %v2260
          %2530 = vmatpush1.bf16.msra.mxu0 %v2259
          %2531 = vmatprep.subr.bf16.mxu0 %v2264
          %2532 = vmatpush1.bf16.msra.mxu0 %v2263
          %2533 = vmatprep.subr.bf16.mxu0 %v2268
          %2534 = vmatpush1.bf16.msra.mxu0 %v2267
          %2535 = vmatprep.subr.bf16.mxu0 %v2272
          %2536 = vmatpush1.bf16.msra.mxu0 %v2271
          %2537 = vmatprep.subr.bf16.mxu0 %v2276
          %2538 = vmatpush1.bf16.msra.mxu0 %v2275
          %2539 = vmatprep.subr.bf16.mxu0 %v2280
          %2540 = vmatpush1.bf16.msra.mxu0 %v2279
          %2541 = vmatprep.subr.bf16.mxu0 %v2284
          %2542 = vmatpush1.bf16.msra.mxu0 %v2283
          %2543 = vmatprep.subr.bf16.mxu0 %v2288
          %2544 = vmatpush1.bf16.msra.mxu0 %v2287
          %2545 = vmatprep.subr.bf16.mxu0 %v2292
          %2546 = vmatpush1.bf16.msra.mxu0 %v2291
          %2547 = vmatprep.subr.bf16.mxu0 %v2296
          %2548 = vmatpush1.bf16.msra.mxu0 %v2295
          %2549 = vmatprep.subr.bf16.mxu0 %v2300
          %2550 = vmatpush1.bf16.msra.mxu0 %v2299
          %2551 = vmatprep.subr.bf16.mxu0 %v2304
          %2552 = vmatpush1.bf16.msra.mxu0 %v2303
          %2553 = vmatprep.subr.bf16.mxu0 %v2308
          %2554 = vmatpush1.bf16.msra.mxu0 %v2307
          %2555 = vmatprep.subr.bf16.mxu0 %v2312
          %2556 = vmatpush1.bf16.msra.mxu0 %v2311
          %2557 = vmatprep.subr.bf16.mxu0 %v2316
          %2558 = vmatpush1.bf16.msra.mxu0 %v2315
          %2559 = vmatprep.mubr.bf16.mxu0 %v1942
          %2560 = vmatmul.mubr.bf16.gmra.mrb[0].mxu0 %v1941
          %v2561 = vpop.f32.mrb[0].mxu0
          %v2562 = vadd.f32 %v1956, %v2561
          %v2563 = vpop.f32.mrb[0].mxu0
          %v2564 = vadd.f32 %v1960, %v2563
          %v2565 = vpop.f32.mrb[0].mxu0
          %v2566 = vpop.f32.mrb[0].mxu0
          %2567 = vdwg.mxu0
          %2568 = vmatprep.subr.bf16.mxu0 %v2320
          %2569 = vmatpush1.bf16.msra.mxu0 %v2319
          %2570 = vmatprep.subr.bf16.mxu0 %v2324
          %2571 = vmatpush1.bf16.msra.mxu0 %v2323
          %2572 = vmatprep.subr.bf16.mxu0 %v2328
          %2573 = vmatpush1.bf16.msra.mxu0 %v2327
          %2574 = vmatprep.subr.bf16.mxu0 %v2332
          %2575 = vmatpush1.bf16.msra.mxu0 %v2331
          %2576 = vmatprep.subr.bf16.mxu0 %v2336
          %2577 = vmatpush1.bf16.msra.mxu0 %v2335
          %2578 = vmatprep.subr.bf16.mxu0 %v2340
          %2579 = vmatpush1.bf16.msra.mxu0 %v2339
          %2580 = vmatprep.subr.bf16.mxu0 %v2344
          %2581 = vmatpush1.bf16.msra.mxu0 %v2343
          %2582 = vmatprep.subr.bf16.mxu0 %v2348
          %2583 = vmatpush1.bf16.msra.mxu0 %v2347
          %2584 = vmatprep.subr.bf16.mxu0 0
          %2585 = vmatpush1.bf16.msra.mxu0 0
          %2586 = vmatprep.subr.bf16.mxu0 0
          %2587 = vmatpush1.bf16.msra.mxu0 0
          %2588 = vmatprep.subr.bf16.mxu0 0
          %2589 = vmatpush1.bf16.msra.mxu0 0
          %2590 = vmatprep.subr.bf16.mxu0 0
          %2591 = vmatpush1.bf16.msra.mxu0 0
          %2592 = vmatprep.subr.bf16.mxu0 0
          %2593 = vmatpush1.bf16.msra.mxu0 0
          %2594 = vmatprep.subr.bf16.mxu0 0
          %2595 = vmatpush1.bf16.msra.mxu0 0
          %2596 = vmatprep.subr.bf16.mxu0 0
          %2597 = vmatpush1.bf16.msra.mxu0 0
          %2598 = vmatprep.subr.bf16.mxu0 0
          %2599 = vmatpush1.bf16.msra.mxu0 0
          %2600 = vmatprep.mubr.bf16.mxu0 0
          %2601 = vmatmul.mubr.bf16.gmra.mrb[0].mxu0 %v1943
          %v2602 = vpop.f32.mrb[0].mxu0
          %v2603 = vadd.f32 %v2562, %v2602
          %v2604 = vpop.f32.mrb[0].mxu0
          %v2605 = vadd.f32 %v2564, %v2604
          %v2606 = vpop.f32.mrb[0].mxu0
          %v2607 = vpop.f32.mrb[0].mxu0
          %2608 = vdwg.mxu0
          %v2609 = vxor.u32 %v2521, 2147483648
          %v2610 = vmul.f32 %v2609, 1.442695
          %v2611 = vpow.pop %v2610
          %v2612 = vadd.f32 %v2611, 1.0
          %v2613 = vrcp.pop %v2612
          %v2614 = vmul.f32 1.0, %v2613
          %v2615 = vxor.u32 %v2523, 2147483648
          %v2616 = vmul.f32 %v2615, 1.442695
          %v2617 = vpow.pop %v2616
          %v2618 = vadd.f32 %v2617, 1.0
          %v2619 = vrcp.pop %v2618
          %v2620 = vmul.f32 1.0, %v2619
          %v2621 = vtanh.pop %v2603
          %v2622 = vxor.u32 %v2605, 2147483648
          %v2623 = vmul.f32 %v2622, 1.442695
          %v2624 = vpow.pop %v2623
          %v2625 = vadd.f32 %v2624, 1.0
          %v2626 = vrcp.pop %v2625
          %v2627 = vmul.f32 1.0, %v2626
          %v2628 = vmul.f32 %v2620, %v1843
          %v2629 = vmul.f32 %v2614, %v2621
          %v2630 = vadd.f32 %v2628, %v2629
          %v2631 = vtanh.pop %v2630
          %v2632 = vmul.f32 %v2627, %v2631
          %s2633 = scalar_lea.vmem [#allocation7], 24
          %v2634 = vld [vmem:[%s2633] sm:$0xff]
          %s2635 = scalar_lea.vmem [#allocation10], 24
          %v2636 = vld [vmem:[%s2635] sm:$0xff]
          %v2637 = vld [vmem:[#allocation16] sm:$0xff]
          %v2638 = vld [vmem:[#allocation16 + $0x8] sm:$0xff]
          %v2639 = vld [vmem:[#allocation16 + $0x10] sm:$0xff]
          %v2640 = vld [vmem:[#allocation16 + $0x18] sm:$0xff]
          %v2641 = vld [vmem:[#allocation16 + $0x20] sm:$0xff]
          %v2642 = vld [vmem:[#allocation16 + $0x28] sm:$0xff]
          %v2643 = vld [vmem:[#allocation16 + $0x30] sm:$0xff]
          %v2644 = vld [vmem:[#allocation16 + $0x38] sm:$0xff]
          %v2645 = vld [vmem:[#allocation16 + $0x40] sm:$0xff]
          %v2646 = vld [vmem:[#allocation16 + $0x48] sm:$0xff]
          %v2647 = vld [vmem:[#allocation16 + $0x50] sm:$0xff]
          %v2648 = vld [vmem:[#allocation16 + $0x58] sm:$0xff]
          %v2649 = vld [vmem:[#allocation16 + $0x60] sm:$0xff]
          %v2650 = vld [vmem:[#allocation16 + $0x68] sm:$0xff]
          %v2651 = vld [vmem:[#allocation16 + $0x70] sm:$0xff]
          %v2652 = vld [vmem:[#allocation16 + $0x78] sm:$0xff]
          %v2653 = vld [vmem:[#allocation16 + $0x80] sm:$0xff]
          %v2654 = vld [vmem:[#allocation16 + $0x88] sm:$0xff]
          %v2655 = vld [vmem:[#allocation16 + $0x90] sm:$0xff]
          %v2656 = vld [vmem:[#allocation16 + $0x98] sm:$0xff]
          %v2657 = vld [vmem:[#allocation16 + $0xa0] sm:$0xff]
          %v2658 = vld [vmem:[#allocation16 + $0xa8] sm:$0xff]
          %v2659 = vld [vmem:[#allocation16 + $0xb0] sm:$0xff]
          %v2660 = vld [vmem:[#allocation16 + $0xb8] sm:$0xff]
          %v2661 = vld [vmem:[#allocation16 + $0xc0] sm:$0xff]
          %v2662 = vld [vmem:[#allocation16 + $0xc8] sm:$0xff]
          %v2663 = vld [vmem:[#allocation16 + $0xd0] sm:$0xff]
          %v2664 = vld [vmem:[#allocation16 + $0xd8] sm:$0xff]
          %v2665 = vld [vmem:[#allocation16 + $0xe0] sm:$0xff]
          %v2666 = vld [vmem:[#allocation16 + $0xe8] sm:$0xff]
          %v2667 = vld [vmem:[#allocation16 + $0xf0] sm:$0xff]
          %v2668 = vld [vmem:[#allocation16 + $0xf8] sm:$0xff]
          %v2669 = vld [vmem:[#allocation16 + $0x100] sm:$0xff]
          %v2670 = vld [vmem:[#allocation16 + $0x108] sm:$0xff]
          %v2671 = vld [vmem:[#allocation16 + $0x110] sm:$0xff]
          %v2672 = vld [vmem:[#allocation16 + $0x118] sm:$0xff]
          %v2673 = vld [vmem:[#allocation16 + $0x120] sm:$0xff]
          %v2674 = vld [vmem:[#allocation16 + $0x128] sm:$0xff]
          %v2675 = vld [vmem:[#allocation16 + $0x130] sm:$0xff]
          %v2676 = vld [vmem:[#allocation16 + $0x138] sm:$0xff]
          %v2677 = vld [vmem:[#allocation16 + $0x140] sm:$0xff]
          %v2678 = vld [vmem:[#allocation16 + $0x148] sm:$0xff]
          %v2679 = vld [vmem:[#allocation16 + $0x150] sm:$0xff]
          %v2680 = vld [vmem:[#allocation16 + $0x158] sm:$0xff]
          %v2681 = vld [vmem:[#allocation16 + $0x160] sm:$0xff]
          %v2682 = vld [vmem:[#allocation16 + $0x168] sm:$0xff]
          %v2683 = vld [vmem:[#allocation16 + $0x170] sm:$0xff]
          %v2684 = vld [vmem:[#allocation16 + $0x178] sm:$0xff]
          %v2685 = vld [vmem:[#allocation16 + $0x180] sm:$0xff]
          %v2686 = vld [vmem:[#allocation16 + $0x188] sm:$0xff]
          %v2687 = vld [vmem:[#allocation16 + $0x190] sm:$0xff]
          %v2688 = vld [vmem:[#allocation16 + $0x198] sm:$0xff]
          %v2689 = vld [vmem:[#allocation16 + $0x1a0] sm:$0xff]
          %v2690 = vld [vmem:[#allocation16 + $0x1a8] sm:$0xff]
          %v2691 = vld [vmem:[#allocation16 + $0x1b0] sm:$0xff]
          %v2692 = vld [vmem:[#allocation16 + $0x1b8] sm:$0xff]
          %v2693 = vld [vmem:[#allocation16 + $0x1c0] sm:$0xff]
          %v2694 = vld [vmem:[#allocation16 + $0x1c8] sm:$0xff]
          %v2695 = vld [vmem:[#allocation16 + $0x1d0] sm:$0xff]
          %v2696 = vld [vmem:[#allocation16 + $0x1d8] sm:$0xff]
          %v2697 = vld [vmem:[#allocation16 + $0x1e0] sm:$0xff]
          %v2698 = vld [vmem:[#allocation16 + $0x1e8] sm:$0xff]
          %v2699 = vld [vmem:[#allocation16 + $0x1f0] sm:$0xff]
          %v2700 = vld [vmem:[#allocation16 + $0x1f8] sm:$0xff]
          %v2701 = vld [vmem:[#allocation16 + $0x200] sm:$0xff]
          %v2702 = vld [vmem:[#allocation16 + $0x208] sm:$0xff]
          %v2703 = vld [vmem:[#allocation16 + $0x210] sm:$0xff]
          %v2704 = vld [vmem:[#allocation16 + $0x218] sm:$0xff]
          %v2705 = vld [vmem:[#allocation16 + $0x220] sm:$0xff]
          %v2706 = vld [vmem:[#allocation16 + $0x228] sm:$0xff]
          %v2707 = vld [vmem:[#allocation16 + $0x230] sm:$0xff]
          %v2708 = vld [vmem:[#allocation16 + $0x238] sm:$0xff]
          %v2709 = vld [vmem:[#allocation16 + $0x240] sm:$0xff]
          %v2710 = vld [vmem:[#allocation16 + $0x248] sm:$0xff]
          %v2711 = vld [vmem:[#allocation16 + $0x250] sm:$0xff]
          %v2712 = vld [vmem:[#allocation16 + $0x258] sm:$0xff]
          %v2713 = vld [vmem:[#allocation16 + $0x260] sm:$0xff]
          %v2714 = vld [vmem:[#allocation16 + $0x268] sm:$0xff]
          %v2715 = vld [vmem:[#allocation16 + $0x270] sm:$0xff]
          %v2716 = vld [vmem:[#allocation16 + $0x278] sm:$0xff]
          %v2717 = vld [vmem:[#allocation16 + $0x280] sm:$0xff]
          %v2718 = vld [vmem:[#allocation16 + $0x288] sm:$0xff]
          %v2719 = vld [vmem:[#allocation16 + $0x290] sm:$0xff]
          %v2720 = vld [vmem:[#allocation16 + $0x298] sm:$0xff]
          %v2721 = vld [vmem:[#allocation16 + $0x2a0] sm:$0xff]
          %v2722 = vld [vmem:[#allocation16 + $0x2a8] sm:$0xff]
          %v2723 = vld [vmem:[#allocation16 + $0x2b0] sm:$0xff]
          %v2724 = vld [vmem:[#allocation16 + $0x2b8] sm:$0xff]
          %v2725 = vld [vmem:[#allocation16 + $0x2c0] sm:$0xff]
          %v2726 = vld [vmem:[#allocation16 + $0x2c8] sm:$0xff]
          %v2727 = vld [vmem:[#allocation16 + $0x2d0] sm:$0xff]
          %v2728 = vld [vmem:[#allocation16 + $0x2d8] sm:$0xff]
          %v2729 = vld [vmem:[#allocation16 + $0x2e0] sm:$0xff]
          %v2730 = vld [vmem:[#allocation16 + $0x2e8] sm:$0xff]
          %v2731 = vld [vmem:[#allocation16 + $0x2f0] sm:$0xff]
          %v2732 = vld [vmem:[#allocation16 + $0x2f8] sm:$0xff]
          %v2733 = vld [vmem:[%s11] sm:$0xf]
          %v2734 = vpack.c.bf16 %v2634, %v2634
          %v2736 = vlaneseq
          %v2737 = vshrl.u32 %v2736, 7
          %v2738 = vsub.s32 0, %v2737
          %v2739 = vrot.slane %v2733, %v2738
          %v2740 = vlaneseq
          %v2741 = vshrl.u32 %v2740, 7
          %v2742 = vsub.s32 1, %v2741
          %v2743 = vrot.slane %v2733, %v2742
          %v2744 = vlaneseq
          %v2745 = vshrl.u32 %v2744, 7
          %v2746 = vsub.s32 2, %v2745
          %v2747 = vrot.slane %v2733, %v2746
          %v2748 = vlaneseq
          %v2749 = vshrl.u32 %v2748, 7
          %v2750 = vsub.s32 3, %v2749
          %v2751 = vrot.slane %v2733, %v2750
          %v2852 = vunpack.c.l.b16 %v2637
          %v2853 = vunpack.c.h.b16 %v2637
          %v2854 = vunpack.c.l.b16 %v2638
          %v2855 = vunpack.c.h.b16 %v2638
          %v2856 = vunpack.c.l.b16 %v2639
          %v2857 = vunpack.c.h.b16 %v2639
          %v2858 = vunpack.c.l.b16 %v2640
          %v2859 = vunpack.c.h.b16 %v2640
          %v2860 = vunpack.c.l.b16 %v2641
          %v2861 = vunpack.c.h.b16 %v2641
          %v2862 = vunpack.c.l.b16 %v2642
          %v2863 = vunpack.c.h.b16 %v2642
          %v2864 = vunpack.c.l.b16 %v2643
          %v2865 = vunpack.c.h.b16 %v2643
          %v2866 = vunpack.c.l.b16 %v2644
          %v2867 = vunpack.c.h.b16 %v2644
          %v2868 = vunpack.c.l.b16 %v2645
          %v2869 = vunpack.c.h.b16 %v2645
          %v2870 = vunpack.c.l.b16 %v2646
          %v2871 = vunpack.c.h.b16 %v2646
          %v2872 = vunpack.c.l.b16 %v2647
          %v2873 = vunpack.c.h.b16 %v2647
          %v2874 = vunpack.c.l.b16 %v2648
          %v2875 = vunpack.c.h.b16 %v2648
          %v2876 = vunpack.c.l.b16 %v2649
          %v2877 = vunpack.c.h.b16 %v2649
          %v2878 = vunpack.c.l.b16 %v2650
          %v2879 = vunpack.c.h.b16 %v2650
          %v2880 = vunpack.c.l.b16 %v2651
          %v2881 = vunpack.c.h.b16 %v2651
          %v2882 = vunpack.c.l.b16 %v2652
          %v2883 = vunpack.c.h.b16 %v2652
          %v2884 = vunpack.c.l.b16 %v2653
          %v2885 = vunpack.c.h.b16 %v2653
          %v2886 = vunpack.c.l.b16 %v2654
          %v2887 = vunpack.c.h.b16 %v2654
          %v2888 = vunpack.c.l.b16 %v2655
          %v2889 = vunpack.c.h.b16 %v2655
          %v2890 = vunpack.c.l.b16 %v2656
          %v2891 = vunpack.c.h.b16 %v2656
          %v2892 = vunpack.c.l.b16 %v2657
          %v2893 = vunpack.c.h.b16 %v2657
          %v2894 = vunpack.c.l.b16 %v2658
          %v2895 = vunpack.c.h.b16 %v2658
          %v2896 = vunpack.c.l.b16 %v2659
          %v2897 = vunpack.c.h.b16 %v2659
          %v2898 = vunpack.c.l.b16 %v2660
          %v2899 = vunpack.c.h.b16 %v2660
          %v2900 = vunpack.c.l.b16 %v2661
          %v2901 = vunpack.c.h.b16 %v2661
          %v2902 = vunpack.c.l.b16 %v2662
          %v2903 = vunpack.c.h.b16 %v2662
          %v2904 = vunpack.c.l.b16 %v2663
          %v2905 = vunpack.c.h.b16 %v2663
          %v2906 = vunpack.c.l.b16 %v2664
          %v2907 = vunpack.c.h.b16 %v2664
          %v2908 = vunpack.c.l.b16 %v2665
          %v2909 = vunpack.c.h.b16 %v2665
          %v2910 = vunpack.c.l.b16 %v2666
          %v2911 = vunpack.c.h.b16 %v2666
          %v2912 = vunpack.c.l.b16 %v2667
          %v2913 = vunpack.c.h.b16 %v2667
          %v2914 = vunpack.c.l.b16 %v2668
          %v2915 = vunpack.c.h.b16 %v2668
          %v2916 = vunpack.c.l.b16 %v2669
          %v2917 = vunpack.c.h.b16 %v2669
          %v2918 = vunpack.c.l.b16 %v2670
          %v2919 = vunpack.c.h.b16 %v2670
          %v2920 = vunpack.c.l.b16 %v2671
          %v2921 = vunpack.c.h.b16 %v2671
          %v2922 = vunpack.c.l.b16 %v2672
          %v2923 = vunpack.c.h.b16 %v2672
          %v2924 = vunpack.c.l.b16 %v2673
          %v2925 = vunpack.c.h.b16 %v2673
          %v2926 = vunpack.c.l.b16 %v2674
          %v2927 = vunpack.c.h.b16 %v2674
          %v2928 = vunpack.c.l.b16 %v2675
          %v2929 = vunpack.c.h.b16 %v2675
          %v2930 = vunpack.c.l.b16 %v2676
          %v2931 = vunpack.c.h.b16 %v2676
          %v2932 = vunpack.c.l.b16 %v2677
          %v2933 = vunpack.c.h.b16 %v2677
          %v2934 = vunpack.c.l.b16 %v2678
          %v2935 = vunpack.c.h.b16 %v2678
          %v2936 = vunpack.c.l.b16 %v2679
          %v2937 = vunpack.c.h.b16 %v2679
          %v2938 = vunpack.c.l.b16 %v2680
          %v2939 = vunpack.c.h.b16 %v2680
          %v2940 = vunpack.c.l.b16 %v2681
          %v2941 = vunpack.c.h.b16 %v2681
          %v2942 = vunpack.c.l.b16 %v2682
          %v2943 = vunpack.c.h.b16 %v2682
          %v2944 = vunpack.c.l.b16 %v2683
          %v2945 = vunpack.c.h.b16 %v2683
          %v2946 = vunpack.c.l.b16 %v2684
          %v2947 = vunpack.c.h.b16 %v2684
          %v2948 = vunpack.c.l.b16 %v2685
          %v2949 = vunpack.c.h.b16 %v2685
          %v2950 = vunpack.c.l.b16 %v2686
          %v2951 = vunpack.c.h.b16 %v2686
          %v2952 = vunpack.c.l.b16 %v2687
          %v2953 = vunpack.c.h.b16 %v2687
          %v2954 = vunpack.c.l.b16 %v2688
          %v2955 = vunpack.c.h.b16 %v2688
          %v2956 = vunpack.c.l.b16 %v2689
          %v2957 = vunpack.c.h.b16 %v2689
          %v2958 = vunpack.c.l.b16 %v2690
          %v2959 = vunpack.c.h.b16 %v2690
          %v2960 = vunpack.c.l.b16 %v2691
          %v2961 = vunpack.c.h.b16 %v2691
          %v2962 = vunpack.c.l.b16 %v2692
          %v2963 = vunpack.c.h.b16 %v2692
          %v2964 = vunpack.c.l.b16 %v2693
          %v2965 = vunpack.c.h.b16 %v2693
          %v2966 = vunpack.c.l.b16 %v2694
          %v2967 = vunpack.c.h.b16 %v2694
          %v2968 = vunpack.c.l.b16 %v2695
          %v2969 = vunpack.c.h.b16 %v2695
          %v2970 = vunpack.c.l.b16 %v2696
          %v2971 = vunpack.c.h.b16 %v2696
          %v2972 = vunpack.c.l.b16 %v2697
          %v2973 = vunpack.c.h.b16 %v2697
          %v2974 = vunpack.c.l.b16 %v2698
          %v2975 = vunpack.c.h.b16 %v2698
          %v2976 = vunpack.c.l.b16 %v2699
          %v2977 = vunpack.c.h.b16 %v2699
          %v2978 = vunpack.c.l.b16 %v2700
          %v2979 = vunpack.c.h.b16 %v2700
          %v2980 = vunpack.c.l.b16 %v2701
          %v2981 = vunpack.c.h.b16 %v2701
          %v2982 = vunpack.c.l.b16 %v2702
          %v2983 = vunpack.c.h.b16 %v2702
          %v2984 = vunpack.c.l.b16 %v2703
          %v2985 = vunpack.c.h.b16 %v2703
          %v2986 = vunpack.c.l.b16 %v2704
          %v2987 = vunpack.c.h.b16 %v2704
          %v2988 = vunpack.c.l.b16 %v2705
          %v2989 = vunpack.c.h.b16 %v2705
          %v2990 = vunpack.c.l.b16 %v2706
          %v2991 = vunpack.c.h.b16 %v2706
          %v2992 = vunpack.c.l.b16 %v2707
          %v2993 = vunpack.c.h.b16 %v2707
          %v2994 = vunpack.c.l.b16 %v2708
          %v2995 = vunpack.c.h.b16 %v2708
          %v2996 = vunpack.c.l.b16 %v2709
          %v2997 = vunpack.c.h.b16 %v2709
          %v2998 = vunpack.c.l.b16 %v2710
          %v2999 = vunpack.c.h.b16 %v2710
          %v3000 = vunpack.c.l.b16 %v2711
          %v3001 = vunpack.c.h.b16 %v2711
          %v3002 = vunpack.c.l.b16 %v2712
          %v3003 = vunpack.c.h.b16 %v2712
          %v3004 = vunpack.c.l.b16 %v2713
          %v3005 = vunpack.c.h.b16 %v2713
          %v3006 = vunpack.c.l.b16 %v2714
          %v3007 = vunpack.c.h.b16 %v2714
          %v3008 = vunpack.c.l.b16 %v2715
          %v3009 = vunpack.c.h.b16 %v2715
          %v3010 = vunpack.c.l.b16 %v2716
          %v3011 = vunpack.c.h.b16 %v2716
          %v3012 = vunpack.c.l.b16 %v2717
          %v3013 = vunpack.c.h.b16 %v2717
          %v3014 = vunpack.c.l.b16 %v2718
          %v3015 = vunpack.c.h.b16 %v2718
          %v3016 = vunpack.c.l.b16 %v2719
          %v3017 = vunpack.c.h.b16 %v2719
          %v3018 = vunpack.c.l.b16 %v2720
          %v3019 = vunpack.c.h.b16 %v2720
          %v3020 = vunpack.c.l.b16 %v2721
          %v3021 = vunpack.c.h.b16 %v2721
          %v3022 = vunpack.c.l.b16 %v2722
          %v3023 = vunpack.c.h.b16 %v2722
          %v3024 = vunpack.c.l.b16 %v2723
          %v3025 = vunpack.c.h.b16 %v2723
          %v3026 = vunpack.c.l.b16 %v2724
          %v3027 = vunpack.c.h.b16 %v2724
          %v3028 = vunpack.c.l.b16 %v2725
          %v3029 = vunpack.c.h.b16 %v2725
          %v3030 = vunpack.c.l.b16 %v2726
          %v3031 = vunpack.c.h.b16 %v2726
          %v3032 = vunpack.c.l.b16 %v2727
          %v3033 = vunpack.c.h.b16 %v2727
          %v3034 = vunpack.c.l.b16 %v2728
          %v3035 = vunpack.c.h.b16 %v2728
          %v3036 = vunpack.c.l.b16 %v2729
          %v3037 = vunpack.c.h.b16 %v2729
          %v3038 = vunpack.c.l.b16 %v2730
          %v3039 = vunpack.c.h.b16 %v2730
          %v3040 = vunpack.c.l.b16 %v2731
          %v3041 = vunpack.c.h.b16 %v2731
          %v3042 = vunpack.c.l.b16 %v2732
          %v3043 = vunpack.c.h.b16 %v2732
          %v3044 = vpack.c.b16 %v2856, %v2852
          %v3045 = vpack.c.b16 %v2857, %v2853
          %v3046 = vpack.c.b16 %v2858, %v2854
          %v3047 = vpack.c.b16 %v2859, %v2855
          %v3048 = vpack.c.b16 %v2864, %v2860
          %v3049 = vpack.c.b16 %v2865, %v2861
          %v3050 = vpack.c.b16 %v2866, %v2862
          %v3051 = vpack.c.b16 %v2867, %v2863
          %v3052 = vpack.c.b16 %v2872, %v2868
          %v3053 = vpack.c.b16 %v2873, %v2869
          %v3054 = vpack.c.b16 %v2874, %v2870
          %v3055 = vpack.c.b16 %v2875, %v2871
          %v3056 = vpack.c.b16 %v2880, %v2876
          %v3057 = vpack.c.b16 %v2881, %v2877
          %v3058 = vpack.c.b16 %v2882, %v2878
          %v3059 = vpack.c.b16 %v2883, %v2879
          %v3060 = vpack.c.b16 %v2888, %v2884
          %v3061 = vpack.c.b16 %v2889, %v2885
          %v3062 = vpack.c.b16 %v2890, %v2886
          %v3063 = vpack.c.b16 %v2891, %v2887
          %v3064 = vpack.c.b16 %v2896, %v2892
          %v3065 = vpack.c.b16 %v2897, %v2893
          %v3066 = vpack.c.b16 %v2898, %v2894
          %v3067 = vpack.c.b16 %v2899, %v2895
          %v3068 = vpack.c.b16 %v2904, %v2900
          %v3069 = vpack.c.b16 %v2905, %v2901
          %v3070 = vpack.c.b16 %v2906, %v2902
          %v3071 = vpack.c.b16 %v2907, %v2903
          %v3072 = vpack.c.b16 %v2912, %v2908
          %v3073 = vpack.c.b16 %v2913, %v2909
          %v3074 = vpack.c.b16 %v2914, %v2910
          %v3075 = vpack.c.b16 %v2915, %v2911
          %v3076 = vpack.c.b16 %v2920, %v2916
          %v3077 = vpack.c.b16 %v2921, %v2917
          %v3078 = vpack.c.b16 %v2922, %v2918
          %v3079 = vpack.c.b16 %v2923, %v2919
          %v3080 = vpack.c.b16 %v2928, %v2924
          %v3081 = vpack.c.b16 %v2929, %v2925
          %v3082 = vpack.c.b16 %v2930, %v2926
          %v3083 = vpack.c.b16 %v2931, %v2927
          %v3084 = vpack.c.b16 %v2936, %v2932
          %v3085 = vpack.c.b16 %v2937, %v2933
          %v3086 = vpack.c.b16 %v2938, %v2934
          %v3087 = vpack.c.b16 %v2939, %v2935
          %v3088 = vpack.c.b16 %v2944, %v2940
          %v3089 = vpack.c.b16 %v2945, %v2941
          %v3090 = vpack.c.b16 %v2946, %v2942
          %v3091 = vpack.c.b16 %v2947, %v2943
          %v3092 = vpack.c.b16 %v2952, %v2948
          %v3093 = vpack.c.b16 %v2953, %v2949
          %v3094 = vpack.c.b16 %v2954, %v2950
          %v3095 = vpack.c.b16 %v2955, %v2951
          %v3096 = vpack.c.b16 %v2960, %v2956
          %v3097 = vpack.c.b16 %v2961, %v2957
          %v3098 = vpack.c.b16 %v2962, %v2958
          %v3099 = vpack.c.b16 %v2963, %v2959
          %v3100 = vpack.c.b16 %v2968, %v2964
          %v3101 = vpack.c.b16 %v2969, %v2965
          %v3102 = vpack.c.b16 %v2970, %v2966
          %v3103 = vpack.c.b16 %v2971, %v2967
          %v3104 = vpack.c.b16 %v2976, %v2972
          %v3105 = vpack.c.b16 %v2977, %v2973
          %v3106 = vpack.c.b16 %v2978, %v2974
          %v3107 = vpack.c.b16 %v2979, %v2975
          %v3108 = vpack.c.b16 %v2984, %v2980
          %v3109 = vpack.c.b16 %v2985, %v2981
          %v3110 = vpack.c.b16 %v2986, %v2982
          %v3111 = vpack.c.b16 %v2987, %v2983
          %v3112 = vpack.c.b16 %v2992, %v2988
          %v3113 = vpack.c.b16 %v2993, %v2989
          %v3114 = vpack.c.b16 %v2994, %v2990
          %v3115 = vpack.c.b16 %v2995, %v2991
          %v3116 = vpack.c.b16 %v3000, %v2996
          %v3117 = vpack.c.b16 %v3001, %v2997
          %v3118 = vpack.c.b16 %v3002, %v2998
          %v3119 = vpack.c.b16 %v3003, %v2999
          %v3120 = vpack.c.b16 %v3008, %v3004
          %v3121 = vpack.c.b16 %v3009, %v3005
          %v3122 = vpack.c.b16 %v3010, %v3006
          %v3123 = vpack.c.b16 %v3011, %v3007
          %v3124 = vpack.c.b16 %v3016, %v3012
          %v3125 = vpack.c.b16 %v3017, %v3013
          %v3126 = vpack.c.b16 %v3018, %v3014
          %v3127 = vpack.c.b16 %v3019, %v3015
          %v3128 = vpack.c.b16 %v3024, %v3020
          %v3129 = vpack.c.b16 %v3025, %v3021
          %v3130 = vpack.c.b16 %v3026, %v3022
          %v3131 = vpack.c.b16 %v3027, %v3023
          %v3132 = vpack.c.b16 %v3032, %v3028
          %v3133 = vpack.c.b16 %v3033, %v3029
          %v3134 = vpack.c.b16 %v3034, %v3030
          %v3135 = vpack.c.b16 %v3035, %v3031
          %v3136 = vpack.c.b16 %v3040, %v3036
          %v3137 = vpack.c.b16 %v3041, %v3037
          %v3138 = vpack.c.b16 %v3042, %v3038
          %v3139 = vpack.c.b16 %v3043, %v3039
          %3236 = vmatprep.subr.bf16.mxu0 %v3045
          %3237 = vmatpush1.bf16.msra.mxu0 %v3044
          %3238 = vmatprep.subr.bf16.mxu0 %v3049
          %3239 = vmatpush1.bf16.msra.mxu0 %v3048
          %3240 = vmatprep.subr.bf16.mxu0 %v3053
          %3241 = vmatpush1.bf16.msra.mxu0 %v3052
          %3242 = vmatprep.subr.bf16.mxu0 %v3057
          %3243 = vmatpush1.bf16.msra.mxu0 %v3056
          %3244 = vmatprep.subr.bf16.mxu0 %v3061
          %3245 = vmatpush1.bf16.msra.mxu0 %v3060
          %3246 = vmatprep.subr.bf16.mxu0 %v3065
          %3247 = vmatpush1.bf16.msra.mxu0 %v3064
          %3248 = vmatprep.subr.bf16.mxu0 %v3069
          %3249 = vmatpush1.bf16.msra.mxu0 %v3068
          %3250 = vmatprep.subr.bf16.mxu0 %v3073
          %3251 = vmatpush1.bf16.msra.mxu0 %v3072
          %3252 = vmatprep.subr.bf16.mxu0 %v3077
          %3253 = vmatpush1.bf16.msra.mxu0 %v3076
          %3254 = vmatprep.subr.bf16.mxu0 %v3081
          %3255 = vmatpush1.bf16.msra.mxu0 %v3080
          %3256 = vmatprep.subr.bf16.mxu0 %v3085
          %3257 = vmatpush1.bf16.msra.mxu0 %v3084
          %3258 = vmatprep.subr.bf16.mxu0 %v3089
          %3259 = vmatpush1.bf16.msra.mxu0 %v3088
          %3260 = vmatprep.subr.bf16.mxu0 %v3093
          %3261 = vmatpush1.bf16.msra.mxu0 %v3092
          %3262 = vmatprep.subr.bf16.mxu0 %v3097
          %3263 = vmatpush1.bf16.msra.mxu0 %v3096
          %3264 = vmatprep.subr.bf16.mxu0 %v3101
          %3265 = vmatpush1.bf16.msra.mxu0 %v3100
          %3266 = vmatprep.subr.bf16.mxu0 %v3105
          %3267 = vmatpush1.bf16.msra.mxu0 %v3104
          %3268 = vmatprep.mubr.bf16.mxu0 %v1942
          %3269 = vmatmul.mubr.bf16.gmra.mrb[0].mxu0 %v1941
          %v3270 = vpop.f32.mrb[0].mxu0
          %v3271 = vadd.f32 %v2739, %v3270
          %v3272 = vpop.f32.mrb[0].mxu0
          %v3273 = vadd.f32 %v2743, %v3272
          %v3274 = vpop.f32.mrb[0].mxu0
          %v3275 = vpop.f32.mrb[0].mxu0
          %3276 = vdwg.mxu0
          %3277 = vmatprep.subr.bf16.mxu0 %v3109
          %3278 = vmatpush1.bf16.msra.mxu0 %v3108
          %3279 = vmatprep.subr.bf16.mxu0 %v3113
          %3280 = vmatpush1.bf16.msra.mxu0 %v3112
          %3281 = vmatprep.subr.bf16.mxu0 %v3117
          %3282 = vmatpush1.bf16.msra.mxu0 %v3116
          %3283 = vmatprep.subr.bf16.mxu0 %v3121
          %3284 = vmatpush1.bf16.msra.mxu0 %v3120
          %3285 = vmatprep.subr.bf16.mxu0 %v3125
          %3286 = vmatpush1.bf16.msra.mxu0 %v3124
          %3287 = vmatprep.subr.bf16.mxu0 %v3129
          %3288 = vmatpush1.bf16.msra.mxu0 %v3128
          %3289 = vmatprep.subr.bf16.mxu0 %v3133
          %3290 = vmatpush1.bf16.msra.mxu0 %v3132
          %3291 = vmatprep.subr.bf16.mxu0 %v3137
          %3292 = vmatpush1.bf16.msra.mxu0 %v3136
          %3293 = vmatprep.subr.bf16.mxu0 0
          %3294 = vmatpush1.bf16.msra.mxu0 0
          %3295 = vmatprep.subr.bf16.mxu0 0
          %3296 = vmatpush1.bf16.msra.mxu0 0
          %3297 = vmatprep.subr.bf16.mxu0 0
          %3298 = vmatpush1.bf16.msra.mxu0 0
          %3299 = vmatprep.subr.bf16.mxu0 0
          %3300 = vmatpush1.bf16.msra.mxu0 0
          %3301 = vmatprep.subr.bf16.mxu0 0
          %3302 = vmatpush1.bf16.msra.mxu0 0
          %3303 = vmatprep.subr.bf16.mxu0 0
          %3304 = vmatpush1.bf16.msra.mxu0 0
          %3305 = vmatprep.subr.bf16.mxu0 0
          %3306 = vmatpush1.bf16.msra.mxu0 0
          %3307 = vmatprep.subr.bf16.mxu0 0
          %3308 = vmatpush1.bf16.msra.mxu0 0
          %3309 = vmatprep.mubr.bf16.mxu0 0
          %3310 = vmatmul.mubr.bf16.gmra.mrb[0].mxu0 %v2734
          %v3311 = vpop.f32.mrb[0].mxu0
          %v3312 = vadd.f32 %v3271, %v3311
          %v3313 = vpop.f32.mrb[0].mxu0
          %v3314 = vadd.f32 %v3273, %v3313
          %v3315 = vpop.f32.mrb[0].mxu0
          %v3316 = vpop.f32.mrb[0].mxu0
          %3317 = vdwg.mxu0
          %3318 = vmatprep.subr.bf16.mxu0 %v3047
          %3319 = vmatpush1.bf16.msra.mxu0 %v3046
          %3320 = vmatprep.subr.bf16.mxu0 %v3051
          %3321 = vmatpush1.bf16.msra.mxu0 %v3050
          %3322 = vmatprep.subr.bf16.mxu0 %v3055
          %3323 = vmatpush1.bf16.msra.mxu0 %v3054
          %3324 = vmatprep.subr.bf16.mxu0 %v3059
          %3325 = vmatpush1.bf16.msra.mxu0 %v3058
          %3326 = vmatprep.subr.bf16.mxu0 %v3063
          %3327 = vmatpush1.bf16.msra.mxu0 %v3062
          %3328 = vmatprep.subr.bf16.mxu0 %v3067
          %3329 = vmatpush1.bf16.msra.mxu0 %v3066
          %3330 = vmatprep.subr.bf16.mxu0 %v3071
          %3331 = vmatpush1.bf16.msra.mxu0 %v3070
          %3332 = vmatprep.subr.bf16.mxu0 %v3075
          %3333 = vmatpush1.bf16.msra.mxu0 %v3074
          %3334 = vmatprep.subr.bf16.mxu0 %v3079
          %3335 = vmatpush1.bf16.msra.mxu0 %v3078
          %3336 = vmatprep.subr.bf16.mxu0 %v3083
          %3337 = vmatpush1.bf16.msra.mxu0 %v3082
          %3338 = vmatprep.subr.bf16.mxu0 %v3087
          %3339 = vmatpush1.bf16.msra.mxu0 %v3086
          %3340 = vmatprep.subr.bf16.mxu0 %v3091
          %3341 = vmatpush1.bf16.msra.mxu0 %v3090
          %3342 = vmatprep.subr.bf16.mxu0 %v3095
          %3343 = vmatpush1.bf16.msra.mxu0 %v3094
          %3344 = vmatprep.subr.bf16.mxu0 %v3099
          %3345 = vmatpush1.bf16.msra.mxu0 %v3098
          %3346 = vmatprep.subr.bf16.mxu0 %v3103
          %3347 = vmatpush1.bf16.msra.mxu0 %v3102
          %3348 = vmatprep.subr.bf16.mxu0 %v3107
          %3349 = vmatpush1.bf16.msra.mxu0 %v3106
          %3350 = vmatprep.mubr.bf16.mxu0 %v1942
          %3351 = vmatmul.mubr.bf16.gmra.mrb[0].mxu0 %v1941
          %v3352 = vpop.f32.mrb[0].mxu0
          %v3353 = vadd.f32 %v2747, %v3352
          %v3354 = vpop.f32.mrb[0].mxu0
          %v3355 = vadd.f32 %v2751, %v3354
          %v3356 = vpop.f32.mrb[0].mxu0
          %v3357 = vpop.f32.mrb[0].mxu0
          %3358 = vdwg.mxu0
          %3359 = vmatprep.subr.bf16.mxu0 %v3111
          %3360 = vmatpush1.bf16.msra.mxu0 %v3110
          %3361 = vmatprep.subr.bf16.mxu0 %v3115
          %3362 = vmatpush1.bf16.msra.mxu0 %v3114
          %3363 = vmatprep.subr.bf16.mxu0 %v3119
          %3364 = vmatpush1.bf16.msra.mxu0 %v3118
          %3365 = vmatprep.subr.bf16.mxu0 %v3123
          %3366 = vmatpush1.bf16.msra.mxu0 %v3122
          %3367 = vmatprep.subr.bf16.mxu0 %v3127
          %3368 = vmatpush1.bf16.msra.mxu0 %v3126
          %3369 = vmatprep.subr.bf16.mxu0 %v3131
          %3370 = vmatpush1.bf16.msra.mxu0 %v3130
          %3371 = vmatprep.subr.bf16.mxu0 %v3135
          %3372 = vmatpush1.bf16.msra.mxu0 %v3134
          %3373 = vmatprep.subr.bf16.mxu0 %v3139
          %3374 = vmatpush1.bf16.msra.mxu0 %v3138
          %3375 = vmatprep.subr.bf16.mxu0 0
          %3376 = vmatpush1.bf16.msra.mxu0 0
          %3377 = vmatprep.subr.bf16.mxu0 0
          %3378 = vmatpush1.bf16.msra.mxu0 0
          %3379 = vmatprep.subr.bf16.mxu0 0
          %3380 = vmatpush1.bf16.msra.mxu0 0
          %3381 = vmatprep.subr.bf16.mxu0 0
          %3382 = vmatpush1.bf16.msra.mxu0 0
          %3383 = vmatprep.subr.bf16.mxu0 0
          %3384 = vmatpush1.bf16.msra.mxu0 0
          %3385 = vmatprep.subr.bf16.mxu0 0
          %3386 = vmatpush1.bf16.msra.mxu0 0
          %3387 = vmatprep.subr.bf16.mxu0 0
          %3388 = vmatpush1.bf16.msra.mxu0 0
          %3389 = vmatprep.subr.bf16.mxu0 0
          %3390 = vmatpush1.bf16.msra.mxu0 0
          %3391 = vmatprep.mubr.bf16.mxu0 0
          %3392 = vmatmul.mubr.bf16.gmra.mrb[0].mxu0 %v2734
          %v3393 = vpop.f32.mrb[0].mxu0
          %v3394 = vadd.f32 %v3353, %v3393
          %v3395 = vpop.f32.mrb[0].mxu0
          %v3396 = vadd.f32 %v3355, %v3395
          %v3397 = vpop.f32.mrb[0].mxu0
          %v3398 = vpop.f32.mrb[0].mxu0
          %3399 = vdwg.mxu0
          %v3400 = vxor.u32 %v3312, 2147483648
          %v3401 = vmul.f32 %v3400, 1.442695
          %v3402 = vpow.pop %v3401
          %v3403 = vadd.f32 %v3402, 1.0
          %v3404 = vrcp.pop %v3403
          %v3405 = vmul.f32 1.0, %v3404
          %v3406 = vxor.u32 %v3314, 2147483648
          %v3407 = vmul.f32 %v3406, 1.442695
          %v3408 = vpow.pop %v3407
          %v3409 = vadd.f32 %v3408, 1.0
          %v3410 = vrcp.pop %v3409
          %v3411 = vmul.f32 1.0, %v3410
          %v3412 = vtanh.pop %v3394
          %v3413 = vxor.u32 %v3396, 2147483648
          %v3414 = vmul.f32 %v3413, 1.442695
          %v3415 = vpow.pop %v3414
          %v3416 = vadd.f32 %v3415, 1.0
          %v3417 = vrcp.pop %v3416
          %v3418 = vmul.f32 1.0, %v3417
          %v3419 = vmul.f32 %v3411, %v2636
          %v3420 = vmul.f32 %v3405, %v3412
          %v3421 = vadd.f32 %v3419, %v3420
          %v3422 = vtanh.pop %v3421
          %v3423 = vmul.f32 %v3418, %v3422
          %3424 = vst [vmem:[#allocation20] sm:$0xff] %v1322
          %s3425 = scalar_lea.vmem [#allocation20], 8
          %3426 = vst [vmem:[%s3425] sm:$0xff] %v1839
          %s3427 = scalar_lea.vmem [#allocation20], 16
          %3428 = vst [vmem:[%s3427] sm:$0xff] %v2632
          %s3429 = scalar_lea.vmem [#allocation20], 24
          %3430 = vst [vmem:[%s3429] sm:$0xff] %v3423
          %3431 = vst [vmem:[#allocation22] sm:$0xff] %v1320
          %s3432 = scalar_lea.vmem [#allocation22], 8
          %3433 = vst [vmem:[%s3432] sm:$0xff] %v1837
          %s3434 = scalar_lea.vmem [#allocation22], 16
          %3435 = vst [vmem:[%s3434] sm:$0xff] %v2630
          %s3436 = scalar_lea.vmem [#allocation22], 24
          %3437 = vst [vmem:[%s3436] sm:$0xff] %v3421
          %v3438 = vadd.f32 %v2632, %v3423
          %3439 = vadd.xlane.f32.xlu0 %v3438
          %v3440 = vpop.xlane.xlu0 %3439
          %v3441 = vrcp.pop 256.0
          %v3442 = vmul.f32 %v3440, %v3441
          %v3443 = vsub.f32 %v2632, %v3442
          %v3444 = vsub.f32 %v3423, %v3442
          %v3445 = vmul.f32 %v3443, %v3443
          %v3446 = vmul.f32 %v3444, %v3444
          %v3447 = vadd.f32 %v3445, %v3446
          %3448 = vadd.xlane.f32.xlu0 %v3447
          %v3449 = vpop.xlane.xlu0 %3448
          %v3450 = vmul.f32 %v3449, %v3441
          %v3451 = vadd.f32 %v3450, 1e-05
          %v3452 = vrsqrt.pop %v3451
          %v3453 = vmul.f32 %v3443, %v3452
          %v3454 = vmul.f32 %v3444, %v3452
          %v3455 = vld [vmem:[%s12] sm:$0x3]
          %v3457 = vlaneseq
          %v3458 = vshrl.u32 %v3457, 7
          %v3459 = vsub.s32 0, %v3458
          %v3460 = vrot.slane %v3455, %v3459
          %v3461 = vlaneseq
          %v3462 = vshrl.u32 %v3461, 7
          %v3463 = vsub.s32 1, %v3462
          %v3464 = vrot.slane %v3455, %v3463
          %v3467 = vmul.f32 %v3453, %v3460
          %v3468 = vmul.f32 %v3454, %v3464
          %v3469 = vld [vmem:[%s13] sm:$0x3]
          %v3471 = vlaneseq
          %v3472 = vshrl.u32 %v3471, 7
          %v3473 = vsub.s32 0, %v3472
          %v3474 = vrot.slane %v3469, %v3473
          %v3475 = vlaneseq
          %v3476 = vshrl.u32 %v3475, 7
          %v3477 = vsub.s32 1, %v3476
          %v3478 = vrot.slane %v3469, %v3477
          %v3481 = vadd.f32 %v3467, %v3474
          %v3482 = vadd.f32 %v3468, %v3478
          %v3483 = vpack.c.bf16 %v3481, %v3481
          %v3484 = vpack.c.bf16 %v3482, %v3482
          %v3487 = vunpack.c.l.b16 %v3483
          %v3488 = vunpack.c.l.b16 %v3484
          %v3489 = vpack.c.b16 %v3488, %v3487
          %3491 = vst [vmem:[#allocation3] sm:$0xff] %v3489
        $region108: #{rnn_v3_forward.1} parent=75 // pred_fallthru
          _
        %v3492 = vld [vmem:[#allocation3] sm:$0xff]
        %v3493 = vld [vmem:[%s590] sm:$0xff]
        %v3494 = vld [vmem:[%s590 + $0x8] sm:$0xff]
        %v3495 = vld [vmem:[%s590 + $0x10] sm:$0xff]
        %v3496 = vld [vmem:[%s590 + $0x18] sm:$0xff]
        %v3497 = vld [vmem:[%s590 + $0x20] sm:$0xff]
        %v3498 = vld [vmem:[%s590 + $0x28] sm:$0xff]
        %v3499 = vld [vmem:[%s590 + $0x30] sm:$0xff]
        %v3500 = vld [vmem:[%s590 + $0x38] sm:$0xff]
        %v3501 = vld [vmem:[%s590 + $0x40] sm:$0xff]
        %v3502 = vld [vmem:[%s590 + $0x48] sm:$0xff]
        %v3503 = vld [vmem:[%s590 + $0x50] sm:$0xff]
        %v3504 = vld [vmem:[%s590 + $0x58] sm:$0xff]
        %v3505 = vld [vmem:[%s590 + $0x60] sm:$0xff]
        %v3506 = vld [vmem:[%s590 + $0x68] sm:$0xff]
        %v3507 = vld [vmem:[%s590 + $0x70] sm:$0xff]
        %v3508 = vld [vmem:[%s590 + $0x78] sm:$0xff]
        %v3509 = vld [vmem:[%s590 + $0x80] sm:$0xff]
        %v3510 = vld [vmem:[%s590 + $0x88] sm:$0xff]
        %v3511 = vld [vmem:[%s590 + $0x90] sm:$0xff]
        %v3512 = vld [vmem:[%s590 + $0x98] sm:$0xff]
        %v3513 = vld [vmem:[%s590 + $0xa0] sm:$0xff]
        %v3514 = vld [vmem:[%s590 + $0xa8] sm:$0xff]
        %v3515 = vld [vmem:[%s590 + $0xb0] sm:$0xff]
        %v3516 = vld [vmem:[%s590 + $0xb8] sm:$0xff]
        %v3517 = vld [vmem:[%s590 + $0xc0] sm:$0xff]
        %v3518 = vld [vmem:[%s590 + $0xc8] sm:$0xff]
        %v3519 = vld [vmem:[%s590 + $0xd0] sm:$0xff]
        %v3520 = vld [vmem:[%s590 + $0xd8] sm:$0xff]
        %v3521 = vld [vmem:[%s590 + $0xe0] sm:$0xff]
        %v3522 = vld [vmem:[%s590 + $0xe8] sm:$0xff]
        %v3523 = vld [vmem:[%s590 + $0xf0] sm:$0xff]
        %v3524 = vld [vmem:[%s590 + $0xf8] sm:$0xff]
        %v3525 = vld [vmem:[%s590 + $0x100] sm:$0xff]
        %v3526 = vld [vmem:[%s590 + $0x108] sm:$0xff]
        %v3527 = vld [vmem:[%s590 + $0x110] sm:$0xff]
        %v3528 = vld [vmem:[%s590 + $0x118] sm:$0xff]
        %v3529 = vld [vmem:[%s590 + $0x120] sm:$0xff]
        %v3530 = vld [vmem:[%s590 + $0x128] sm:$0xff]
        %v3531 = vld [vmem:[%s590 + $0x130] sm:$0xff]
        %v3532 = vld [vmem:[%s590 + $0x138] sm:$0xff]
        %v3533 = vld [vmem:[%s590 + $0x140] sm:$0xff]
        %v3534 = vld [vmem:[%s590 + $0x148] sm:$0xff]
        %v3535 = vld [vmem:[%s590 + $0x150] sm:$0xff]
        %v3536 = vld [vmem:[%s590 + $0x158] sm:$0xff]
        %v3537 = vld [vmem:[%s590 + $0x160] sm:$0xff]
        %v3538 = vld [vmem:[%s590 + $0x168] sm:$0xff]
        %v3539 = vld [vmem:[%s590 + $0x170] sm:$0xff]
        %v3540 = vld [vmem:[%s590 + $0x178] sm:$0xff]
        %v3541 = vld [vmem:[%s590 + $0x180] sm:$0xff]
        %v3542 = vld [vmem:[%s590 + $0x188] sm:$0xff]
        %v3543 = vld [vmem:[%s590 + $0x190] sm:$0xff]
        %v3544 = vld [vmem:[%s590 + $0x198] sm:$0xff]
        %v3545 = vld [vmem:[%s590 + $0x1a0] sm:$0xff]
        %v3546 = vld [vmem:[%s590 + $0x1a8] sm:$0xff]
        %v3547 = vld [vmem:[%s590 + $0x1b0] sm:$0xff]
        %v3548 = vld [vmem:[%s590 + $0x1b8] sm:$0xff]
        %v3549 = vld [vmem:[%s590 + $0x1c0] sm:$0xff]
        %v3550 = vld [vmem:[%s590 + $0x1c8] sm:$0xff]
        %v3551 = vld [vmem:[%s590 + $0x1d0] sm:$0xff]
        %v3552 = vld [vmem:[%s590 + $0x1d8] sm:$0xff]
        %v3553 = vld [vmem:[%s590 + $0x1e0] sm:$0xff]
        %v3554 = vld [vmem:[%s590 + $0x1e8] sm:$0xff]
        %v3555 = vld [vmem:[%s590 + $0x1f0] sm:$0xff]
        %v3556 = vld [vmem:[%s590 + $0x1f8] sm:$0xff]
        %v3557 = vld [vmem:[%s590 + $0x200] sm:$0xff]
        %v3558 = vld [vmem:[%s590 + $0x208] sm:$0xff]
        %v3559 = vld [vmem:[%s590 + $0x210] sm:$0xff]
        %v3560 = vld [vmem:[%s590 + $0x218] sm:$0xff]
        %v3561 = vld [vmem:[%s590 + $0x220] sm:$0xff]
        %v3562 = vld [vmem:[%s590 + $0x228] sm:$0xff]
        %v3563 = vld [vmem:[%s590 + $0x230] sm:$0xff]
        %v3564 = vld [vmem:[%s590 + $0x238] sm:$0xff]
        %v3565 = vld [vmem:[%s590 + $0x240] sm:$0xff]
        %v3566 = vld [vmem:[%s590 + $0x248] sm:$0xff]
        %v3567 = vld [vmem:[%s590 + $0x250] sm:$0xff]
        %v3568 = vld [vmem:[%s590 + $0x258] sm:$0xff]
        %v3569 = vld [vmem:[%s590 + $0x260] sm:$0xff]
        %v3570 = vld [vmem:[%s590 + $0x268] sm:$0xff]
        %v3571 = vld [vmem:[%s590 + $0x270] sm:$0xff]
        %v3572 = vld [vmem:[%s590 + $0x278] sm:$0xff]
        %v3573 = vld [vmem:[%s590 + $0x280] sm:$0xff]
        %v3574 = vld [vmem:[%s590 + $0x288] sm:$0xff]
        %v3575 = vld [vmem:[%s590 + $0x290] sm:$0xff]
        %v3576 = vld [vmem:[%s590 + $0x298] sm:$0xff]
        %v3577 = vld [vmem:[%s590 + $0x2a0] sm:$0xff]
        %v3578 = vld [vmem:[%s590 + $0x2a8] sm:$0xff]
        %v3579 = vld [vmem:[%s590 + $0x2b0] sm:$0xff]
        %v3580 = vld [vmem:[%s590 + $0x2b8] sm:$0xff]
        %v3581 = vld [vmem:[%s590 + $0x2c0] sm:$0xff]
        %v3582 = vld [vmem:[%s590 + $0x2c8] sm:$0xff]
        %v3583 = vld [vmem:[%s590 + $0x2d0] sm:$0xff]
        %v3584 = vld [vmem:[%s590 + $0x2d8] sm:$0xff]
        %v3585 = vld [vmem:[%s590 + $0x2e0] sm:$0xff]
        %v3586 = vld [vmem:[%s590 + $0x2e8] sm:$0xff]
        %v3587 = vld [vmem:[%s590 + $0x2f0] sm:$0xff]
        %v3588 = vld [vmem:[%s590 + $0x2f8] sm:$0xff]
        %v3589 = vld [vmem:[%s590 + $0x300] sm:$0xff]
        %v3590 = vld [vmem:[%s590 + $0x308] sm:$0xff]
        %v3591 = vld [vmem:[%s590 + $0x310] sm:$0xff]
        %v3592 = vld [vmem:[%s590 + $0x318] sm:$0xff]
        %v3593 = vld [vmem:[%s590 + $0x320] sm:$0xff]
        %v3594 = vld [vmem:[%s590 + $0x328] sm:$0xff]
        %v3595 = vld [vmem:[%s590 + $0x330] sm:$0xff]
        %v3596 = vld [vmem:[%s590 + $0x338] sm:$0xff]
        %v3597 = vld [vmem:[%s590 + $0x340] sm:$0xff]
        %v3598 = vld [vmem:[%s590 + $0x348] sm:$0xff]
        %v3599 = vld [vmem:[%s590 + $0x350] sm:$0xff]
        %v3600 = vld [vmem:[%s590 + $0x358] sm:$0xff]
        %v3601 = vld [vmem:[%s590 + $0x360] sm:$0xff]
        %v3602 = vld [vmem:[%s590 + $0x368] sm:$0xff]
        %v3603 = vld [vmem:[%s590 + $0x370] sm:$0xff]
        %v3604 = vld [vmem:[%s590 + $0x378] sm:$0xff]
        %v3605 = vld [vmem:[%s590 + $0x380] sm:$0xff]
        %v3606 = vld [vmem:[%s590 + $0x388] sm:$0xff]
        %v3607 = vld [vmem:[%s590 + $0x390] sm:$0xff]
        %v3608 = vld [vmem:[%s590 + $0x398] sm:$0xff]
        %v3609 = vld [vmem:[%s590 + $0x3a0] sm:$0xff]
        %v3610 = vld [vmem:[%s590 + $0x3a8] sm:$0xff]
        %v3611 = vld [vmem:[%s590 + $0x3b0] sm:$0xff]
        %v3612 = vld [vmem:[%s590 + $0x3b8] sm:$0xff]
        %v3613 = vld [vmem:[%s590 + $0x3c0] sm:$0xff]
        %v3614 = vld [vmem:[%s590 + $0x3c8] sm:$0xff]
        %v3615 = vld [vmem:[%s590 + $0x3d0] sm:$0xff]
        %v3616 = vld [vmem:[%s590 + $0x3d8] sm:$0xff]
        %v3617 = vld [vmem:[%s590 + $0x3e0] sm:$0xff]
        %v3618 = vld [vmem:[%s590 + $0x3e8] sm:$0xff]
        %v3619 = vld [vmem:[%s590 + $0x3f0] sm:$0xff]
        %v3620 = vld [vmem:[%s590 + $0x3f8] sm:$0xff]
        %v3621 = vld [vmem:[%s647] sm:$0xff]
        %v3623 = vlaneseq
        %v3624 = vshrl.u32 %v3623, 7
        %v3625 = vsub.s32 0, %v3624
        %v3626 = vrot.slane %v3621, %v3625
        %v3627 = vlaneseq
        %v3628 = vshrl.u32 %v3627, 7
        %v3629 = vsub.s32 1, %v3628
        %v3630 = vrot.slane %v3621, %v3629
        %v3631 = vlaneseq
        %v3632 = vshrl.u32 %v3631, 7
        %v3633 = vsub.s32 2, %v3632
        %v3634 = vrot.slane %v3621, %v3633
        %v3635 = vlaneseq
        %v3636 = vshrl.u32 %v3635, 7
        %v3637 = vsub.s32 3, %v3636
        %v3638 = vrot.slane %v3621, %v3637
        %v3639 = vlaneseq
        %v3640 = vshrl.u32 %v3639, 7
        %v3641 = vsub.s32 4, %v3640
        %v3642 = vrot.slane %v3621, %v3641
        %v3643 = vlaneseq
        %v3644 = vshrl.u32 %v3643, 7
        %v3645 = vsub.s32 5, %v3644
        %v3646 = vrot.slane %v3621, %v3645
        %v3647 = vlaneseq
        %v3648 = vshrl.u32 %v3647, 7
        %v3649 = vsub.s32 6, %v3648
        %v3650 = vrot.slane %v3621, %v3649
        %v3651 = vlaneseq
        %v3652 = vshrl.u32 %v3651, 7
        %v3653 = vsub.s32 7, %v3652
        %v3654 = vrot.slane %v3621, %v3653
        %v3664 = vunpack.c.l.b16 %v3492
        %v3665 = vunpack.c.h.b16 %v3492
        %v3666 = vpack.c.b16 %v3664, %v3664
        %v3667 = vpack.c.b16 %v3665, %v3665
        %v3798 = vunpack.c.l.b16 %v3493
        %v3799 = vunpack.c.h.b16 %v3493
        %v3800 = vunpack.c.l.b16 %v3494
        %v3801 = vunpack.c.h.b16 %v3494
        %v3802 = vunpack.c.l.b16 %v3495
        %v3803 = vunpack.c.h.b16 %v3495
        %v3804 = vunpack.c.l.b16 %v3496
        %v3805 = vunpack.c.h.b16 %v3496
        %v3806 = vunpack.c.l.b16 %v3497
        %v3807 = vunpack.c.h.b16 %v3497
        %v3808 = vunpack.c.l.b16 %v3498
        %v3809 = vunpack.c.h.b16 %v3498
        %v3810 = vunpack.c.l.b16 %v3499
        %v3811 = vunpack.c.h.b16 %v3499
        %v3812 = vunpack.c.l.b16 %v3500
        %v3813 = vunpack.c.h.b16 %v3500
        %v3814 = vunpack.c.l.b16 %v3501
        %v3815 = vunpack.c.h.b16 %v3501
        %v3816 = vunpack.c.l.b16 %v3502
        %v3817 = vunpack.c.h.b16 %v3502
        %v3818 = vunpack.c.l.b16 %v3503
        %v3819 = vunpack.c.h.b16 %v3503
        %v3820 = vunpack.c.l.b16 %v3504
        %v3821 = vunpack.c.h.b16 %v3504
        %v3822 = vunpack.c.l.b16 %v3505
        %v3823 = vunpack.c.h.b16 %v3505
        %v3824 = vunpack.c.l.b16 %v3506
        %v3825 = vunpack.c.h.b16 %v3506
        %v3826 = vunpack.c.l.b16 %v3507
        %v3827 = vunpack.c.h.b16 %v3507
        %v3828 = vunpack.c.l.b16 %v3508
        %v3829 = vunpack.c.h.b16 %v3508
        %v3830 = vunpack.c.l.b16 %v3509
        %v3831 = vunpack.c.h.b16 %v3509
        %v3832 = vunpack.c.l.b16 %v3510
        %v3833 = vunpack.c.h.b16 %v3510
        %v3834 = vunpack.c.l.b16 %v3511
        %v3835 = vunpack.c.h.b16 %v3511
        %v3836 = vunpack.c.l.b16 %v3512
        %v3837 = vunpack.c.h.b16 %v3512
        %v3838 = vunpack.c.l.b16 %v3513
        %v3839 = vunpack.c.h.b16 %v3513
        %v3840 = vunpack.c.l.b16 %v3514
        %v3841 = vunpack.c.h.b16 %v3514
        %v3842 = vunpack.c.l.b16 %v3515
        %v3843 = vunpack.c.h.b16 %v3515
        %v3844 = vunpack.c.l.b16 %v3516
        %v3845 = vunpack.c.h.b16 %v3516
        %v3846 = vunpack.c.l.b16 %v3517
        %v3847 = vunpack.c.h.b16 %v3517
        %v3848 = vunpack.c.l.b16 %v3518
        %v3849 = vunpack.c.h.b16 %v3518
        %v3850 = vunpack.c.l.b16 %v3519
        %v3851 = vunpack.c.h.b16 %v3519
        %v3852 = vunpack.c.l.b16 %v3520
        %v3853 = vunpack.c.h.b16 %v3520
        %v3854 = vunpack.c.l.b16 %v3521
        %v3855 = vunpack.c.h.b16 %v3521
        %v3856 = vunpack.c.l.b16 %v3522
        %v3857 = vunpack.c.h.b16 %v3522
        %v3858 = vunpack.c.l.b16 %v3523
        %v3859 = vunpack.c.h.b16 %v3523
        %v3860 = vunpack.c.l.b16 %v3524
        %v3861 = vunpack.c.h.b16 %v3524
        %v3862 = vunpack.c.l.b16 %v3525
        %v3863 = vunpack.c.h.b16 %v3525
        %v3864 = vunpack.c.l.b16 %v3526
        %v3865 = vunpack.c.h.b16 %v3526
        %v3866 = vunpack.c.l.b16 %v3527
        %v3867 = vunpack.c.h.b16 %v3527
        %v3868 = vunpack.c.l.b16 %v3528
        %v3869 = vunpack.c.h.b16 %v3528
        %v3870 = vunpack.c.l.b16 %v3529
        %v3871 = vunpack.c.h.b16 %v3529
        %v3872 = vunpack.c.l.b16 %v3530
        %v3873 = vunpack.c.h.b16 %v3530
        %v3874 = vunpack.c.l.b16 %v3531
        %v3875 = vunpack.c.h.b16 %v3531
        %v3876 = vunpack.c.l.b16 %v3532
        %v3877 = vunpack.c.h.b16 %v3532
        %v3878 = vunpack.c.l.b16 %v3533
        %v3879 = vunpack.c.h.b16 %v3533
        %v3880 = vunpack.c.l.b16 %v3534
        %v3881 = vunpack.c.h.b16 %v3534
        %v3882 = vunpack.c.l.b16 %v3535
        %v3883 = vunpack.c.h.b16 %v3535
        %v3884 = vunpack.c.l.b16 %v3536
        %v3885 = vunpack.c.h.b16 %v3536
        %v3886 = vunpack.c.l.b16 %v3537
        %v3887 = vunpack.c.h.b16 %v3537
        %v3888 = vunpack.c.l.b16 %v3538
        %v3889 = vunpack.c.h.b16 %v3538
        %v3890 = vunpack.c.l.b16 %v3539
        %v3891 = vunpack.c.h.b16 %v3539
        %v3892 = vunpack.c.l.b16 %v3540
        %v3893 = vunpack.c.h.b16 %v3540
        %v3894 = vunpack.c.l.b16 %v3541
        %v3895 = vunpack.c.h.b16 %v3541
        %v3896 = vunpack.c.l.b16 %v3542
        %v3897 = vunpack.c.h.b16 %v3542
        %v3898 = vunpack.c.l.b16 %v3543
        %v3899 = vunpack.c.h.b16 %v3543
        %v3900 = vunpack.c.l.b16 %v3544
        %v3901 = vunpack.c.h.b16 %v3544
        %v3902 = vunpack.c.l.b16 %v3545
        %v3903 = vunpack.c.h.b16 %v3545
        %v3904 = vunpack.c.l.b16 %v3546
        %v3905 = vunpack.c.h.b16 %v3546
        %v3906 = vunpack.c.l.b16 %v3547
        %v3907 = vunpack.c.h.b16 %v3547
        %v3908 = vunpack.c.l.b16 %v3548
        %v3909 = vunpack.c.h.b16 %v3548
        %v3910 = vunpack.c.l.b16 %v3549
        %v3911 = vunpack.c.h.b16 %v3549
        %v3912 = vunpack.c.l.b16 %v3550
        %v3913 = vunpack.c.h.b16 %v3550
        %v3914 = vunpack.c.l.b16 %v3551
        %v3915 = vunpack.c.h.b16 %v3551
        %v3916 = vunpack.c.l.b16 %v3552
        %v3917 = vunpack.c.h.b16 %v3552
        %v3918 = vunpack.c.l.b16 %v3553
        %v3919 = vunpack.c.h.b16 %v3553
        %v3920 = vunpack.c.l.b16 %v3554
        %v3921 = vunpack.c.h.b16 %v3554
        %v3922 = vunpack.c.l.b16 %v3555
        %v3923 = vunpack.c.h.b16 %v3555
        %v3924 = vunpack.c.l.b16 %v3556
        %v3925 = vunpack.c.h.b16 %v3556
        %v3926 = vunpack.c.l.b16 %v3557
        %v3927 = vunpack.c.h.b16 %v3557
        %v3928 = vunpack.c.l.b16 %v3558
        %v3929 = vunpack.c.h.b16 %v3558
        %v3930 = vunpack.c.l.b16 %v3559
        %v3931 = vunpack.c.h.b16 %v3559
        %v3932 = vunpack.c.l.b16 %v3560
        %v3933 = vunpack.c.h.b16 %v3560
        %v3934 = vunpack.c.l.b16 %v3561
        %v3935 = vunpack.c.h.b16 %v3561
        %v3936 = vunpack.c.l.b16 %v3562
        %v3937 = vunpack.c.h.b16 %v3562
        %v3938 = vunpack.c.l.b16 %v3563
        %v3939 = vunpack.c.h.b16 %v3563
        %v3940 = vunpack.c.l.b16 %v3564
        %v3941 = vunpack.c.h.b16 %v3564
        %v3942 = vunpack.c.l.b16 %v3565
        %v3943 = vunpack.c.h.b16 %v3565
        %v3944 = vunpack.c.l.b16 %v3566
        %v3945 = vunpack.c.h.b16 %v3566
        %v3946 = vunpack.c.l.b16 %v3567
        %v3947 = vunpack.c.h.b16 %v3567
        %v3948 = vunpack.c.l.b16 %v3568
        %v3949 = vunpack.c.h.b16 %v3568
        %v3950 = vunpack.c.l.b16 %v3569
        %v3951 = vunpack.c.h.b16 %v3569
        %v3952 = vunpack.c.l.b16 %v3570
        %v3953 = vunpack.c.h.b16 %v3570
        %v3954 = vunpack.c.l.b16 %v3571
        %v3955 = vunpack.c.h.b16 %v3571
        %v3956 = vunpack.c.l.b16 %v3572
        %v3957 = vunpack.c.h.b16 %v3572
        %v3958 = vunpack.c.l.b16 %v3573
        %v3959 = vunpack.c.h.b16 %v3573
        %v3960 = vunpack.c.l.b16 %v3574
        %v3961 = vunpack.c.h.b16 %v3574
        %v3962 = vunpack.c.l.b16 %v3575
        %v3963 = vunpack.c.h.b16 %v3575
        %v3964 = vunpack.c.l.b16 %v3576
        %v3965 = vunpack.c.h.b16 %v3576
        %v3966 = vunpack.c.l.b16 %v3577
        %v3967 = vunpack.c.h.b16 %v3577
        %v3968 = vunpack.c.l.b16 %v3578
        %v3969 = vunpack.c.h.b16 %v3578
        %v3970 = vunpack.c.l.b16 %v3579
        %v3971 = vunpack.c.h.b16 %v3579
        %v3972 = vunpack.c.l.b16 %v3580
        %v3973 = vunpack.c.h.b16 %v3580
        %v3974 = vunpack.c.l.b16 %v3581
        %v3975 = vunpack.c.h.b16 %v3581
        %v3976 = vunpack.c.l.b16 %v3582
        %v3977 = vunpack.c.h.b16 %v3582
        %v3978 = vunpack.c.l.b16 %v3583
        %v3979 = vunpack.c.h.b16 %v3583
        %v3980 = vunpack.c.l.b16 %v3584
        %v3981 = vunpack.c.h.b16 %v3584
        %v3982 = vunpack.c.l.b16 %v3585
        %v3983 = vunpack.c.h.b16 %v3585
        %v3984 = vunpack.c.l.b16 %v3586
        %v3985 = vunpack.c.h.b16 %v3586
        %v3986 = vunpack.c.l.b16 %v3587
        %v3987 = vunpack.c.h.b16 %v3587
        %v3988 = vunpack.c.l.b16 %v3588
        %v3989 = vunpack.c.h.b16 %v3588
        %v3990 = vunpack.c.l.b16 %v3589
        %v3991 = vunpack.c.h.b16 %v3589
        %v3992 = vunpack.c.l.b16 %v3590
        %v3993 = vunpack.c.h.b16 %v3590
        %v3994 = vunpack.c.l.b16 %v3591
        %v3995 = vunpack.c.h.b16 %v3591
        %v3996 = vunpack.c.l.b16 %v3592
        %v3997 = vunpack.c.h.b16 %v3592
        %v3998 = vunpack.c.l.b16 %v3593
        %v3999 = vunpack.c.h.b16 %v3593
        %v4000 = vunpack.c.l.b16 %v3594
        %v4001 = vunpack.c.h.b16 %v3594
        %v4002 = vunpack.c.l.b16 %v3595
        %v4003 = vunpack.c.h.b16 %v3595
        %v4004 = vunpack.c.l.b16 %v3596
        %v4005 = vunpack.c.h.b16 %v3596
        %v4006 = vunpack.c.l.b16 %v3597
        %v4007 = vunpack.c.h.b16 %v3597
        %v4008 = vunpack.c.l.b16 %v3598
        %v4009 = vunpack.c.h.b16 %v3598
        %v4010 = vunpack.c.l.b16 %v3599
        %v4011 = vunpack.c.h.b16 %v3599
        %v4012 = vunpack.c.l.b16 %v3600
        %v4013 = vunpack.c.h.b16 %v3600
        %v4014 = vunpack.c.l.b16 %v3601
        %v4015 = vunpack.c.h.b16 %v3601
        %v4016 = vunpack.c.l.b16 %v3602
        %v4017 = vunpack.c.h.b16 %v3602
        %v4018 = vunpack.c.l.b16 %v3603
        %v4019 = vunpack.c.h.b16 %v3603
        %v4020 = vunpack.c.l.b16 %v3604
        %v4021 = vunpack.c.h.b16 %v3604
        %v4022 = vunpack.c.l.b16 %v3605
        %v4023 = vunpack.c.h.b16 %v3605
        %v4024 = vunpack.c.l.b16 %v3606
        %v4025 = vunpack.c.h.b16 %v3606
        %v4026 = vunpack.c.l.b16 %v3607
        %v4027 = vunpack.c.h.b16 %v3607
        %v4028 = vunpack.c.l.b16 %v3608
        %v4029 = vunpack.c.h.b16 %v3608
        %v4030 = vunpack.c.l.b16 %v3609
        %v4031 = vunpack.c.h.b16 %v3609
        %v4032 = vunpack.c.l.b16 %v3610
        %v4033 = vunpack.c.h.b16 %v3610
        %v4034 = vunpack.c.l.b16 %v3611
        %v4035 = vunpack.c.h.b16 %v3611
        %v4036 = vunpack.c.l.b16 %v3612
        %v4037 = vunpack.c.h.b16 %v3612
        %v4038 = vunpack.c.l.b16 %v3613
        %v4039 = vunpack.c.h.b16 %v3613
        %v4040 = vunpack.c.l.b16 %v3614
        %v4041 = vunpack.c.h.b16 %v3614
        %v4042 = vunpack.c.l.b16 %v3615
        %v4043 = vunpack.c.h.b16 %v3615
        %v4044 = vunpack.c.l.b16 %v3616
        %v4045 = vunpack.c.h.b16 %v3616
        %v4046 = vunpack.c.l.b16 %v3617
        %v4047 = vunpack.c.h.b16 %v3617
        %v4048 = vunpack.c.l.b16 %v3618
        %v4049 = vunpack.c.h.b16 %v3618
        %v4050 = vunpack.c.l.b16 %v3619
        %v4051 = vunpack.c.h.b16 %v3619
        %v4052 = vunpack.c.l.b16 %v3620
        %v4053 = vunpack.c.h.b16 %v3620
        %v4054 = vpack.c.b16 %v3806, %v3798
        %v4055 = vpack.c.b16 %v3807, %v3799
        %v4056 = vpack.c.b16 %v3808, %v3800
        %v4057 = vpack.c.b16 %v3809, %v3801
        %v4058 = vpack.c.b16 %v3810, %v3802
        %v4059 = vpack.c.b16 %v3811, %v3803
        %v4060 = vpack.c.b16 %v3812, %v3804
        %v4061 = vpack.c.b16 %v3813, %v3805
        %v4062 = vpack.c.b16 %v3822, %v3814
        %v4063 = vpack.c.b16 %v3823, %v3815
        %v4064 = vpack.c.b16 %v3824, %v3816
        %v4065 = vpack.c.b16 %v3825, %v3817
        %v4066 = vpack.c.b16 %v3826, %v3818
        %v4067 = vpack.c.b16 %v3827, %v3819
        %v4068 = vpack.c.b16 %v3828, %v3820
        %v4069 = vpack.c.b16 %v3829, %v3821
        %v4070 = vpack.c.b16 %v3838, %v3830
        %v4071 = vpack.c.b16 %v3839, %v3831
        %v4072 = vpack.c.b16 %v3840, %v3832
        %v4073 = vpack.c.b16 %v3841, %v3833
        %v4074 = vpack.c.b16 %v3842, %v3834
        %v4075 = vpack.c.b16 %v3843, %v3835
        %v4076 = vpack.c.b16 %v3844, %v3836
        %v4077 = vpack.c.b16 %v3845, %v3837
        %v4078 = vpack.c.b16 %v3854, %v3846
        %v4079 = vpack.c.b16 %v3855, %v3847
        %v4080 = vpack.c.b16 %v3856, %v3848
        %v4081 = vpack.c.b16 %v3857, %v3849
        %v4082 = vpack.c.b16 %v3858, %v3850
        %v4083 = vpack.c.b16 %v3859, %v3851
        %v4084 = vpack.c.b16 %v3860, %v3852
        %v4085 = vpack.c.b16 %v3861, %v3853
        %v4086 = vpack.c.b16 %v3870, %v3862
        %v4087 = vpack.c.b16 %v3871, %v3863
        %v4088 = vpack.c.b16 %v3872, %v3864
        %v4089 = vpack.c.b16 %v3873, %v3865
        %v4090 = vpack.c.b16 %v3874, %v3866
        %v4091 = vpack.c.b16 %v3875, %v3867
        %v4092 = vpack.c.b16 %v3876, %v3868
        %v4093 = vpack.c.b16 %v3877, %v3869
        %v4094 = vpack.c.b16 %v3886, %v3878
        %v4095 = vpack.c.b16 %v3887, %v3879
        %v4096 = vpack.c.b16 %v3888, %v3880
        %v4097 = vpack.c.b16 %v3889, %v3881
        %v4098 = vpack.c.b16 %v3890, %v3882
        %v4099 = vpack.c.b16 %v3891, %v3883
        %v4100 = vpack.c.b16 %v3892, %v3884
        %v4101 = vpack.c.b16 %v3893, %v3885
        %v4102 = vpack.c.b16 %v3902, %v3894
        %v4103 = vpack.c.b16 %v3903, %v3895
        %v4104 = vpack.c.b16 %v3904, %v3896
        %v4105 = vpack.c.b16 %v3905, %v3897
        %v4106 = vpack.c.b16 %v3906, %v3898
        %v4107 = vpack.c.b16 %v3907, %v3899
        %v4108 = vpack.c.b16 %v3908, %v3900
        %v4109 = vpack.c.b16 %v3909, %v3901
        %v4110 = vpack.c.b16 %v3918, %v3910
        %v4111 = vpack.c.b16 %v3919, %v3911
        %v4112 = vpack.c.b16 %v3920, %v3912
        %v4113 = vpack.c.b16 %v3921, %v3913
        %v4114 = vpack.c.b16 %v3922, %v3914
        %v4115 = vpack.c.b16 %v3923, %v3915
        %v4116 = vpack.c.b16 %v3924, %v3916
        %v4117 = vpack.c.b16 %v3925, %v3917
        %v4118 = vpack.c.b16 %v3934, %v3926
        %v4119 = vpack.c.b16 %v3935, %v3927
        %v4120 = vpack.c.b16 %v3936, %v3928
        %v4121 = vpack.c.b16 %v3937, %v3929
        %v4122 = vpack.c.b16 %v3938, %v3930
        %v4123 = vpack.c.b16 %v3939, %v3931
        %v4124 = vpack.c.b16 %v3940, %v3932
        %v4125 = vpack.c.b16 %v3941, %v3933
        %v4126 = vpack.c.b16 %v3950, %v3942
        %v4127 = vpack.c.b16 %v3951, %v3943
        %v4128 = vpack.c.b16 %v3952, %v3944
        %v4129 = vpack.c.b16 %v3953, %v3945
        %v4130 = vpack.c.b16 %v3954, %v3946
        %v4131 = vpack.c.b16 %v3955, %v3947
        %v4132 = vpack.c.b16 %v3956, %v3948
        %v4133 = vpack.c.b16 %v3957, %v3949
        %v4134 = vpack.c.b16 %v3966, %v3958
        %v4135 = vpack.c.b16 %v3967, %v3959
        %v4136 = vpack.c.b16 %v3968, %v3960
        %v4137 = vpack.c.b16 %v3969, %v3961
        %v4138 = vpack.c.b16 %v3970, %v3962
        %v4139 = vpack.c.b16 %v3971, %v3963
        %v4140 = vpack.c.b16 %v3972, %v3964
        %v4141 = vpack.c.b16 %v3973, %v3965
        %v4142 = vpack.c.b16 %v3982, %v3974
        %v4143 = vpack.c.b16 %v3983, %v3975
        %v4144 = vpack.c.b16 %v3984, %v3976
        %v4145 = vpack.c.b16 %v3985, %v3977
        %v4146 = vpack.c.b16 %v3986, %v3978
        %v4147 = vpack.c.b16 %v3987, %v3979
        %v4148 = vpack.c.b16 %v3988, %v3980
        %v4149 = vpack.c.b16 %v3989, %v3981
        %v4150 = vpack.c.b16 %v3998, %v3990
        %v4151 = vpack.c.b16 %v3999, %v3991
        %v4152 = vpack.c.b16 %v4000, %v3992
        %v4153 = vpack.c.b16 %v4001, %v3993
        %v4154 = vpack.c.b16 %v4002, %v3994
        %v4155 = vpack.c.b16 %v4003, %v3995
        %v4156 = vpack.c.b16 %v4004, %v3996
        %v4157 = vpack.c.b16 %v4005, %v3997
        %v4158 = vpack.c.b16 %v4014, %v4006
        %v4159 = vpack.c.b16 %v4015, %v4007
        %v4160 = vpack.c.b16 %v4016, %v4008
        %v4161 = vpack.c.b16 %v4017, %v4009
        %v4162 = vpack.c.b16 %v4018, %v4010
        %v4163 = vpack.c.b16 %v4019, %v4011
        %v4164 = vpack.c.b16 %v4020, %v4012
        %v4165 = vpack.c.b16 %v4021, %v4013
        %v4166 = vpack.c.b16 %v4030, %v4022
        %v4167 = vpack.c.b16 %v4031, %v4023
        %v4168 = vpack.c.b16 %v4032, %v4024
        %v4169 = vpack.c.b16 %v4033, %v4025
        %v4170 = vpack.c.b16 %v4034, %v4026
        %v4171 = vpack.c.b16 %v4035, %v4027
        %v4172 = vpack.c.b16 %v4036, %v4028
        %v4173 = vpack.c.b16 %v4037, %v4029
        %v4174 = vpack.c.b16 %v4046, %v4038
        %v4175 = vpack.c.b16 %v4047, %v4039
        %v4176 = vpack.c.b16 %v4048, %v4040
        %v4177 = vpack.c.b16 %v4049, %v4041
        %v4178 = vpack.c.b16 %v4050, %v4042
        %v4179 = vpack.c.b16 %v4051, %v4043
        %v4180 = vpack.c.b16 %v4052, %v4044
        %v4181 = vpack.c.b16 %v4053, %v4045
        %4310 = vmatprep.subr.bf16.mxu0 %v4055
        %4311 = vmatpush1.bf16.msra.mxu0 %v4054
        %4312 = vmatprep.subr.bf16.mxu0 %v4063
        %4313 = vmatpush1.bf16.msra.mxu0 %v4062
        %4314 = vmatprep.subr.bf16.mxu0 %v4071
        %4315 = vmatpush1.bf16.msra.mxu0 %v4070
        %4316 = vmatprep.subr.bf16.mxu0 %v4079
        %4317 = vmatpush1.bf16.msra.mxu0 %v4078
        %4318 = vmatprep.subr.bf16.mxu0 %v4087
        %4319 = vmatpush1.bf16.msra.mxu0 %v4086
        %4320 = vmatprep.subr.bf16.mxu0 %v4095
        %4321 = vmatpush1.bf16.msra.mxu0 %v4094
        %4322 = vmatprep.subr.bf16.mxu0 %v4103
        %4323 = vmatpush1.bf16.msra.mxu0 %v4102
        %4324 = vmatprep.subr.bf16.mxu0 %v4111
        %4325 = vmatpush1.bf16.msra.mxu0 %v4110
        %4326 = vmatprep.subr.bf16.mxu0 %v4119
        %4327 = vmatpush1.bf16.msra.mxu0 %v4118
        %4328 = vmatprep.subr.bf16.mxu0 %v4127
        %4329 = vmatpush1.bf16.msra.mxu0 %v4126
        %4330 = vmatprep.subr.bf16.mxu0 %v4135
        %4331 = vmatpush1.bf16.msra.mxu0 %v4134
        %4332 = vmatprep.subr.bf16.mxu0 %v4143
        %4333 = vmatpush1.bf16.msra.mxu0 %v4142
        %4334 = vmatprep.subr.bf16.mxu0 %v4151
        %4335 = vmatpush1.bf16.msra.mxu0 %v4150
        %4336 = vmatprep.subr.bf16.mxu0 %v4159
        %4337 = vmatpush1.bf16.msra.mxu0 %v4158
        %4338 = vmatprep.subr.bf16.mxu0 %v4167
        %4339 = vmatpush1.bf16.msra.mxu0 %v4166
        %4340 = vmatprep.subr.bf16.mxu0 %v4175
        %4341 = vmatpush1.bf16.msra.mxu0 %v4174
        %4342 = vmatprep.mubr.bf16.mxu0 %v3667
        %4343 = vmatmul.mubr.bf16.gmra.mrb[0].mxu0 %v3666
        %v4344 = vpop.f32.mrb[0].mxu0
        %v4345 = vadd.f32 %v3626, %v4344
        %v4346 = vpop.f32.mrb[0].mxu0
        %v4347 = vadd.f32 %v3630, %v4346
        %v4348 = vpop.f32.mrb[0].mxu0
        %v4349 = vpop.f32.mrb[0].mxu0
        %4350 = vdwg.mxu0
        %4351 = vmatprep.subr.bf16.mxu0 %v4057
        %4352 = vmatpush1.bf16.msra.mxu0 %v4056
        %4353 = vmatprep.subr.bf16.mxu0 %v4065
        %4354 = vmatpush1.bf16.msra.mxu0 %v4064
        %4355 = vmatprep.subr.bf16.mxu0 %v4073
        %4356 = vmatpush1.bf16.msra.mxu0 %v4072
        %4357 = vmatprep.subr.bf16.mxu0 %v4081
        %4358 = vmatpush1.bf16.msra.mxu0 %v4080
        %4359 = vmatprep.subr.bf16.mxu0 %v4089
        %4360 = vmatpush1.bf16.msra.mxu0 %v4088
        %4361 = vmatprep.subr.bf16.mxu0 %v4097
        %4362 = vmatpush1.bf16.msra.mxu0 %v4096
        %4363 = vmatprep.subr.bf16.mxu0 %v4105
        %4364 = vmatpush1.bf16.msra.mxu0 %v4104
        %4365 = vmatprep.subr.bf16.mxu0 %v4113
        %4366 = vmatpush1.bf16.msra.mxu0 %v4112
        %4367 = vmatprep.subr.bf16.mxu0 %v4121
        %4368 = vmatpush1.bf16.msra.mxu0 %v4120
        %4369 = vmatprep.subr.bf16.mxu0 %v4129
        %4370 = vmatpush1.bf16.msra.mxu0 %v4128
        %4371 = vmatprep.subr.bf16.mxu0 %v4137
        %4372 = vmatpush1.bf16.msra.mxu0 %v4136
        %4373 = vmatprep.subr.bf16.mxu0 %v4145
        %4374 = vmatpush1.bf16.msra.mxu0 %v4144
        %4375 = vmatprep.subr.bf16.mxu0 %v4153
        %4376 = vmatpush1.bf16.msra.mxu0 %v4152
        %4377 = vmatprep.subr.bf16.mxu0 %v4161
        %4378 = vmatpush1.bf16.msra.mxu0 %v4160
        %4379 = vmatprep.subr.bf16.mxu0 %v4169
        %4380 = vmatpush1.bf16.msra.mxu0 %v4168
        %4381 = vmatprep.subr.bf16.mxu0 %v4177
        %4382 = vmatpush1.bf16.msra.mxu0 %v4176
        %4383 = vmatprep.mubr.bf16.mxu0 %v3667
        %4384 = vmatmul.mubr.bf16.gmra.mrb[0].mxu0 %v3666
        %v4385 = vpop.f32.mrb[0].mxu0
        %v4386 = vadd.f32 %v3634, %v4385
        %v4387 = vpop.f32.mrb[0].mxu0
        %v4388 = vadd.f32 %v3638, %v4387
        %v4389 = vpop.f32.mrb[0].mxu0
        %v4390 = vpop.f32.mrb[0].mxu0
        %4391 = vdwg.mxu0
        %4392 = vmatprep.subr.bf16.mxu0 %v4059
        %4393 = vmatpush1.bf16.msra.mxu0 %v4058
        %4394 = vmatprep.subr.bf16.mxu0 %v4067
        %4395 = vmatpush1.bf16.msra.mxu0 %v4066
        %4396 = vmatprep.subr.bf16.mxu0 %v4075
        %4397 = vmatpush1.bf16.msra.mxu0 %v4074
        %4398 = vmatprep.subr.bf16.mxu0 %v4083
        %4399 = vmatpush1.bf16.msra.mxu0 %v4082
        %4400 = vmatprep.subr.bf16.mxu0 %v4091
        %4401 = vmatpush1.bf16.msra.mxu0 %v4090
        %4402 = vmatprep.subr.bf16.mxu0 %v4099
        %4403 = vmatpush1.bf16.msra.mxu0 %v4098
        %4404 = vmatprep.subr.bf16.mxu0 %v4107
        %4405 = vmatpush1.bf16.msra.mxu0 %v4106
        %4406 = vmatprep.subr.bf16.mxu0 %v4115
        %4407 = vmatpush1.bf16.msra.mxu0 %v4114
        %4408 = vmatprep.subr.bf16.mxu0 %v4123
        %4409 = vmatpush1.bf16.msra.mxu0 %v4122
        %4410 = vmatprep.subr.bf16.mxu0 %v4131
        %4411 = vmatpush1.bf16.msra.mxu0 %v4130
        %4412 = vmatprep.subr.bf16.mxu0 %v4139
        %4413 = vmatpush1.bf16.msra.mxu0 %v4138
        %4414 = vmatprep.subr.bf16.mxu0 %v4147
        %4415 = vmatpush1.bf16.msra.mxu0 %v4146
        %4416 = vmatprep.subr.bf16.mxu0 %v4155
        %4417 = vmatpush1.bf16.msra.mxu0 %v4154
        %4418 = vmatprep.subr.bf16.mxu0 %v4163
        %4419 = vmatpush1.bf16.msra.mxu0 %v4162
        %4420 = vmatprep.subr.bf16.mxu0 %v4171
        %4421 = vmatpush1.bf16.msra.mxu0 %v4170
        %4422 = vmatprep.subr.bf16.mxu0 %v4179
        %4423 = vmatpush1.bf16.msra.mxu0 %v4178
        %4424 = vmatprep.mubr.bf16.mxu0 %v3667
        %4425 = vmatmul.mubr.bf16.gmra.mrb[0].mxu0 %v3666
        %v4426 = vpop.f32.mrb[0].mxu0
        %v4427 = vadd.f32 %v3642, %v4426
        %v4428 = vpop.f32.mrb[0].mxu0
        %v4429 = vadd.f32 %v3646, %v4428
        %v4430 = vpop.f32.mrb[0].mxu0
        %v4431 = vpop.f32.mrb[0].mxu0
        %4432 = vdwg.mxu0
        %4433 = vmatprep.subr.bf16.mxu0 %v4061
        %4434 = vmatpush1.bf16.msra.mxu0 %v4060
        %4435 = vmatprep.subr.bf16.mxu0 %v4069
        %4436 = vmatpush1.bf16.msra.mxu0 %v4068
        %4437 = vmatprep.subr.bf16.mxu0 %v4077
        %4438 = vmatpush1.bf16.msra.mxu0 %v4076
        %4439 = vmatprep.subr.bf16.mxu0 %v4085
        %4440 = vmatpush1.bf16.msra.mxu0 %v4084
        %4441 = vmatprep.subr.bf16.mxu0 %v4093
        %4442 = vmatpush1.bf16.msra.mxu0 %v4092
        %4443 = vmatprep.subr.bf16.mxu0 %v4101
        %4444 = vmatpush1.bf16.msra.mxu0 %v4100
        %4445 = vmatprep.subr.bf16.mxu0 %v4109
        %4446 = vmatpush1.bf16.msra.mxu0 %v4108
        %4447 = vmatprep.subr.bf16.mxu0 %v4117
        %4448 = vmatpush1.bf16.msra.mxu0 %v4116
        %4449 = vmatprep.subr.bf16.mxu0 %v4125
        %4450 = vmatpush1.bf16.msra.mxu0 %v4124
        %4451 = vmatprep.subr.bf16.mxu0 %v4133
        %4452 = vmatpush1.bf16.msra.mxu0 %v4132
        %4453 = vmatprep.subr.bf16.mxu0 %v4141
        %4454 = vmatpush1.bf16.msra.mxu0 %v4140
        %4455 = vmatprep.subr.bf16.mxu0 %v4149
        %4456 = vmatpush1.bf16.msra.mxu0 %v4148
        %4457 = vmatprep.subr.bf16.mxu0 %v4157
        %4458 = vmatpush1.bf16.msra.mxu0 %v4156
        %4459 = vmatprep.subr.bf16.mxu0 %v4165
        %4460 = vmatpush1.bf16.msra.mxu0 %v4164
        %4461 = vmatprep.subr.bf16.mxu0 %v4173
        %4462 = vmatpush1.bf16.msra.mxu0 %v4172
        %4463 = vmatprep.subr.bf16.mxu0 %v4181
        %4464 = vmatpush1.bf16.msra.mxu0 %v4180
        %4465 = vmatprep.mubr.bf16.mxu0 %v3667
        %4466 = vmatmul.mubr.bf16.gmra.mrb[0].mxu0 %v3666
        %v4467 = vpop.f32.mrb[0].mxu0
        %v4468 = vadd.f32 %v3650, %v4467
        %v4469 = vpop.f32.mrb[0].mxu0
        %v4470 = vadd.f32 %v3654, %v4469
        %v4471 = vpop.f32.mrb[0].mxu0
        %v4472 = vpop.f32.mrb[0].mxu0
        %4473 = vdwg.mxu0
        %4474 = vst [vmem:[%s638] sm:$0xff] %v4345
        %4475 = vst [vmem:[%s638 + $0x8] sm:$0xff] %v4347
        %4476 = vst [vmem:[%s638 + $0x10] sm:$0xff] %v4386
        %4477 = vst [vmem:[%s638 + $0x18] sm:$0xff] %v4388
        %4478 = vst [vmem:[%s638 + $0x20] sm:$0xff] %v4427
        %4479 = vst [vmem:[%s638 + $0x28] sm:$0xff] %v4429
        %4480 = vst [vmem:[%s638 + $0x30] sm:$0xff] %v4468
        %4481 = vst [vmem:[%s638 + $0x38] sm:$0xff] %v4470
        %s4482 = sand.u32 %s356, 1
        %s4483 = scalar_lea.sflag [#allocation9], %s4482
        %s4484 = sand.u32 %s356, 1
        %s4485 = smul.addr %s4484, 64
        %s4486 = scalar_lea.vmem [#allocation19], %s4485
        // Predicated region
        $region141: #{rnn_v3_forward.1} parent=75 // pred_check
          %p4487 = pneg %p366
        $region142: #{rnn_v3_forward.1} parent=75 // pred_check_branch
          %4489 = sbr.rel (%p4487) target = $region144
        $region143: #{rnn_v3_forward.1} parent=75 // pred_region
          %s4490 = smul.u32 8, %s44
          %s4492 = ssub.s32 1024, 1024
          %4493 = vsyncadd %s4483, %s4492
          %s4494 = smul.addr %s4490, 128
          %s4495 = scalar_lea.hbm %s16, %s4494
          %s4497 = sshll.u32 %s4486, 4
          %s4498 = int_to_ptr.vmem [resolvable:$true] %s4497
          %4500 = dma.vmem_to_hbm [thread:$0]  %s4498, 1024, %s4495, %s4483
        $region144: #{rnn_v3_forward.1} parent=75 // pred_fallthru
          _
        // Predicated region
        $region145: #{rnn_v3_forward.1} parent=75 // pred_check
          %p4501 = pneg %p387
        $region146: #{rnn_v3_forward.1} parent=75 // pred_check_branch
          %4503 = sbr.rel (%p4501) target = $region148
        $region147: #{rnn_v3_forward.1} parent=75 // pred_region
          %s4505 = ssub.s32 512, 512
          %4506 = vsyncadd [#allocation21], %s4505
          %s4507 = sshll.u32 [#allocation20], 4
          %s4508 = int_to_ptr.vmem [resolvable:$true] %s4507
          %4513 = dma.vmem_to_hbm [thread:$0]  %s4508, 512, %s17, [#allocation21], 128, 128, 8
        $region148: #{rnn_v3_forward.1} parent=75 // pred_fallthru
          _
        // Predicated region
        $region149: #{rnn_v3_forward.1} parent=75 // pred_check
          %p4514 = pneg %p408
        $region150: #{rnn_v3_forward.1} parent=75 // pred_check_branch
          %4516 = sbr.rel (%p4514) target = $region152
        $region151: #{rnn_v3_forward.1} parent=75 // pred_region
          %s4518 = ssub.s32 512, 512
          %4519 = vsyncadd [#allocation21], %s4518
          %s4520 = sshll.u32 [#allocation22], 4
          %s4521 = int_to_ptr.vmem [resolvable:$true] %s4520
          %4526 = dma.vmem_to_hbm [thread:$0]  %s4521, 512, %s18, [#allocation21], 128, 128, 8
        $region152: #{rnn_v3_forward.1} parent=75 // pred_fallthru
          _
        // Predicated region
        $region153: #{rnn_v3_forward.1} parent=75 // pred_check
          %p4527 = pneg %p387
        $region154: #{rnn_v3_forward.1} parent=75 // pred_check_branch
          %4529 = sbr.rel (%p4527) target = $region156
        $region155: #{rnn_v3_forward.1} parent=75 // pred_region
          %4530 = dma.done [#allocation21], 512
        $region156: #{rnn_v3_forward.1} parent=75 // pred_fallthru
          _
        // Predicated region
        $region157: #{rnn_v3_forward.1} parent=75 // pred_check
          %p4531 = pneg %p408
        $region158: #{rnn_v3_forward.1} parent=75 // pred_check_branch
          %4533 = sbr.rel (%p4531) target = $region160
        $region159: #{rnn_v3_forward.1} parent=75 // pred_region
          %4534 = dma.done [#allocation21], 512
        $region160: #{rnn_v3_forward.1} parent=75 // pred_fallthru
          _
      $region76: #{rnn_v3_forward.1} parent=5 // pred_fallthru
        _
      %p4535 = scmp.le.s32.totalorder 2, %s39
      // Predicated region
      $region161: #{rnn_v3_forward.1} parent=5 // pred_check
        %p4536 = pneg %p4535
      $region162: #{rnn_v3_forward.1} parent=5 // pred_check_branch
        %4538 = sbr.rel (%p4536) target = $region164
      $region163: #{rnn_v3_forward.1} parent=5 // pred_region
        %s4539 = ssub.s32 %s39, 2
        // Predicated region
        $region165: #{rnn_v3_forward.1} parent=163 // pred_check
          %p4540 = pneg %p372
        $region166: #{rnn_v3_forward.1} parent=163 // pred_check_branch
          %4542 = sbr.rel (%p4540) target = $region168
        $region167: #{rnn_v3_forward.1} parent=163 // pred_region
          %s4543 = sand.u32 %s357, 1
          %s4544 = scalar_lea.sflag [#allocation9], %s4543
          %s4545 = sand.u32 %s357, 1
          %s4546 = smul.addr %s4545, 64
          %s4547 = scalar_lea.vmem [#allocation19], %s4546
          %4548 = dma.done %s4544, 1024
        $region168: #{rnn_v3_forward.1} parent=163 // pred_fallthru
          _
      $region164: #{rnn_v3_forward.1} parent=5 // pred_fallthru
        _
    $region6: #{rnn_v3_forward.1} parent=1 // loop_footer
      %s43 = sadd.s32 1, %s39
    $region7: #{rnn_v3_forward.1} parent=1 // loop_footer_branch
      %38 = sbr.rel target = $region3
    $region8: #{rnn_v3_forward.1} parent=1 // loop_exit
      _
    %4549 = vsyncpa [#allocation8], 1
    %s4550 = scalar_lea.sflag [#allocation8], 1
    %4551 = vsyncpa %s4550, 1
    %4552 = vsyncpa [#allocation11], 1
    %4553 = vsyncpa [#allocation14], 1
    %4554 = vsyncpa [#allocation17], 1
    %4555 = vsyncpa [#allocation9], 1
    %s4556 = scalar_lea.sflag [#allocation9], 1
    %4557 = vsyncpa %s4556, 1
    %4558 = vsyncpa [#allocation21], 1
  %4559 = vsyncmov [#allocation4]
  %s4560 = vpop.sfrf %4559
  %p4561 = scmp.eq.s32.totalorder %s4560, 0
  %p4562 = pneg %p4561
  %4564 = shalt.err (%p4562)
  %s4565 = scalar_lea.sflag [#allocation4], 1
  %4566 = vsyncmov %s4565
  %s4567 = vpop.sfrf %4566
  %p4568 = scmp.eq.s32.totalorder %s4567, 0
  %p4569 = pneg %p4568
  %4571 = shalt.err (%p4569)
  %s4572 = scalar_lea.sflag [#allocation4], 2
  %4573 = vsyncmov %s4572
  %s4574 = vpop.sfrf %4573
  %p4575 = scmp.eq.s32.totalorder %s4574, 0
  %p4576 = pneg %p4575
  %4578 = shalt.err (%p4576)
  %s4579 = scalar_lea.sflag [#allocation4], 3
  %4580 = vsyncmov %s4579
  %s4581 = vpop.sfrf %4580
  %p4582 = scmp.eq.s32.totalorder %s4581, 0
  %p4583 = pneg %p4582
  %4585 = shalt.err (%p4583)
  %s4586 = scalar_lea.sflag [#allocation4], 4
  %4587 = vsyncmov %s4586
  %s4588 = vpop.sfrf %4587
  %p4589 = scmp.eq.s32.totalorder %s4588, 0
  %p4590 = pneg %p4589
  %4592 = shalt.err (%p4590)
  %s4593 = scalar_lea.sflag [#allocation4], 5
  %4594 = vsyncmov %s4593
  %s4595 = vpop.sfrf %4594
  %p4596 = scmp.eq.s32.totalorder %s4595, 0
  %p4597 = pneg %p4596
  %4599 = shalt.err (%p4597)
  %s4600 = scalar_lea.sflag [#allocation4], 6
  %4601 = vsyncmov %s4600
  %s4602 = vpop.sfrf %4601
  %p4603 = scmp.eq.s32.totalorder %s4602, 0
  %p4604 = pneg %p4603
  %4606 = shalt.err (%p4604)
  %s4607 = scalar_lea.sflag [#allocation4], 7
  %4608 = vsyncmov %s4607
  %s4609 = vpop.sfrf %4608
  %p4610 = scmp.eq.s32.totalorder %s4609, 0
  %p4611 = pneg %p4610
  %4613 = shalt.err (%p4611)

</llo_original>
